<compile_context>
chip_gen: v7x
topology: tpu7x:2x2x1
jax: 0.10.0
libtpu: 0.0.40
codegen_flags: <defaults>
</compile_context>

<pallas_src>
import math

import jax
import jax.numpy as jnp
from jax.experimental import pallas as pl
from jax.experimental.pallas import tpu as pltpu

# ---- small-BERT config (architecture of bert-base-uncased, small dims) ----
VOCAB = 128
HIDDEN = 128
N_LAYERS = 2
N_HEADS = 2
HEAD_DIM = HIDDEN // N_HEADS
INTERMEDIATE = 512
MAX_POS = 32
TYPE_VOCAB = 2
NUM_LABELS = 6
LOGIT_PAD = 128          # lane-dense padded classifier output width
LN_EPS = 1e-12


# ----------------------------- fused Pallas kernel --------------------------

def _bert_fused_kernel(
    emb_ref, mask_ref, emb_ln_g_ref, emb_ln_b_ref,
    w_qkv_ref, b_qkv_ref, w_o_ref, b_o_ref, ln1_g_ref, ln1_b_ref,
    w_i_ref, b_i_ref, w_f_ref, b_f_ref, ln2_g_ref, ln2_b_ref,
    pool_w_ref, pool_b_ref, cls_w_ref, cls_b_ref,
    out_ref,
):
    B, S = mask_ref.shape
    H, nH, D = HIDDEN, N_HEADS, HEAD_DIM
    M = B * S
    scale = 1.0 / math.sqrt(D)

    def layer_norm(x, g, b):
        mean = jnp.mean(x, axis=-1, keepdims=True)
        var = jnp.mean(jnp.square(x - mean), axis=-1, keepdims=True)
        return (x - mean) * jax.lax.rsqrt(var + LN_EPS) * g + b

    def matmul_bias(x, w_bf16, b_f32):
        # bf16 x bf16 on the MXU with f32 accumulation.
        return jnp.dot(x.astype(jnp.bfloat16), w_bf16,
                       preferred_element_type=jnp.float32) + b_f32

    # Per-head 0/1 lane masks over the 128-wide hidden axis (hoisted, reused
    # across layers).  Head h occupies lanes [h*D, (h+1)*D).
    lane = jax.lax.broadcasted_iota(jnp.int32, (1, 1, H), 2)
    head_masks = [((lane >= h * D) & (lane < (h + 1) * D)).astype(jnp.float32)
                  for h in range(nH)]

    # Layer-invariant additive attention mask, hoisted out of the layer loop.
    add_mask = (1.0 - mask_ref[...])[:, None, :] * -10000.0          # [B, 1, S]

    # Embedding LayerNorm.
    x = layer_norm(emb_ref[...].astype(jnp.float32),
                   emb_ln_g_ref[...], emb_ln_b_ref[...])             # [B*S, H] f32

    for l in range(N_LAYERS):
        # ---- self-attention: fused QKV projection (one MXU pass) ----
        qkv = matmul_bias(x, w_qkv_ref[l], b_qkv_ref[l])             # [B*S, 3H]
        # Lane-aligned 128-wide slices, then split the leading axis into
        # (batch, seq) -- purely a sublane regroup, no lane relayout.
        q3 = qkv[:, 0:H].reshape(B, S, H)
        k3 = qkv[:, H:2 * H].reshape(B, S, H)
        v3 = qkv[:, 2 * H:3 * H].reshape(B, S, H)

        ctx = None
        for h in range(nH):
            hm = head_masks[h]                                       # [1, 1, H]
            # Masked 128-wide contraction == per-head QK^T (other head's
            # lanes zeroed on the K side), batched over B.
            scores = jnp.einsum('bqh,bkh->bqk', q3, k3 * hm,
                                preferred_element_type=jnp.float32) * scale
            scores = scores + add_mask                               # [B, S, S]
            row_max = jnp.max(scores, axis=-1, keepdims=True)
            p = jnp.exp(scores - row_max)
            denom = jnp.sum(p, axis=-1, keepdims=True)
            probs = p * pl.reciprocal(denom, approx=True)
            part = jnp.einsum('bqk,bkh->bqh', probs, v3 * hm,
                              preferred_element_type=jnp.float32)    # head lanes only
            ctx = part if ctx is None else ctx + part                # merged-head layout
        ctx = ctx.reshape(M, H)                                      # [B*S, H]

        attn_out = matmul_bias(ctx, w_o_ref[l], b_o_ref[l])
        x = layer_norm(x + attn_out, ln1_g_ref[l], ln1_b_ref[l])     # fused residual+LN

        # ---- feed-forward (erf GELU, as in HF BERT) ----
        inter = matmul_bias(x, w_i_ref[l], b_i_ref[l])               # [B*S, I]
        inter = 0.5 * inter * (1.0 + jax.lax.erf(inter * (1.0 / math.sqrt(2.0))))
        ffn = matmul_bias(inter, w_f_ref[l], b_f_ref[l])
        x = layer_norm(x + ffn, ln2_g_ref[l], ln2_b_ref[l])          # fused residual+LN

    # ---- pooler (tanh Linear) + classifier epilogue ----
    # Applied to every token row (row b*S is the CLS token); the wrapper keeps
    # only the CLS rows.  This keeps the output store lane-dense (128-wide)
    # and sublane-full; the extra FLOPs on 16 rows are negligible.
    pooled = jnp.tanh(matmul_bias(x, pool_w_ref[...], pool_b_ref[...]))
    # TODO(synk): Dropout(p=0.3) is identity here (deterministic eval forward).
    logits = matmul_bias(pooled, cls_w_ref[...], cls_b_ref[...])     # [B*S, 128]
    out_ref[...] = logits.astype(out_ref.dtype)


def _full_spec(shape):
    n = len(shape)
    return pl.BlockSpec(shape, lambda i: (0,) * n)


# --------------------------- parameter construction -------------------------

def init_params(key):
    keys = iter(jax.random.split(key, 64))
    init = lambda shape: 0.02 * jax.random.normal(next(keys), shape, jnp.float32)

    p = {
        "word_emb": init((VOCAB, HIDDEN)),
        "pos_emb": init((MAX_POS, HIDDEN)),
        "type_emb": init((TYPE_VOCAB, HIDDEN)),
        "emb_ln_g": jnp.ones((1, HIDDEN), jnp.float32),
        "emb_ln_b": jnp.zeros((1, HIDDEN), jnp.float32),
    }

    w_qkv, b_qkv, w_o, b_o = [], [], [], []
    w_i, b_i, w_f, b_f = [], [], [], []
    for _ in range(N_LAYERS):
        wq, wk, wv = init((HIDDEN, HIDDEN)), init((HIDDEN, HIDDEN)), init((HIDDEN, HIDDEN))
        bq, bk, bv = init((HIDDEN,)), init((HIDDEN,)), init((HIDDEN,))
        w_qkv.append(jnp.concatenate([wq, wk, wv], axis=1))          # [H, 3H]
        b_qkv.append(jnp.concatenate([bq, bk, bv]).reshape(1, 3 * HIDDEN))
        w_o.append(init((HIDDEN, HIDDEN)))
        b_o.append(init((HIDDEN,)).reshape(1, HIDDEN))
        w_i.append(init((HIDDEN, INTERMEDIATE)))
        b_i.append(init((INTERMEDIATE,)).reshape(1, INTERMEDIATE))
        w_f.append(init((INTERMEDIATE, HIDDEN)))
        b_f.append(init((HIDDEN,)).reshape(1, HIDDEN))

    stack = lambda xs: jnp.stack(xs, axis=0)
    p["w_qkv"] = stack(w_qkv).astype(jnp.bfloat16)   # [L, H, 3H] bf16
    p["b_qkv"] = stack(b_qkv)                        # [L, 1, 3H] f32
    p["w_o"] = stack(w_o).astype(jnp.bfloat16)
    p["b_o"] = stack(b_o)
    p["ln1_g"] = jnp.ones((N_LAYERS, 1, HIDDEN), jnp.float32)
    p["ln1_b"] = jnp.zeros((N_LAYERS, 1, HIDDEN), jnp.float32)
    p["w_i"] = stack(w_i).astype(jnp.bfloat16)
    p["b_i"] = stack(b_i)
    p["w_f"] = stack(w_f).astype(jnp.bfloat16)
    p["b_f"] = stack(b_f)
    p["ln2_g"] = jnp.ones((N_LAYERS, 1, HIDDEN), jnp.float32)
    p["ln2_b"] = jnp.zeros((N_LAYERS, 1, HIDDEN), jnp.float32)

    p["pool_w"] = init((HIDDEN, HIDDEN)).astype(jnp.bfloat16)
    p["pool_b"] = init((HIDDEN,)).reshape(1, HIDDEN)
    cls_w = init((HIDDEN, NUM_LABELS))
    cls_b = init((NUM_LABELS,))
    p["cls_w_pad"] = (jnp.zeros((HIDDEN, LOGIT_PAD), jnp.float32)
                      .at[:, :NUM_LABELS].set(cls_w).astype(jnp.bfloat16))
    p["cls_b_pad"] = jnp.zeros((1, LOGIT_PAD), jnp.float32).at[0, :NUM_LABELS].set(cls_b)
    return p


# -------------------------------- forward -----------------------------------

@jax.jit
def bert_class_forward(params, ids, mask, token_type_ids):
    B, S = ids.shape
    M = B * S

    # embeddings (gathers are plain-JAX glue)
    emb = (params["word_emb"][ids]
           + params["pos_emb"][jnp.arange(S)][None, :, :]
           + params["type_emb"][token_type_ids]).reshape(M, HIDDEN)
    mask_f = mask.astype(jnp.float32)

    inputs = (
        emb, mask_f,
        params["emb_ln_g"], params["emb_ln_b"],
        params["w_qkv"], params["b_qkv"], params["w_o"], params["b_o"],
        params["ln1_g"], params["ln1_b"],
        params["w_i"], params["b_i"], params["w_f"], params["b_f"],
        params["ln2_g"], params["ln2_b"],
        params["pool_w"], params["pool_b"],
        params["cls_w_pad"], params["cls_b_pad"],
    )

    logits_slab = pl.pallas_call(
        _bert_fused_kernel,
        out_shape=jax.ShapeDtypeStruct((M, LOGIT_PAD), jnp.float32),
        grid=(1,),
        in_specs=[_full_spec(a.shape) for a in inputs],
        out_specs=pl.BlockSpec((M, LOGIT_PAD), lambda i: (0, 0)),
        compiler_params=pltpu.CompilerParams(
            dimension_semantics=("arbitrary",),
            vmem_limit_bytes=32 * 1024 * 1024),
    )(*inputs)

    # CLS-token rows (row b*S) carry the pooled->classified logits; drop pad.
    return logits_slab.reshape(B, S, LOGIT_PAD)[:, 0, :NUM_LABELS]


# --------------------------------- main --------------------------------------

if __name__ == "__main__":
    key = jax.random.PRNGKey(0)
    pkey, ikey, tkey = jax.random.split(key, 3)
    params = init_params(pkey)

    B, S = 2, 8
    ids = jax.random.randint(ikey, (B, S), 0, VOCAB, dtype=jnp.int32)
    token_type_ids = jax.random.randint(tkey, (B, S), 0, TYPE_VOCAB, dtype=jnp.int32)
    mask = jnp.ones((B, S), jnp.int32).at[1, 6:].set(0)    # some padding in row 1

    logits = bert_class_forward(params, ids, mask, token_type_ids)
    jax.block_until_ready(logits)
    assert logits.shape == (B, NUM_LABELS) and logits.dtype == jnp.float32
    print("KERNEL_OK")
</pallas_src>

<mosaic_0001>
module attributes {stable_mosaic.version = 11 : i64} {
  func.func @_bert_fused_kernel(%arg0: i32, %arg1: memref<16x128xf32, #tpu.memory_space<vmem>>, %arg2: memref<2x8xf32, #tpu.memory_space<vmem>>, %arg3: memref<1x128xf32, #tpu.memory_space<vmem>>, %arg4: memref<1x128xf32, #tpu.memory_space<vmem>>, %arg5: memref<2x128x384xbf16, #tpu.memory_space<vmem>>, %arg6: memref<2x1x384xf32, #tpu.memory_space<vmem>>, %arg7: memref<2x128x128xbf16, #tpu.memory_space<vmem>>, %arg8: memref<2x1x128xf32, #tpu.memory_space<vmem>>, %arg9: memref<2x1x128xf32, #tpu.memory_space<vmem>>, %arg10: memref<2x1x128xf32, #tpu.memory_space<vmem>>, %arg11: memref<2x128x512xbf16, #tpu.memory_space<vmem>>, %arg12: memref<2x1x512xf32, #tpu.memory_space<vmem>>, %arg13: memref<2x512x128xbf16, #tpu.memory_space<vmem>>, %arg14: memref<2x1x128xf32, #tpu.memory_space<vmem>>, %arg15: memref<2x1x128xf32, #tpu.memory_space<vmem>>, %arg16: memref<2x1x128xf32, #tpu.memory_space<vmem>>, %arg17: memref<128x128xbf16, #tpu.memory_space<vmem>>, %arg18: memref<1x128xf32, #tpu.memory_space<vmem>>, %arg19: memref<128x128xbf16, #tpu.memory_space<vmem>>, %arg20: memref<1x128xf32, #tpu.memory_space<vmem>>, %arg21: memref<16x128xf32, #tpu.memory_space<vmem>>) attributes {dimension_semantics = [#tpu.dimension_semantics<arbitrary>], iteration_bounds = array<i64: 1>, scalar_prefetch = 0 : i64, scratch_operands = 0 : i64, tpu.core_type = #tpu.core_type<tc>, window_params = [{pipeline_mode = #tpu.pipeline_mode<synchronous>, transform_indices = @transform_0, window_bounds = array<i64: 16, 128>}, {pipeline_mode = #tpu.pipeline_mode<synchronous>, transform_indices = @transform_1, window_bounds = array<i64: 2, 8>}, {pipeline_mode = #tpu.pipeline_mode<synchronous>, transform_indices = @transform_2, window_bounds = array<i64: 1, 128>}, {pipeline_mode = #tpu.pipeline_mode<synchronous>, transform_indices = @transform_3, window_bounds = array<i64: 1, 128>}, {pipeline_mode = #tpu.pipeline_mode<synchronous>, transform_indices = @transform_4, window_bounds = array<i64: 2, 128, 384>}, {pipeline_mode = #tpu.pipeline_mode<synchronous>, transform_indices = @transform_5, window_bounds = array<i64: 2, 1, 384>}, {pipeline_mode = #tpu.pipeline_mode<synchronous>, transform_indices = @transform_6, window_bounds = array<i64: 2, 128, 128>}, {pipeline_mode = #tpu.pipeline_mode<synchronous>, transform_indices = @transform_7, window_bounds = array<i64: 2, 1, 128>}, {pipeline_mode = #tpu.pipeline_mode<synchronous>, transform_indices = @transform_8, window_bounds = array<i64: 2, 1, 128>}, {pipeline_mode = #tpu.pipeline_mode<synchronous>, transform_indices = @transform_9, window_bounds = array<i64: 2, 1, 128>}, {pipeline_mode = #tpu.pipeline_mode<synchronous>, transform_indices = @transform_10, window_bounds = array<i64: 2, 128, 512>}, {pipeline_mode = #tpu.pipeline_mode<synchronous>, transform_indices = @transform_11, window_bounds = array<i64: 2, 1, 512>}, {pipeline_mode = #tpu.pipeline_mode<synchronous>, transform_indices = @transform_12, window_bounds = array<i64: 2, 512, 128>}, {pipeline_mode = #tpu.pipeline_mode<synchronous>, transform_indices = @transform_13, window_bounds = array<i64: 2, 1, 128>}, {pipeline_mode = #tpu.pipeline_mode<synchronous>, transform_indices = @transform_14, window_bounds = array<i64: 2, 1, 128>}, {pipeline_mode = #tpu.pipeline_mode<synchronous>, transform_indices = @transform_15, window_bounds = array<i64: 2, 1, 128>}, {pipeline_mode = #tpu.pipeline_mode<synchronous>, transform_indices = @transform_16, window_bounds = array<i64: 128, 128>}, {pipeline_mode = #tpu.pipeline_mode<synchronous>, transform_indices = @transform_17, window_bounds = array<i64: 1, 128>}, {pipeline_mode = #tpu.pipeline_mode<synchronous>, transform_indices = @transform_18, window_bounds = array<i64: 128, 128>}, {pipeline_mode = #tpu.pipeline_mode<synchronous>, transform_indices = @transform_19, window_bounds = array<i64: 1, 128>}, {pipeline_mode = #tpu.pipeline_mode<synchronous>, transform_indices = @transform_20, window_bounds = array<i64: 16, 128>}]} {
    %0 = tpu.iota {dimensions = array<i32: 2>} : vector<1x1x128xi32>
    %c0_i32 = arith.constant 0 : i32
    %1 = vector.broadcast %c0_i32 : i32 to vector<1x1x128xi32>
    %2 = arith.cmpi sge, %0, %1 : vector<1x1x128xi32>
    %c64_i32 = arith.constant 64 : i32
    %3 = vector.broadcast %c64_i32 : i32 to vector<1x1x128xi32>
    %4 = arith.cmpi slt, %0, %3 : vector<1x1x128xi32>
    %5 = arith.andi %2, %4 : vector<1x1x128xi1>
    %6 = arith.extui %5 : vector<1x1x128xi1> to vector<1x1x128xi32>
    %7 = arith.sitofp %6 : vector<1x1x128xi32> to vector<1x1x128xf32>
    %c64_i32_0 = arith.constant 64 : i32
    %8 = vector.broadcast %c64_i32_0 : i32 to vector<1x1x128xi32>
    %9 = arith.cmpi sge, %0, %8 : vector<1x1x128xi32>
    %c128_i32 = arith.constant 128 : i32
    %10 = vector.broadcast %c128_i32 : i32 to vector<1x1x128xi32>
    %11 = arith.cmpi slt, %0, %10 : vector<1x1x128xi32>
    %12 = arith.andi %9, %11 : vector<1x1x128xi1>
    %13 = arith.extui %12 : vector<1x1x128xi1> to vector<1x1x128xi32>
    %14 = arith.sitofp %13 : vector<1x1x128xi32> to vector<1x1x128xf32>
    %c0 = arith.constant 0 : index
    %c0_1 = arith.constant 0 : index
    %15 = vector.load %arg2[%c0, %c0_1] : memref<2x8xf32, #tpu.memory_space<vmem>>, vector<2x8xf32>
    %cst = arith.constant 1.000000e+00 : f32
    %16 = vector.broadcast %cst : f32 to vector<2x8xf32>
    %17 = arith.subf %16, %15 : vector<2x8xf32>
    %18 = vector.shape_cast %17 : vector<2x8xf32> to vector<2x1x8xf32>
    %cst_2 = arith.constant -1.000000e+04 : f32
    %19 = vector.broadcast %cst_2 : f32 to vector<2x1x8xf32>
    %20 = arith.mulf %18, %19 : vector<2x1x8xf32>
    %c0_3 = arith.constant 0 : index
    %c0_4 = arith.constant 0 : index
    %21 = vector.load %arg1[%c0_3, %c0_4] : memref<16x128xf32, #tpu.memory_space<vmem>>, vector<16x128xf32>
    %c0_5 = arith.constant 0 : index
    %c0_6 = arith.constant 0 : index
    %22 = vector.load %arg3[%c0_5, %c0_6] : memref<1x128xf32, #tpu.memory_space<vmem>>, vector<1x128xf32>
    %c0_7 = arith.constant 0 : index
    %c0_8 = arith.constant 0 : index
    %23 = vector.load %arg4[%c0_7, %c0_8] : memref<1x128xf32, #tpu.memory_space<vmem>>, vector<1x128xf32>
    %cst_9 = arith.constant dense<0.000000e+00> : vector<16xf32>
    %24 = vector.multi_reduction <add>, %21, %cst_9 [1] : vector<16x128xf32> to vector<16xf32>
    %25 = vector.shape_cast %24 : vector<16xf32> to vector<16x1xf32>
    %cst_10 = arith.constant 1.280000e+02 : f32
    %26 = vector.broadcast %cst_10 : f32 to vector<16x1xf32>
    %27 = arith.divf %25, %26 : vector<16x1xf32>
    %28 = vector.broadcast %27 : vector<16x1xf32> to vector<16x128xf32>
    %29 = arith.subf %21, %28 : vector<16x128xf32>
    %30 = arith.mulf %29, %29 : vector<16x128xf32>
    %cst_11 = arith.constant dense<0.000000e+00> : vector<16xf32>
    %31 = vector.multi_reduction <add>, %30, %cst_11 [1] : vector<16x128xf32> to vector<16xf32>
    %32 = vector.shape_cast %31 : vector<16xf32> to vector<16x1xf32>
    %cst_12 = arith.constant 1.280000e+02 : f32
    %33 = vector.broadcast %cst_12 : f32 to vector<16x1xf32>
    %34 = arith.divf %32, %33 : vector<16x1xf32>
    %35 = vector.broadcast %27 : vector<16x1xf32> to vector<16x128xf32>
    %36 = arith.subf %21, %35 : vector<16x128xf32>
    %cst_13 = arith.constant 9.99999996E-13 : f32
    %37 = vector.broadcast %cst_13 : f32 to vector<16x1xf32>
    %38 = arith.addf %34, %37 : vector<16x1xf32>
    %39 = math.rsqrt %38 : vector<16x1xf32>
    %40 = vector.broadcast %39 : vector<16x1xf32> to vector<16x128xf32>
    %41 = arith.mulf %36, %40 : vector<16x128xf32>
    %42 = vector.broadcast %22 : vector<1x128xf32> to vector<16x128xf32>
    %43 = arith.mulf %41, %42 : vector<16x128xf32>
    %44 = vector.broadcast %23 : vector<1x128xf32> to vector<16x128xf32>
    %45 = arith.addf %43, %44 : vector<16x128xf32>
    %c0_14 = arith.constant 0 : index
    %c0_15 = arith.constant 0 : index
    %c0_16 = arith.constant 0 : index
    %46 = vector.load %arg5[%c0_14, %c0_15, %c0_16] : memref<2x128x384xbf16, #tpu.memory_space<vmem>>, vector<1x128x384xbf16>
    %47 = vector.shape_cast %46 : vector<1x128x384xbf16> to vector<128x384xbf16>
    %c0_17 = arith.constant 0 : index
    %c0_18 = arith.constant 0 : index
    %c0_19 = arith.constant 0 : index
    %48 = vector.load %arg6[%c0_17, %c0_18, %c0_19] : memref<2x1x384xf32, #tpu.memory_space<vmem>>, vector<1x1x384xf32>
    %49 = vector.shape_cast %48 : vector<1x1x384xf32> to vector<1x384xf32>
    %50 = arith.truncf %45 : vector<16x128xf32> to vector<16x128xbf16>
    %cst_20 = arith.constant dense<0.000000e+00> : vector<16x384xf32>
    %51 = tpu.matmul %50, %47, %cst_20 {dimension_numbers = #tpu.dot_dimension_numbers<[1], [0], [0], [1], [0, 0, 1, 1], [], []>} : vector<16x128xbf16>, vector<128x384xbf16>, vector<16x384xf32> -> vector<16x384xf32>
    %52 = vector.broadcast %49 : vector<1x384xf32> to vector<16x384xf32>
    %53 = arith.addf %51, %52 : vector<16x384xf32>
    %54 = vector.extract_strided_slice %53 {offsets = [0, 0], sizes = [16, 128], strides = [1, 1]} : vector<16x384xf32> to vector<16x128xf32>
    %55 = vector.shape_cast %54 : vector<16x128xf32> to vector<2x8x128xf32>
    %56 = vector.extract_strided_slice %53 {offsets = [0, 128], sizes = [16, 128], strides = [1, 1]} : vector<16x384xf32> to vector<16x128xf32>
    %57 = vector.shape_cast %56 : vector<16x128xf32> to vector<2x8x128xf32>
    %58 = vector.extract_strided_slice %53 {offsets = [0, 256], sizes = [16, 128], strides = [1, 1]} : vector<16x384xf32> to vector<16x128xf32>
    %59 = vector.shape_cast %58 : vector<16x128xf32> to vector<2x8x128xf32>
    %60 = vector.broadcast %7 : vector<1x1x128xf32> to vector<2x8x128xf32>
    %61 = arith.mulf %57, %60 : vector<2x8x128xf32>
    "tpu.trace_start"() <{level = 10 : i32, message = "bqh,bkh->bqk"}> : () -> ()
    %cst_21 = arith.constant dense<0.000000e+00> : vector<2x8x8xf32>
    %62 = tpu.matmul %55, %61, %cst_21 {dimension_numbers = #tpu.dot_dimension_numbers<[2], [2], [1], [1], [0, 0, 0, 1, 1, 1], [0], [0]>} : vector<2x8x128xf32>, vector<2x8x128xf32>, vector<2x8x8xf32> -> vector<2x8x8xf32>
    "tpu.trace_stop"() : () -> ()
    %cst_22 = arith.constant 1.250000e-01 : f32
    %63 = vector.broadcast %cst_22 : f32 to vector<2x8x8xf32>
    %64 = arith.mulf %62, %63 : vector<2x8x8xf32>
    %65 = vector.broadcast %20 : vector<2x1x8xf32> to vector<2x8x8xf32>
    %66 = arith.addf %64, %65 : vector<2x8x8xf32>
    %cst_23 = arith.constant dense<0xFF800000> : vector<2x8xf32>
    %67 = vector.multi_reduction <maximumf>, %66, %cst_23 [2] : vector<2x8x8xf32> to vector<2x8xf32>
    %68 = vector.shape_cast %67 : vector<2x8xf32> to vector<2x8x1xf32>
    %69 = vector.broadcast %68 : vector<2x8x1xf32> to vector<2x8x8xf32>
    %70 = arith.subf %66, %69 : vector<2x8x8xf32>
    %71 = math.exp %70 : vector<2x8x8xf32>
    %cst_24 = arith.constant dense<0.000000e+00> : vector<2x8xf32>
    %72 = vector.multi_reduction <add>, %71, %cst_24 [2] : vector<2x8x8xf32> to vector<2x8xf32>
    %73 = vector.shape_cast %72 : vector<2x8xf32> to vector<2x8x1xf32>
    %74 = tpu.reciprocal %73 {approx = true} : vector<2x8x1xf32> -> vector<2x8x1xf32>
    %75 = vector.broadcast %74 : vector<2x8x1xf32> to vector<2x8x8xf32>
    %76 = arith.mulf %71, %75 : vector<2x8x8xf32>
    %77 = vector.broadcast %7 : vector<1x1x128xf32> to vector<2x8x128xf32>
    %78 = arith.mulf %59, %77 : vector<2x8x128xf32>
    "tpu.trace_start"() <{level = 10 : i32, message = "bqk,bkh->bqh"}> : () -> ()
    %cst_25 = arith.constant dense<0.000000e+00> : vector<2x8x128xf32>
    %79 = tpu.matmul %76, %78, %cst_25 {dimension_numbers = #tpu.dot_dimension_numbers<[2], [1], [1], [2], [0, 0, 0, 1, 1, 2], [0], [0]>} : vector<2x8x8xf32>, vector<2x8x128xf32>, vector<2x8x128xf32> -> vector<2x8x128xf32>
    "tpu.trace_stop"() : () -> ()
    %80 = vector.broadcast %14 : vector<1x1x128xf32> to vector<2x8x128xf32>
    %81 = arith.mulf %57, %80 : vector<2x8x128xf32>
    "tpu.trace_start"() <{level = 10 : i32, message = "bqh,bkh->bqk"}> : () -> ()
    %cst_26 = arith.constant dense<0.000000e+00> : vector<2x8x8xf32>
    %82 = tpu.matmul %55, %81, %cst_26 {dimension_numbers = #tpu.dot_dimension_numbers<[2], [2], [1], [1], [0, 0, 0, 1, 1, 1], [0], [0]>} : vector<2x8x128xf32>, vector<2x8x128xf32>, vector<2x8x8xf32> -> vector<2x8x8xf32>
    "tpu.trace_stop"() : () -> ()
    %cst_27 = arith.constant 1.250000e-01 : f32
    %83 = vector.broadcast %cst_27 : f32 to vector<2x8x8xf32>
    %84 = arith.mulf %82, %83 : vector<2x8x8xf32>
    %85 = vector.broadcast %20 : vector<2x1x8xf32> to vector<2x8x8xf32>
    %86 = arith.addf %84, %85 : vector<2x8x8xf32>
    %cst_28 = arith.constant dense<0xFF800000> : vector<2x8xf32>
    %87 = vector.multi_reduction <maximumf>, %86, %cst_28 [2] : vector<2x8x8xf32> to vector<2x8xf32>
    %88 = vector.shape_cast %87 : vector<2x8xf32> to vector<2x8x1xf32>
    %89 = vector.broadcast %88 : vector<2x8x1xf32> to vector<2x8x8xf32>
    %90 = arith.subf %86, %89 : vector<2x8x8xf32>
    %91 = math.exp %90 : vector<2x8x8xf32>
    %cst_29 = arith.constant dense<0.000000e+00> : vector<2x8xf32>
    %92 = vector.multi_reduction <add>, %91, %cst_29 [2] : vector<2x8x8xf32> to vector<2x8xf32>
    %93 = vector.shape_cast %92 : vector<2x8xf32> to vector<2x8x1xf32>
    %94 = tpu.reciprocal %93 {approx = true} : vector<2x8x1xf32> -> vector<2x8x1xf32>
    %95 = vector.broadcast %94 : vector<2x8x1xf32> to vector<2x8x8xf32>
    %96 = arith.mulf %91, %95 : vector<2x8x8xf32>
    %97 = vector.broadcast %14 : vector<1x1x128xf32> to vector<2x8x128xf32>
    %98 = arith.mulf %59, %97 : vector<2x8x128xf32>
    "tpu.trace_start"() <{level = 10 : i32, message = "bqk,bkh->bqh"}> : () -> ()
    %cst_30 = arith.constant dense<0.000000e+00> : vector<2x8x128xf32>
    %99 = tpu.matmul %96, %98, %cst_30 {dimension_numbers = #tpu.dot_dimension_numbers<[2], [1], [1], [2], [0, 0, 0, 1, 1, 2], [0], [0]>} : vector<2x8x8xf32>, vector<2x8x128xf32>, vector<2x8x128xf32> -> vector<2x8x128xf32>
    "tpu.trace_stop"() : () -> ()
    %100 = arith.addf %79, %99 : vector<2x8x128xf32>
    %101 = vector.shape_cast %100 : vector<2x8x128xf32> to vector<16x128xf32>
    %c0_31 = arith.constant 0 : index
    %c0_32 = arith.constant 0 : index
    %c0_33 = arith.constant 0 : index
    %102 = vector.load %arg7[%c0_31, %c0_32, %c0_33] : memref<2x128x128xbf16, #tpu.memory_space<vmem>>, vector<1x128x128xbf16>
    %103 = vector.shape_cast %102 : vector<1x128x128xbf16> to vector<128x128xbf16>
    %c0_34 = arith.constant 0 : index
    %c0_35 = arith.constant 0 : index
    %c0_36 = arith.constant 0 : index
    %104 = vector.load %arg8[%c0_34, %c0_35, %c0_36] : memref<2x1x128xf32, #tpu.memory_space<vmem>>, vector<1x1x128xf32>
    %105 = vector.shape_cast %104 : vector<1x1x128xf32> to vector<1x128xf32>
    %106 = arith.truncf %101 : vector<16x128xf32> to vector<16x128xbf16>
    %cst_37 = arith.constant dense<0.000000e+00> : vector<16x128xf32>
    %107 = tpu.matmul %106, %103, %cst_37 {dimension_numbers = #tpu.dot_dimension_numbers<[1], [0], [0], [1], [0, 0, 1, 1], [], []>} : vector<16x128xbf16>, vector<128x128xbf16>, vector<16x128xf32> -> vector<16x128xf32>
    %108 = vector.broadcast %105 : vector<1x128xf32> to vector<16x128xf32>
    %109 = arith.addf %107, %108 : vector<16x128xf32>
    %110 = arith.addf %45, %109 : vector<16x128xf32>
    %c0_38 = arith.constant 0 : index
    %c0_39 = arith.constant 0 : index
    %c0_40 = arith.constant 0 : index
    %111 = vector.load %arg9[%c0_38, %c0_39, %c0_40] : memref<2x1x128xf32, #tpu.memory_space<vmem>>, vector<1x1x128xf32>
    %112 = vector.shape_cast %111 : vector<1x1x128xf32> to vector<1x128xf32>
    %c0_41 = arith.constant 0 : index
    %c0_42 = arith.constant 0 : index
    %c0_43 = arith.constant 0 : index
    %113 = vector.load %arg10[%c0_41, %c0_42, %c0_43] : memref<2x1x128xf32, #tpu.memory_space<vmem>>, vector<1x1x128xf32>
    %114 = vector.shape_cast %113 : vector<1x1x128xf32> to vector<1x128xf32>
    %cst_44 = arith.constant dense<0.000000e+00> : vector<16xf32>
    %115 = vector.multi_reduction <add>, %110, %cst_44 [1] : vector<16x128xf32> to vector<16xf32>
    %116 = vector.shape_cast %115 : vector<16xf32> to vector<16x1xf32>
    %cst_45 = arith.constant 1.280000e+02 : f32
    %117 = vector.broadcast %cst_45 : f32 to vector<16x1xf32>
    %118 = arith.divf %116, %117 : vector<16x1xf32>
    %119 = vector.broadcast %118 : vector<16x1xf32> to vector<16x128xf32>
    %120 = arith.subf %110, %119 : vector<16x128xf32>
    %121 = arith.mulf %120, %120 : vector<16x128xf32>
    %cst_46 = arith.constant dense<0.000000e+00> : vector<16xf32>
    %122 = vector.multi_reduction <add>, %121, %cst_46 [1] : vector<16x128xf32> to vector<16xf32>
    %123 = vector.shape_cast %122 : vector<16xf32> to vector<16x1xf32>
    %cst_47 = arith.constant 1.280000e+02 : f32
    %124 = vector.broadcast %cst_47 : f32 to vector<16x1xf32>
    %125 = arith.divf %123, %124 : vector<16x1xf32>
    %126 = vector.broadcast %118 : vector<16x1xf32> to vector<16x128xf32>
    %127 = arith.subf %110, %126 : vector<16x128xf32>
    %cst_48 = arith.constant 9.99999996E-13 : f32
    %128 = vector.broadcast %cst_48 : f32 to vector<16x1xf32>
    %129 = arith.addf %125, %128 : vector<16x1xf32>
    %130 = math.rsqrt %129 : vector<16x1xf32>
    %131 = vector.broadcast %130 : vector<16x1xf32> to vector<16x128xf32>
    %132 = arith.mulf %127, %131 : vector<16x128xf32>
    %133 = vector.broadcast %112 : vector<1x128xf32> to vector<16x128xf32>
    %134 = arith.mulf %132, %133 : vector<16x128xf32>
    %135 = vector.broadcast %114 : vector<1x128xf32> to vector<16x128xf32>
    %136 = arith.addf %134, %135 : vector<16x128xf32>
    %c0_49 = arith.constant 0 : index
    %c0_50 = arith.constant 0 : index
    %c0_51 = arith.constant 0 : index
    %137 = vector.load %arg11[%c0_49, %c0_50, %c0_51] : memref<2x128x512xbf16, #tpu.memory_space<vmem>>, vector<1x128x512xbf16>
    %138 = vector.shape_cast %137 : vector<1x128x512xbf16> to vector<128x512xbf16>
    %c0_52 = arith.constant 0 : index
    %c0_53 = arith.constant 0 : index
    %c0_54 = arith.constant 0 : index
    %139 = vector.load %arg12[%c0_52, %c0_53, %c0_54] : memref<2x1x512xf32, #tpu.memory_space<vmem>>, vector<1x1x512xf32>
    %140 = vector.shape_cast %139 : vector<1x1x512xf32> to vector<1x512xf32>
    %141 = arith.truncf %136 : vector<16x128xf32> to vector<16x128xbf16>
    %cst_55 = arith.constant dense<0.000000e+00> : vector<16x512xf32>
    %142 = tpu.matmul %141, %138, %cst_55 {dimension_numbers = #tpu.dot_dimension_numbers<[1], [0], [0], [1], [0, 0, 1, 1], [], []>} : vector<16x128xbf16>, vector<128x512xbf16>, vector<16x512xf32> -> vector<16x512xf32>
    %143 = vector.broadcast %140 : vector<1x512xf32> to vector<16x512xf32>
    %144 = arith.addf %142, %143 : vector<16x512xf32>
    %cst_56 = arith.constant 5.000000e-01 : f32
    %145 = vector.broadcast %cst_56 : f32 to vector<16x512xf32>
    %146 = arith.mulf %145, %144 : vector<16x512xf32>
    %cst_57 = arith.constant 0.707106769 : f32
    %147 = vector.broadcast %cst_57 : f32 to vector<16x512xf32>
    %148 = arith.mulf %144, %147 : vector<16x512xf32>
    %149 = math.erf %148 : vector<16x512xf32>
    %cst_58 = arith.constant 1.000000e+00 : f32
    %150 = vector.broadcast %cst_58 : f32 to vector<16x512xf32>
    %151 = arith.addf %150, %149 : vector<16x512xf32>
    %152 = arith.mulf %146, %151 : vector<16x512xf32>
    %c0_59 = arith.constant 0 : index
    %c0_60 = arith.constant 0 : index
    %c0_61 = arith.constant 0 : index
    %153 = vector.load %arg13[%c0_59, %c0_60, %c0_61] : memref<2x512x128xbf16, #tpu.memory_space<vmem>>, vector<1x512x128xbf16>
    %154 = vector.shape_cast %153 : vector<1x512x128xbf16> to vector<512x128xbf16>
    %c0_62 = arith.constant 0 : index
    %c0_63 = arith.constant 0 : index
    %c0_64 = arith.constant 0 : index
    %155 = vector.load %arg14[%c0_62, %c0_63, %c0_64] : memref<2x1x128xf32, #tpu.memory_space<vmem>>, vector<1x1x128xf32>
    %156 = vector.shape_cast %155 : vector<1x1x128xf32> to vector<1x128xf32>
    %157 = arith.truncf %152 : vector<16x512xf32> to vector<16x512xbf16>
    %cst_65 = arith.constant dense<0.000000e+00> : vector<16x128xf32>
    %158 = tpu.matmul %157, %154, %cst_65 {dimension_numbers = #tpu.dot_dimension_numbers<[1], [0], [0], [1], [0, 0, 1, 1], [], []>} : vector<16x512xbf16>, vector<512x128xbf16>, vector<16x128xf32> -> vector<16x128xf32>
    %159 = vector.broadcast %156 : vector<1x128xf32> to vector<16x128xf32>
    %160 = arith.addf %158, %159 : vector<16x128xf32>
    %161 = arith.addf %136, %160 : vector<16x128xf32>
    %c0_66 = arith.constant 0 : index
    %c0_67 = arith.constant 0 : index
    %c0_68 = arith.constant 0 : index
    %162 = vector.load %arg15[%c0_66, %c0_67, %c0_68] : memref<2x1x128xf32, #tpu.memory_space<vmem>>, vector<1x1x128xf32>
    %163 = vector.shape_cast %162 : vector<1x1x128xf32> to vector<1x128xf32>
    %c0_69 = arith.constant 0 : index
    %c0_70 = arith.constant 0 : index
    %c0_71 = arith.constant 0 : index
    %164 = vector.load %arg16[%c0_69, %c0_70, %c0_71] : memref<2x1x128xf32, #tpu.memory_space<vmem>>, vector<1x1x128xf32>
    %165 = vector.shape_cast %164 : vector<1x1x128xf32> to vector<1x128xf32>
    %cst_72 = arith.constant dense<0.000000e+00> : vector<16xf32>
    %166 = vector.multi_reduction <add>, %161, %cst_72 [1] : vector<16x128xf32> to vector<16xf32>
    %167 = vector.shape_cast %166 : vector<16xf32> to vector<16x1xf32>
    %cst_73 = arith.constant 1.280000e+02 : f32
    %168 = vector.broadcast %cst_73 : f32 to vector<16x1xf32>
    %169 = arith.divf %167, %168 : vector<16x1xf32>
    %170 = vector.broadcast %169 : vector<16x1xf32> to vector<16x128xf32>
    %171 = arith.subf %161, %170 : vector<16x128xf32>
    %172 = arith.mulf %171, %171 : vector<16x128xf32>
    %cst_74 = arith.constant dense<0.000000e+00> : vector<16xf32>
    %173 = vector.multi_reduction <add>, %172, %cst_74 [1] : vector<16x128xf32> to vector<16xf32>
    %174 = vector.shape_cast %173 : vector<16xf32> to vector<16x1xf32>
    %cst_75 = arith.constant 1.280000e+02 : f32
    %175 = vector.broadcast %cst_75 : f32 to vector<16x1xf32>
    %176 = arith.divf %174, %175 : vector<16x1xf32>
    %177 = vector.broadcast %169 : vector<16x1xf32> to vector<16x128xf32>
    %178 = arith.subf %161, %177 : vector<16x128xf32>
    %cst_76 = arith.constant 9.99999996E-13 : f32
    %179 = vector.broadcast %cst_76 : f32 to vector<16x1xf32>
    %180 = arith.addf %176, %179 : vector<16x1xf32>
    %181 = math.rsqrt %180 : vector<16x1xf32>
    %182 = vector.broadcast %181 : vector<16x1xf32> to vector<16x128xf32>
    %183 = arith.mulf %178, %182 : vector<16x128xf32>
    %184 = vector.broadcast %163 : vector<1x128xf32> to vector<16x128xf32>
    %185 = arith.mulf %183, %184 : vector<16x128xf32>
    %186 = vector.broadcast %165 : vector<1x128xf32> to vector<16x128xf32>
    %187 = arith.addf %185, %186 : vector<16x128xf32>
    %c1 = arith.constant 1 : index
    %c0_77 = arith.constant 0 : index
    %c0_78 = arith.constant 0 : index
    %188 = vector.load %arg5[%c1, %c0_77, %c0_78] : memref<2x128x384xbf16, #tpu.memory_space<vmem>>, vector<1x128x384xbf16>
    %189 = vector.shape_cast %188 : vector<1x128x384xbf16> to vector<128x384xbf16>
    %c1_79 = arith.constant 1 : index
    %c0_80 = arith.constant 0 : index
    %c0_81 = arith.constant 0 : index
    %190 = vector.load %arg6[%c1_79, %c0_80, %c0_81] : memref<2x1x384xf32, #tpu.memory_space<vmem>>, vector<1x1x384xf32>
    %191 = vector.shape_cast %190 : vector<1x1x384xf32> to vector<1x384xf32>
    %192 = arith.truncf %187 : vector<16x128xf32> to vector<16x128xbf16>
    %cst_82 = arith.constant dense<0.000000e+00> : vector<16x384xf32>
    %193 = tpu.matmul %192, %189, %cst_82 {dimension_numbers = #tpu.dot_dimension_numbers<[1], [0], [0], [1], [0, 0, 1, 1], [], []>} : vector<16x128xbf16>, vector<128x384xbf16>, vector<16x384xf32> -> vector<16x384xf32>
    %194 = vector.broadcast %191 : vector<1x384xf32> to vector<16x384xf32>
    %195 = arith.addf %193, %194 : vector<16x384xf32>
    %196 = vector.extract_strided_slice %195 {offsets = [0, 0], sizes = [16, 128], strides = [1, 1]} : vector<16x384xf32> to vector<16x128xf32>
    %197 = vector.shape_cast %196 : vector<16x128xf32> to vector<2x8x128xf32>
    %198 = vector.extract_strided_slice %195 {offsets = [0, 128], sizes = [16, 128], strides = [1, 1]} : vector<16x384xf32> to vector<16x128xf32>
    %199 = vector.shape_cast %198 : vector<16x128xf32> to vector<2x8x128xf32>
    %200 = vector.extract_strided_slice %195 {offsets = [0, 256], sizes = [16, 128], strides = [1, 1]} : vector<16x384xf32> to vector<16x128xf32>
    %201 = vector.shape_cast %200 : vector<16x128xf32> to vector<2x8x128xf32>
    %202 = vector.broadcast %7 : vector<1x1x128xf32> to vector<2x8x128xf32>
    %203 = arith.mulf %199, %202 : vector<2x8x128xf32>
    "tpu.trace_start"() <{level = 10 : i32, message = "bqh,bkh->bqk"}> : () -> ()
    %cst_83 = arith.constant dense<0.000000e+00> : vector<2x8x8xf32>
    %204 = tpu.matmul %197, %203, %cst_83 {dimension_numbers = #tpu.dot_dimension_numbers<[2], [2], [1], [1], [0, 0, 0, 1, 1, 1], [0], [0]>} : vector<2x8x128xf32>, vector<2x8x128xf32>, vector<2x8x8xf32> -> vector<2x8x8xf32>
    "tpu.trace_stop"() : () -> ()
    %cst_84 = arith.constant 1.250000e-01 : f32
    %205 = vector.broadcast %cst_84 : f32 to vector<2x8x8xf32>
    %206 = arith.mulf %204, %205 : vector<2x8x8xf32>
    %207 = vector.broadcast %20 : vector<2x1x8xf32> to vector<2x8x8xf32>
    %208 = arith.addf %206, %207 : vector<2x8x8xf32>
    %cst_85 = arith.constant dense<0xFF800000> : vector<2x8xf32>
    %209 = vector.multi_reduction <maximumf>, %208, %cst_85 [2] : vector<2x8x8xf32> to vector<2x8xf32>
    %210 = vector.shape_cast %209 : vector<2x8xf32> to vector<2x8x1xf32>
    %211 = vector.broadcast %210 : vector<2x8x1xf32> to vector<2x8x8xf32>
    %212 = arith.subf %208, %211 : vector<2x8x8xf32>
    %213 = math.exp %212 : vector<2x8x8xf32>
    %cst_86 = arith.constant dense<0.000000e+00> : vector<2x8xf32>
    %214 = vector.multi_reduction <add>, %213, %cst_86 [2] : vector<2x8x8xf32> to vector<2x8xf32>
    %215 = vector.shape_cast %214 : vector<2x8xf32> to vector<2x8x1xf32>
    %216 = tpu.reciprocal %215 {approx = true} : vector<2x8x1xf32> -> vector<2x8x1xf32>
    %217 = vector.broadcast %216 : vector<2x8x1xf32> to vector<2x8x8xf32>
    %218 = arith.mulf %213, %217 : vector<2x8x8xf32>
    %219 = vector.broadcast %7 : vector<1x1x128xf32> to vector<2x8x128xf32>
    %220 = arith.mulf %201, %219 : vector<2x8x128xf32>
    "tpu.trace_start"() <{level = 10 : i32, message = "bqk,bkh->bqh"}> : () -> ()
    %cst_87 = arith.constant dense<0.000000e+00> : vector<2x8x128xf32>
    %221 = tpu.matmul %218, %220, %cst_87 {dimension_numbers = #tpu.dot_dimension_numbers<[2], [1], [1], [2], [0, 0, 0, 1, 1, 2], [0], [0]>} : vector<2x8x8xf32>, vector<2x8x128xf32>, vector<2x8x128xf32> -> vector<2x8x128xf32>
    "tpu.trace_stop"() : () -> ()
    %222 = vector.broadcast %14 : vector<1x1x128xf32> to vector<2x8x128xf32>
    %223 = arith.mulf %199, %222 : vector<2x8x128xf32>
    "tpu.trace_start"() <{level = 10 : i32, message = "bqh,bkh->bqk"}> : () -> ()
    %cst_88 = arith.constant dense<0.000000e+00> : vector<2x8x8xf32>
    %224 = tpu.matmul %197, %223, %cst_88 {dimension_numbers = #tpu.dot_dimension_numbers<[2], [2], [1], [1], [0, 0, 0, 1, 1, 1], [0], [0]>} : vector<2x8x128xf32>, vector<2x8x128xf32>, vector<2x8x8xf32> -> vector<2x8x8xf32>
    "tpu.trace_stop"() : () -> ()
    %cst_89 = arith.constant 1.250000e-01 : f32
    %225 = vector.broadcast %cst_89 : f32 to vector<2x8x8xf32>
    %226 = arith.mulf %224, %225 : vector<2x8x8xf32>
    %227 = vector.broadcast %20 : vector<2x1x8xf32> to vector<2x8x8xf32>
    %228 = arith.addf %226, %227 : vector<2x8x8xf32>
    %cst_90 = arith.constant dense<0xFF800000> : vector<2x8xf32>
    %229 = vector.multi_reduction <maximumf>, %228, %cst_90 [2] : vector<2x8x8xf32> to vector<2x8xf32>
    %230 = vector.shape_cast %229 : vector<2x8xf32> to vector<2x8x1xf32>
    %231 = vector.broadcast %230 : vector<2x8x1xf32> to vector<2x8x8xf32>
    %232 = arith.subf %228, %231 : vector<2x8x8xf32>
    %233 = math.exp %232 : vector<2x8x8xf32>
    %cst_91 = arith.constant dense<0.000000e+00> : vector<2x8xf32>
    %234 = vector.multi_reduction <add>, %233, %cst_91 [2] : vector<2x8x8xf32> to vector<2x8xf32>
    %235 = vector.shape_cast %234 : vector<2x8xf32> to vector<2x8x1xf32>
    %236 = tpu.reciprocal %235 {approx = true} : vector<2x8x1xf32> -> vector<2x8x1xf32>
    %237 = vector.broadcast %236 : vector<2x8x1xf32> to vector<2x8x8xf32>
    %238 = arith.mulf %233, %237 : vector<2x8x8xf32>
    %239 = vector.broadcast %14 : vector<1x1x128xf32> to vector<2x8x128xf32>
    %240 = arith.mulf %201, %239 : vector<2x8x128xf32>
    "tpu.trace_start"() <{level = 10 : i32, message = "bqk,bkh->bqh"}> : () -> ()
    %cst_92 = arith.constant dense<0.000000e+00> : vector<2x8x128xf32>
    %241 = tpu.matmul %238, %240, %cst_92 {dimension_numbers = #tpu.dot_dimension_numbers<[2], [1], [1], [2], [0, 0, 0, 1, 1, 2], [0], [0]>} : vector<2x8x8xf32>, vector<2x8x128xf32>, vector<2x8x128xf32> -> vector<2x8x128xf32>
    "tpu.trace_stop"() : () -> ()
    %242 = arith.addf %221, %241 : vector<2x8x128xf32>
    %243 = vector.shape_cast %242 : vector<2x8x128xf32> to vector<16x128xf32>
    %c1_93 = arith.constant 1 : index
    %c0_94 = arith.constant 0 : index
    %c0_95 = arith.constant 0 : index
    %244 = vector.load %arg7[%c1_93, %c0_94, %c0_95] : memref<2x128x128xbf16, #tpu.memory_space<vmem>>, vector<1x128x128xbf16>
    %245 = vector.shape_cast %244 : vector<1x128x128xbf16> to vector<128x128xbf16>
    %c1_96 = arith.constant 1 : index
    %c0_97 = arith.constant 0 : index
    %c0_98 = arith.constant 0 : index
    %246 = vector.load %arg8[%c1_96, %c0_97, %c0_98] : memref<2x1x128xf32, #tpu.memory_space<vmem>>, vector<1x1x128xf32>
    %247 = vector.shape_cast %246 : vector<1x1x128xf32> to vector<1x128xf32>
    %248 = arith.truncf %243 : vector<16x128xf32> to vector<16x128xbf16>
    %cst_99 = arith.constant dense<0.000000e+00> : vector<16x128xf32>
    %249 = tpu.matmul %248, %245, %cst_99 {dimension_numbers = #tpu.dot_dimension_numbers<[1], [0], [0], [1], [0, 0, 1, 1], [], []>} : vector<16x128xbf16>, vector<128x128xbf16>, vector<16x128xf32> -> vector<16x128xf32>
    %250 = vector.broadcast %247 : vector<1x128xf32> to vector<16x128xf32>
    %251 = arith.addf %249, %250 : vector<16x128xf32>
    %252 = arith.addf %187, %251 : vector<16x128xf32>
    %c1_100 = arith.constant 1 : index
    %c0_101 = arith.constant 0 : index
    %c0_102 = arith.constant 0 : index
    %253 = vector.load %arg9[%c1_100, %c0_101, %c0_102] : memref<2x1x128xf32, #tpu.memory_space<vmem>>, vector<1x1x128xf32>
    %254 = vector.shape_cast %253 : vector<1x1x128xf32> to vector<1x128xf32>
    %c1_103 = arith.constant 1 : index
    %c0_104 = arith.constant 0 : index
    %c0_105 = arith.constant 0 : index
    %255 = vector.load %arg10[%c1_103, %c0_104, %c0_105] : memref<2x1x128xf32, #tpu.memory_space<vmem>>, vector<1x1x128xf32>
    %256 = vector.shape_cast %255 : vector<1x1x128xf32> to vector<1x128xf32>
    %cst_106 = arith.constant dense<0.000000e+00> : vector<16xf32>
    %257 = vector.multi_reduction <add>, %252, %cst_106 [1] : vector<16x128xf32> to vector<16xf32>
    %258 = vector.shape_cast %257 : vector<16xf32> to vector<16x1xf32>
    %cst_107 = arith.constant 1.280000e+02 : f32
    %259 = vector.broadcast %cst_107 : f32 to vector<16x1xf32>
    %260 = arith.divf %258, %259 : vector<16x1xf32>
    %261 = vector.broadcast %260 : vector<16x1xf32> to vector<16x128xf32>
    %262 = arith.subf %252, %261 : vector<16x128xf32>
    %263 = arith.mulf %262, %262 : vector<16x128xf32>
    %cst_108 = arith.constant dense<0.000000e+00> : vector<16xf32>
    %264 = vector.multi_reduction <add>, %263, %cst_108 [1] : vector<16x128xf32> to vector<16xf32>
    %265 = vector.shape_cast %264 : vector<16xf32> to vector<16x1xf32>
    %cst_109 = arith.constant 1.280000e+02 : f32
    %266 = vector.broadcast %cst_109 : f32 to vector<16x1xf32>
    %267 = arith.divf %265, %266 : vector<16x1xf32>
    %268 = vector.broadcast %260 : vector<16x1xf32> to vector<16x128xf32>
    %269 = arith.subf %252, %268 : vector<16x128xf32>
    %cst_110 = arith.constant 9.99999996E-13 : f32
    %270 = vector.broadcast %cst_110 : f32 to vector<16x1xf32>
    %271 = arith.addf %267, %270 : vector<16x1xf32>
    %272 = math.rsqrt %271 : vector<16x1xf32>
    %273 = vector.broadcast %272 : vector<16x1xf32> to vector<16x128xf32>
    %274 = arith.mulf %269, %273 : vector<16x128xf32>
    %275 = vector.broadcast %254 : vector<1x128xf32> to vector<16x128xf32>
    %276 = arith.mulf %274, %275 : vector<16x128xf32>
    %277 = vector.broadcast %256 : vector<1x128xf32> to vector<16x128xf32>
    %278 = arith.addf %276, %277 : vector<16x128xf32>
    %c1_111 = arith.constant 1 : index
    %c0_112 = arith.constant 0 : index
    %c0_113 = arith.constant 0 : index
    %279 = vector.load %arg11[%c1_111, %c0_112, %c0_113] : memref<2x128x512xbf16, #tpu.memory_space<vmem>>, vector<1x128x512xbf16>
    %280 = vector.shape_cast %279 : vector<1x128x512xbf16> to vector<128x512xbf16>
    %c1_114 = arith.constant 1 : index
    %c0_115 = arith.constant 0 : index
    %c0_116 = arith.constant 0 : index
    %281 = vector.load %arg12[%c1_114, %c0_115, %c0_116] : memref<2x1x512xf32, #tpu.memory_space<vmem>>, vector<1x1x512xf32>
    %282 = vector.shape_cast %281 : vector<1x1x512xf32> to vector<1x512xf32>
    %283 = arith.truncf %278 : vector<16x128xf32> to vector<16x128xbf16>
    %cst_117 = arith.constant dense<0.000000e+00> : vector<16x512xf32>
    %284 = tpu.matmul %283, %280, %cst_117 {dimension_numbers = #tpu.dot_dimension_numbers<[1], [0], [0], [1], [0, 0, 1, 1], [], []>} : vector<16x128xbf16>, vector<128x512xbf16>, vector<16x512xf32> -> vector<16x512xf32>
    %285 = vector.broadcast %282 : vector<1x512xf32> to vector<16x512xf32>
    %286 = arith.addf %284, %285 : vector<16x512xf32>
    %cst_118 = arith.constant 5.000000e-01 : f32
    %287 = vector.broadcast %cst_118 : f32 to vector<16x512xf32>
    %288 = arith.mulf %287, %286 : vector<16x512xf32>
    %cst_119 = arith.constant 0.707106769 : f32
    %289 = vector.broadcast %cst_119 : f32 to vector<16x512xf32>
    %290 = arith.mulf %286, %289 : vector<16x512xf32>
    %291 = math.erf %290 : vector<16x512xf32>
    %cst_120 = arith.constant 1.000000e+00 : f32
    %292 = vector.broadcast %cst_120 : f32 to vector<16x512xf32>
    %293 = arith.addf %292, %291 : vector<16x512xf32>
    %294 = arith.mulf %288, %293 : vector<16x512xf32>
    %c1_121 = arith.constant 1 : index
    %c0_122 = arith.constant 0 : index
    %c0_123 = arith.constant 0 : index
    %295 = vector.load %arg13[%c1_121, %c0_122, %c0_123] : memref<2x512x128xbf16, #tpu.memory_space<vmem>>, vector<1x512x128xbf16>
    %296 = vector.shape_cast %295 : vector<1x512x128xbf16> to vector<512x128xbf16>
    %c1_124 = arith.constant 1 : index
    %c0_125 = arith.constant 0 : index
    %c0_126 = arith.constant 0 : index
    %297 = vector.load %arg14[%c1_124, %c0_125, %c0_126] : memref<2x1x128xf32, #tpu.memory_space<vmem>>, vector<1x1x128xf32>
    %298 = vector.shape_cast %297 : vector<1x1x128xf32> to vector<1x128xf32>
    %299 = arith.truncf %294 : vector<16x512xf32> to vector<16x512xbf16>
    %cst_127 = arith.constant dense<0.000000e+00> : vector<16x128xf32>
    %300 = tpu.matmul %299, %296, %cst_127 {dimension_numbers = #tpu.dot_dimension_numbers<[1], [0], [0], [1], [0, 0, 1, 1], [], []>} : vector<16x512xbf16>, vector<512x128xbf16>, vector<16x128xf32> -> vector<16x128xf32>
    %301 = vector.broadcast %298 : vector<1x128xf32> to vector<16x128xf32>
    %302 = arith.addf %300, %301 : vector<16x128xf32>
    %303 = arith.addf %278, %302 : vector<16x128xf32>
    %c1_128 = arith.constant 1 : index
    %c0_129 = arith.constant 0 : index
    %c0_130 = arith.constant 0 : index
    %304 = vector.load %arg15[%c1_128, %c0_129, %c0_130] : memref<2x1x128xf32, #tpu.memory_space<vmem>>, vector<1x1x128xf32>
    %305 = vector.shape_cast %304 : vector<1x1x128xf32> to vector<1x128xf32>
    %c1_131 = arith.constant 1 : index
    %c0_132 = arith.constant 0 : index
    %c0_133 = arith.constant 0 : index
    %306 = vector.load %arg16[%c1_131, %c0_132, %c0_133] : memref<2x1x128xf32, #tpu.memory_space<vmem>>, vector<1x1x128xf32>
    %307 = vector.shape_cast %306 : vector<1x1x128xf32> to vector<1x128xf32>
    %cst_134 = arith.constant dense<0.000000e+00> : vector<16xf32>
    %308 = vector.multi_reduction <add>, %303, %cst_134 [1] : vector<16x128xf32> to vector<16xf32>
    %309 = vector.shape_cast %308 : vector<16xf32> to vector<16x1xf32>
    %cst_135 = arith.constant 1.280000e+02 : f32
    %310 = vector.broadcast %cst_135 : f32 to vector<16x1xf32>
    %311 = arith.divf %309, %310 : vector<16x1xf32>
    %312 = vector.broadcast %311 : vector<16x1xf32> to vector<16x128xf32>
    %313 = arith.subf %303, %312 : vector<16x128xf32>
    %314 = arith.mulf %313, %313 : vector<16x128xf32>
    %cst_136 = arith.constant dense<0.000000e+00> : vector<16xf32>
    %315 = vector.multi_reduction <add>, %314, %cst_136 [1] : vector<16x128xf32> to vector<16xf32>
    %316 = vector.shape_cast %315 : vector<16xf32> to vector<16x1xf32>
    %cst_137 = arith.constant 1.280000e+02 : f32
    %317 = vector.broadcast %cst_137 : f32 to vector<16x1xf32>
    %318 = arith.divf %316, %317 : vector<16x1xf32>
    %319 = vector.broadcast %311 : vector<16x1xf32> to vector<16x128xf32>
    %320 = arith.subf %303, %319 : vector<16x128xf32>
    %cst_138 = arith.constant 9.99999996E-13 : f32
    %321 = vector.broadcast %cst_138 : f32 to vector<16x1xf32>
    %322 = arith.addf %318, %321 : vector<16x1xf32>
    %323 = math.rsqrt %322 : vector<16x1xf32>
    %324 = vector.broadcast %323 : vector<16x1xf32> to vector<16x128xf32>
    %325 = arith.mulf %320, %324 : vector<16x128xf32>
    %326 = vector.broadcast %305 : vector<1x128xf32> to vector<16x128xf32>
    %327 = arith.mulf %325, %326 : vector<16x128xf32>
    %328 = vector.broadcast %307 : vector<1x128xf32> to vector<16x128xf32>
    %329 = arith.addf %327, %328 : vector<16x128xf32>
    %c0_139 = arith.constant 0 : index
    %c0_140 = arith.constant 0 : index
    %330 = vector.load %arg17[%c0_139, %c0_140] : memref<128x128xbf16, #tpu.memory_space<vmem>>, vector<128x128xbf16>
    %c0_141 = arith.constant 0 : index
    %c0_142 = arith.constant 0 : index
    %331 = vector.load %arg18[%c0_141, %c0_142] : memref<1x128xf32, #tpu.memory_space<vmem>>, vector<1x128xf32>
    %332 = arith.truncf %329 : vector<16x128xf32> to vector<16x128xbf16>
    %cst_143 = arith.constant dense<0.000000e+00> : vector<16x128xf32>
    %333 = tpu.matmul %332, %330, %cst_143 {dimension_numbers = #tpu.dot_dimension_numbers<[1], [0], [0], [1], [0, 0, 1, 1], [], []>} : vector<16x128xbf16>, vector<128x128xbf16>, vector<16x128xf32> -> vector<16x128xf32>
    %334 = vector.broadcast %331 : vector<1x128xf32> to vector<16x128xf32>
    %335 = arith.addf %333, %334 : vector<16x128xf32>
    %336 = math.tanh %335 : vector<16x128xf32>
    %c0_144 = arith.constant 0 : index
    %c0_145 = arith.constant 0 : index
    %337 = vector.load %arg19[%c0_144, %c0_145] : memref<128x128xbf16, #tpu.memory_space<vmem>>, vector<128x128xbf16>
    %c0_146 = arith.constant 0 : index
    %c0_147 = arith.constant 0 : index
    %338 = vector.load %arg20[%c0_146, %c0_147] : memref<1x128xf32, #tpu.memory_space<vmem>>, vector<1x128xf32>
    %339 = arith.truncf %336 : vector<16x128xf32> to vector<16x128xbf16>
    %cst_148 = arith.constant dense<0.000000e+00> : vector<16x128xf32>
    %340 = tpu.matmul %339, %337, %cst_148 {dimension_numbers = #tpu.dot_dimension_numbers<[1], [0], [0], [1], [0, 0, 1, 1], [], []>} : vector<16x128xbf16>, vector<128x128xbf16>, vector<16x128xf32> -> vector<16x128xf32>
    %341 = vector.broadcast %338 : vector<1x128xf32> to vector<16x128xf32>
    %342 = arith.addf %340, %341 : vector<16x128xf32>
    %c0_149 = arith.constant 0 : index
    %c0_150 = arith.constant 0 : index
    %343 = vector.load %arg21[%c0_149, %c0_150] : memref<16x128xf32, #tpu.memory_space<vmem>>, vector<16x128xf32>
    tpu.vector_store %arg21[%c0_149, %c0_150], %342 {strides = array<i32>} : memref<16x128xf32, #tpu.memory_space<vmem>>, vector<16x128xf32>,
    return
  }
  func.func @transform_0(%arg0: i32) -> (i32, i32) {
    %c0_i32 = arith.constant 0 : i32
    %c0_i32_0 = arith.constant 0 : i32
    %c0_i32_1 = arith.constant 0 : i32
    return %c0_i32, %c0_i32_0 : i32, i32
  }
  func.func @transform_1(%arg0: i32) -> (i32, i32) {
    %c0_i32 = arith.constant 0 : i32
    %c0_i32_0 = arith.constant 0 : i32
    %c0_i32_1 = arith.constant 0 : i32
    return %c0_i32, %c0_i32_0 : i32, i32
  }
  func.func @transform_2(%arg0: i32) -> (i32, i32) {
    %c0_i32 = arith.constant 0 : i32
    %c0_i32_0 = arith.constant 0 : i32
    %c0_i32_1 = arith.constant 0 : i32
    return %c0_i32, %c0_i32_0 : i32, i32
  }
  func.func @transform_3(%arg0: i32) -> (i32, i32) {
    %c0_i32 = arith.constant 0 : i32
    %c0_i32_0 = arith.constant 0 : i32
    %c0_i32_1 = arith.constant 0 : i32
    return %c0_i32, %c0_i32_0 : i32, i32
  }
  func.func @transform_4(%arg0: i32) -> (i32, i32, i32) {
    %c0_i32 = arith.constant 0 : i32
    %c0_i32_0 = arith.constant 0 : i32
    %c0_i32_1 = arith.constant 0 : i32
    %c0_i32_2 = arith.constant 0 : i32
    return %c0_i32, %c0_i32_0, %c0_i32_1 : i32, i32, i32
  }
  func.func @transform_5(%arg0: i32) -> (i32, i32, i32) {
    %c0_i32 = arith.constant 0 : i32
    %c0_i32_0 = arith.constant 0 : i32
    %c0_i32_1 = arith.constant 0 : i32
    %c0_i32_2 = arith.constant 0 : i32
    return %c0_i32, %c0_i32_0, %c0_i32_1 : i32, i32, i32
  }
  func.func @transform_6(%arg0: i32) -> (i32, i32, i32) {
    %c0_i32 = arith.constant 0 : i32
    %c0_i32_0 = arith.constant 0 : i32
    %c0_i32_1 = arith.constant 0 : i32
    %c0_i32_2 = arith.constant 0 : i32
    return %c0_i32, %c0_i32_0, %c0_i32_1 : i32, i32, i32
  }
  func.func @transform_7(%arg0: i32) -> (i32, i32, i32) {
    %c0_i32 = arith.constant 0 : i32
    %c0_i32_0 = arith.constant 0 : i32
    %c0_i32_1 = arith.constant 0 : i32
    %c0_i32_2 = arith.constant 0 : i32
    return %c0_i32, %c0_i32_0, %c0_i32_1 : i32, i32, i32
  }
  func.func @transform_8(%arg0: i32) -> (i32, i32, i32) {
    %c0_i32 = arith.constant 0 : i32
    %c0_i32_0 = arith.constant 0 : i32
    %c0_i32_1 = arith.constant 0 : i32
    %c0_i32_2 = arith.constant 0 : i32
    return %c0_i32, %c0_i32_0, %c0_i32_1 : i32, i32, i32
  }
  func.func @transform_9(%arg0: i32) -> (i32, i32, i32) {
    %c0_i32 = arith.constant 0 : i32
    %c0_i32_0 = arith.constant 0 : i32
    %c0_i32_1 = arith.constant 0 : i32
    %c0_i32_2 = arith.constant 0 : i32
    return %c0_i32, %c0_i32_0, %c0_i32_1 : i32, i32, i32
  }
  func.func @transform_10(%arg0: i32) -> (i32, i32, i32) {
    %c0_i32 = arith.constant 0 : i32
    %c0_i32_0 = arith.constant 0 : i32
    %c0_i32_1 = arith.constant 0 : i32
    %c0_i32_2 = arith.constant 0 : i32
    return %c0_i32, %c0_i32_0, %c0_i32_1 : i32, i32, i32
  }
  func.func @transform_11(%arg0: i32) -> (i32, i32, i32) {
    %c0_i32 = arith.constant 0 : i32
    %c0_i32_0 = arith.constant 0 : i32
    %c0_i32_1 = arith.constant 0 : i32
    %c0_i32_2 = arith.constant 0 : i32
    return %c0_i32, %c0_i32_0, %c0_i32_1 : i32, i32, i32
  }
  func.func @transform_12(%arg0: i32) -> (i32, i32, i32) {
    %c0_i32 = arith.constant 0 : i32
    %c0_i32_0 = arith.constant 0 : i32
    %c0_i32_1 = arith.constant 0 : i32
    %c0_i32_2 = arith.constant 0 : i32
    return %c0_i32, %c0_i32_0, %c0_i32_1 : i32, i32, i32
  }
  func.func @transform_13(%arg0: i32) -> (i32, i32, i32) {
    %c0_i32 = arith.constant 0 : i32
    %c0_i32_0 = arith.constant 0 : i32
    %c0_i32_1 = arith.constant 0 : i32
    %c0_i32_2 = arith.constant 0 : i32
    return %c0_i32, %c0_i32_0, %c0_i32_1 : i32, i32, i32
  }
  func.func @transform_14(%arg0: i32) -> (i32, i32, i32) {
    %c0_i32 = arith.constant 0 : i32
    %c0_i32_0 = arith.constant 0 : i32
    %c0_i32_1 = arith.constant 0 : i32
    %c0_i32_2 = arith.constant 0 : i32
    return %c0_i32, %c0_i32_0, %c0_i32_1 : i32, i32, i32
  }
  func.func @transform_15(%arg0: i32) -> (i32, i32, i32) {
    %c0_i32 = arith.constant 0 : i32
    %c0_i32_0 = arith.constant 0 : i32
    %c0_i32_1 = arith.constant 0 : i32
    %c0_i32_2 = arith.constant 0 : i32
    return %c0_i32, %c0_i32_0, %c0_i32_1 : i32, i32, i32
  }
  func.func @transform_16(%arg0: i32) -> (i32, i32) {
    %c0_i32 = arith.constant 0 : i32
    %c0_i32_0 = arith.constant 0 : i32
    %c0_i32_1 = arith.constant 0 : i32
    return %c0_i32, %c0_i32_0 : i32, i32
  }
  func.func @transform_17(%arg0: i32) -> (i32, i32) {
    %c0_i32 = arith.constant 0 : i32
    %c0_i32_0 = arith.constant 0 : i32
    %c0_i32_1 = arith.constant 0 : i32
    return %c0_i32, %c0_i32_0 : i32, i32
  }
  func.func @transform_18(%arg0: i32) -> (i32, i32) {
    %c0_i32 = arith.constant 0 : i32
    %c0_i32_0 = arith.constant 0 : i32
    %c0_i32_1 = arith.constant 0 : i32
    return %c0_i32, %c0_i32_0 : i32, i32
  }
  func.func @transform_19(%arg0: i32) -> (i32, i32) {
    %c0_i32 = arith.constant 0 : i32
    %c0_i32_0 = arith.constant 0 : i32
    %c0_i32_1 = arith.constant 0 : i32
    return %c0_i32, %c0_i32_0 : i32, i32
  }
  func.func @transform_20(%arg0: i32) -> (i32, i32) {
    %c0_i32 = arith.constant 0 : i32
    %c0_i32_0 = arith.constant 0 : i32
    %c0_i32_1 = arith.constant 0 : i32
    return %c0_i32, %c0_i32_0 : i32, i32
  }
}

</mosaic_0001>

<llo_original>
// kernel: bert_class_forward.1
$region0: #{bert_class_forward.1}
  #allocation0 [shape = 'u32[]', space=smem, size = 0x4, offset = 0x4, fixed_abs, tag = 'smem constant byte address 0x4 - core index']
  #allocation1 [shape = 'u32[144,128]{1,0:T(1,128)}', space=vmem, size = 0x12000, scoped, tag = 'internal scratch']
  %s0 = inlined_call_operand.vmem [shape: f32[16,128], index: 0, kind: input, shape index: {}]
  %s1 = inlined_call_operand.vmem [shape: f32[2,8], index: 1, kind: input, shape index: {}]
  %s2 = inlined_call_operand.vmem [shape: f32[1,128], index: 2, kind: input, shape index: {}]
  %s3 = inlined_call_operand.vmem [shape: f32[1,128], index: 3, kind: input, shape index: {}]
  %s4 = inlined_call_operand.hbm [shape: bf16[2,128,384], index: 4, kind: input, shape index: {}]
  %s5 = inlined_call_operand.vmem [shape: f32[2,1,384], index: 5, kind: input, shape index: {}]
  %s6 = inlined_call_operand.vmem [shape: bf16[2,128,128], index: 6, kind: input, shape index: {}]
  %s7 = inlined_call_operand.vmem [shape: f32[2,1,128], index: 7, kind: input, shape index: {}]
  %s8 = inlined_call_operand.vmem [shape: f32[2,1,128], index: 8, kind: input, shape index: {}]
  %s9 = inlined_call_operand.vmem [shape: f32[2,1,128], index: 9, kind: input, shape index: {}]
  %s10 = inlined_call_operand.hbm [shape: bf16[2,128,512], index: 10, kind: input, shape index: {}]
  %s11 = inlined_call_operand.vmem [shape: f32[2,1,512], index: 11, kind: input, shape index: {}]
  %s12 = inlined_call_operand.hbm [shape: bf16[2,512,128], index: 12, kind: input, shape index: {}]
  %s13 = inlined_call_operand.vmem [shape: f32[2,1,128], index: 13, kind: input, shape index: {}]
  %s14 = inlined_call_operand.vmem [shape: f32[2,1,128], index: 14, kind: input, shape index: {}]
  %s15 = inlined_call_operand.vmem [shape: f32[2,1,128], index: 15, kind: input, shape index: {}]
  %s16 = inlined_call_operand.vmem [shape: bf16[128,128], index: 16, kind: input, shape index: {}]
  %s17 = inlined_call_operand.vmem [shape: f32[1,128], index: 17, kind: input, shape index: {}]
  %s18 = inlined_call_operand.vmem [shape: bf16[128,128], index: 18, kind: input, shape index: {}]
  %s19 = inlined_call_operand.vmem [shape: f32[1,128], index: 19, kind: input, shape index: {}]
  %s20 = inlined_call_operand.vmem [shape: f32[16,128], index: 20, kind: output, shape index: {}]
  %s21 = sld [smem:[#allocation0]]
  $region102: #{bert_class_forward.1} parent=0
    _
  %s23 = ssub.s32 1, %s21
  %s24 = scalar_select 0, %s23, %s21
  $region1: #{bert_class_forward.1} parent=0
    #allocation2 [shape = 'u8[196608]{0}', space=vmem, size = 0x30000, scoped, tag = 'input window, operand 4, single buffered']
    #allocation3 [shape = 's32[1]{0}', space=sflag, size = 0x4, scoped, tag = 'scoped memory for bert_class_forward.1']
    #allocation4 [shape = 'u8[262144]{0}', space=vmem, size = 0x40000, scoped, tag = 'input window, operand 10, single buffered']
    #allocation5 [shape = 's32[1]{0}', space=sflag, size = 0x4, scoped, tag = 'scoped memory for bert_class_forward.1']
    #allocation6 [shape = 'u8[262144]{0}', space=vmem, size = 0x40000, scoped, tag = 'input window, operand 12, single buffered']
    %25 = vsyncpa [#allocation3], 0
    %26 = vsyncpa [#allocation5], 0
    // Predicated region
    $region2: #{bert_class_forward.1} parent=1 // pred_check
      _
    $region3: #{bert_class_forward.1} parent=1 // pred_check_branch
      %28 = sbr.rel (0) target = $region5
    $region4: #{bert_class_forward.1} parent=1 // pred_region
      _
    $region5: #{bert_class_forward.1} parent=1 // pred_fallthru
      _
    // Predicated region
    $region6: #{bert_class_forward.1} parent=1 // pred_check
      _
    $region7: #{bert_class_forward.1} parent=1 // pred_check_branch
      %30 = sbr.rel (0) target = $region9
    $region8: #{bert_class_forward.1} parent=1 // pred_region
      _
    $region9: #{bert_class_forward.1} parent=1 // pred_fallthru
      _
    // Predicated region
    $region10: #{bert_class_forward.1} parent=1 // pred_check
      _
    $region11: #{bert_class_forward.1} parent=1 // pred_check_branch
      %32 = sbr.rel (0) target = $region13
    $region12: #{bert_class_forward.1} parent=1 // pred_region
      _
    $region13: #{bert_class_forward.1} parent=1 // pred_fallthru
      _
    // Predicated region
    $region14: #{bert_class_forward.1} parent=1 // pred_check
      _
    $region15: #{bert_class_forward.1} parent=1 // pred_check_branch
      %34 = sbr.rel (0) target = $region17
    $region16: #{bert_class_forward.1} parent=1 // pred_region
      _
    $region17: #{bert_class_forward.1} parent=1 // pred_fallthru
      _
    // Predicated region
    $region18: #{bert_class_forward.1} parent=1 // pred_check
      _
    $region19: #{bert_class_forward.1} parent=1 // pred_check_branch
      %36 = sbr.rel (0) target = $region21
    $region20: #{bert_class_forward.1} parent=1 // pred_region
      %s38 = ssub.s32 6144, 6144
      %39 = vsyncadd [#allocation3], %s38
      %s40 = sshll.u32 [#allocation2], 4
      %s41 = int_to_ptr.vmem [resolvable:$true] %s40
      %46 = dma.hbm_to_vmem [thread:$0]  %s4, 6144, %s41, [#allocation3], 192, 192, 12
    $region21: #{bert_class_forward.1} parent=1 // pred_fallthru
      _
    // Predicated region
    $region22: #{bert_class_forward.1} parent=1 // pred_check
      _
    $region23: #{bert_class_forward.1} parent=1 // pred_check_branch
      %48 = sbr.rel (0) target = $region25
    $region24: #{bert_class_forward.1} parent=1 // pred_region
      _
    $region25: #{bert_class_forward.1} parent=1 // pred_fallthru
      _
    // Predicated region
    $region26: #{bert_class_forward.1} parent=1 // pred_check
      _
    $region27: #{bert_class_forward.1} parent=1 // pred_check_branch
      %50 = sbr.rel (0) target = $region29
    $region28: #{bert_class_forward.1} parent=1 // pred_region
      _
    $region29: #{bert_class_forward.1} parent=1 // pred_fallthru
      _
    // Predicated region
    $region30: #{bert_class_forward.1} parent=1 // pred_check
      _
    $region31: #{bert_class_forward.1} parent=1 // pred_check_branch
      %52 = sbr.rel (0) target = $region33
    $region32: #{bert_class_forward.1} parent=1 // pred_region
      _
    $region33: #{bert_class_forward.1} parent=1 // pred_fallthru
      _
    // Predicated region
    $region34: #{bert_class_forward.1} parent=1 // pred_check
      _
    $region35: #{bert_class_forward.1} parent=1 // pred_check_branch
      %54 = sbr.rel (0) target = $region37
    $region36: #{bert_class_forward.1} parent=1 // pred_region
      _
    $region37: #{bert_class_forward.1} parent=1 // pred_fallthru
      _
    // Predicated region
    $region38: #{bert_class_forward.1} parent=1 // pred_check
      _
    $region39: #{bert_class_forward.1} parent=1 // pred_check_branch
      %56 = sbr.rel (0) target = $region41
    $region40: #{bert_class_forward.1} parent=1 // pred_region
      _
    $region41: #{bert_class_forward.1} parent=1 // pred_fallthru
      _
    // Predicated region
    $region42: #{bert_class_forward.1} parent=1 // pred_check
      _
    $region43: #{bert_class_forward.1} parent=1 // pred_check_branch
      %58 = sbr.rel (0) target = $region45
    $region44: #{bert_class_forward.1} parent=1 // pred_region
      %s60 = ssub.s32 8192, 8192
      %61 = vsyncadd [#allocation5], %s60
      %s62 = sshll.u32 [#allocation4], 4
      %s63 = int_to_ptr.vmem [resolvable:$true] %s62
      %68 = dma.hbm_to_vmem [thread:$0]  %s10, 8192, %s63, [#allocation5], 256, 256, 16
    $region45: #{bert_class_forward.1} parent=1 // pred_fallthru
      _
    // Predicated region
    $region46: #{bert_class_forward.1} parent=1 // pred_check
      _
    $region47: #{bert_class_forward.1} parent=1 // pred_check_branch
      %70 = sbr.rel (0) target = $region49
    $region48: #{bert_class_forward.1} parent=1 // pred_region
      _
    $region49: #{bert_class_forward.1} parent=1 // pred_fallthru
      _
    // Predicated region
    $region50: #{bert_class_forward.1} parent=1 // pred_check
      _
    $region51: #{bert_class_forward.1} parent=1 // pred_check_branch
      %72 = sbr.rel (0) target = $region53
    $region52: #{bert_class_forward.1} parent=1 // pred_region
      %s74 = ssub.s32 8192, 8192
      %75 = vsyncadd [#allocation5], %s74
      %s76 = sshll.u32 [#allocation6], 4
      %s77 = int_to_ptr.vmem [resolvable:$true] %s76
      %82 = dma.hbm_to_vmem [thread:$0]  %s12, 8192, %s77, [#allocation5], 64, 64, 4
    $region53: #{bert_class_forward.1} parent=1 // pred_fallthru
      _
    // Predicated region
    $region54: #{bert_class_forward.1} parent=1 // pred_check
      _
    $region55: #{bert_class_forward.1} parent=1 // pred_check_branch
      %84 = sbr.rel (0) target = $region57
    $region56: #{bert_class_forward.1} parent=1 // pred_region
      _
    $region57: #{bert_class_forward.1} parent=1 // pred_fallthru
      _
    // Predicated region
    $region58: #{bert_class_forward.1} parent=1 // pred_check
      _
    $region59: #{bert_class_forward.1} parent=1 // pred_check_branch
      %86 = sbr.rel (0) target = $region61
    $region60: #{bert_class_forward.1} parent=1 // pred_region
      _
    $region61: #{bert_class_forward.1} parent=1 // pred_fallthru
      _
    // Predicated region
    $region62: #{bert_class_forward.1} parent=1 // pred_check
      _
    $region63: #{bert_class_forward.1} parent=1 // pred_check_branch
      %88 = sbr.rel (0) target = $region65
    $region64: #{bert_class_forward.1} parent=1 // pred_region
      _
    $region65: #{bert_class_forward.1} parent=1 // pred_fallthru
      _
    // Predicated region
    $region66: #{bert_class_forward.1} parent=1 // pred_check
      _
    $region67: #{bert_class_forward.1} parent=1 // pred_check_branch
      %90 = sbr.rel (0) target = $region69
    $region68: #{bert_class_forward.1} parent=1 // pred_region
      _
    $region69: #{bert_class_forward.1} parent=1 // pred_fallthru
      _
    // Predicated region
    $region70: #{bert_class_forward.1} parent=1 // pred_check
      _
    $region71: #{bert_class_forward.1} parent=1 // pred_check_branch
      %92 = sbr.rel (0) target = $region73
    $region72: #{bert_class_forward.1} parent=1 // pred_region
      _
    $region73: #{bert_class_forward.1} parent=1 // pred_fallthru
      _
    // Predicated region
    $region74: #{bert_class_forward.1} parent=1 // pred_check
      _
    $region75: #{bert_class_forward.1} parent=1 // pred_check_branch
      %94 = sbr.rel (0) target = $region77
    $region76: #{bert_class_forward.1} parent=1 // pred_region
      _
    $region77: #{bert_class_forward.1} parent=1 // pred_fallthru
      _
    // Predicated region
    $region78: #{bert_class_forward.1} parent=1 // pred_check
      _
    $region79: #{bert_class_forward.1} parent=1 // pred_check_branch
      %96 = sbr.rel (0) target = $region81
    $region80: #{bert_class_forward.1} parent=1 // pred_region
      _
    $region81: #{bert_class_forward.1} parent=1 // pred_fallthru
      _
    // Predicated region
    $region82: #{bert_class_forward.1} parent=1 // pred_check
      _
    $region83: #{bert_class_forward.1} parent=1 // pred_check_branch
      %98 = sbr.rel (0) target = $region85
    $region84: #{bert_class_forward.1} parent=1 // pred_region
      %99 = dma.done [#allocation3], 6144
    $region85: #{bert_class_forward.1} parent=1 // pred_fallthru
      _
    // Predicated region
    $region86: #{bert_class_forward.1} parent=1 // pred_check
      _
    $region87: #{bert_class_forward.1} parent=1 // pred_check_branch
      %101 = sbr.rel (0) target = $region89
    $region88: #{bert_class_forward.1} parent=1 // pred_region
      %102 = dma.done [#allocation5], 8192
    $region89: #{bert_class_forward.1} parent=1 // pred_fallthru
      _
    // Predicated region
    $region90: #{bert_class_forward.1} parent=1 // pred_check
      _
    $region91: #{bert_class_forward.1} parent=1 // pred_check_branch
      %104 = sbr.rel (0) target = $region93
    $region92: #{bert_class_forward.1} parent=1 // pred_region
      %105 = dma.done [#allocation5], 8192
    $region93: #{bert_class_forward.1} parent=1 // pred_fallthru
      _
    %v107 = vlaneseq
    %v108 = vand.u32 %v107, 127
    %vm109 = vcmp.ge.s32.totalorder %v108, 0
    %vm110 = vcmp.lt.s32.totalorder %v108, 64
    %vm111 = vmand %vm109, %vm110
    %v112 = vsel %vm111, 1, 0
    %v113 = vcvt.s32.f32 %v112
    %vm114 = vcmp.ge.s32.totalorder %v108, 64
    %vm115 = vcmp.lt.s32.totalorder %v108, 128
    %vm116 = vmand %vm114, %vm115
    %v117 = vsel %vm116, 1, 0
    %v118 = vcvt.s32.f32 %v117
    %v119 = vld [vmem:[%s1] sm:$0x3]
    %v120 = vsub.f32 1.0, %v119
    %v123 = vunpack.c.l.s4 1966171168
    %v124 = vunpack.c.0.s8 %v123
    %v125 = vlaneseq
    %v126 = vshrl.u32 %v125, 7
    %v127 = vsub.s32 %v124, %v126
    %v128 = vrot.slane %v120, %v127
    %v129 = vcombine.high %v128, %v128
    %v131 = vunpack.c.l.s4 1966171168
    %v132 = vunpack.c.0.s8 %v131
    %v133 = vlaneseq
    %v134 = vshrl.u32 %v133, 7
    %v135 = vsub.s32 %v132, %v134
    %v136 = vrot.slane %v128, %v135
    %v138 = vunpack.c.l.s4 1966171168
    %v139 = vunpack.c.0.s8 %v138
    %v140 = vlaneseq
    %v141 = vshrl.u32 %v140, 7
    %v142 = vsub.s32 %v139, %v141
    %v143 = vrot.slane %v129, %v142
    %v146 = vmul.f32 %v136, -10000.0
    %v147 = vmul.f32 %v143, -10000.0
    %v148 = vld [vmem:[%s0] sm:$0xff]
    %v149 = vld [vmem:[%s0 + $0x8] sm:$0xff]
    %v150 = vld [vmem:[%s2] sm:$0x1]
    %v151 = vld [vmem:[%s3] sm:$0x1]
    %152 = vadd.xlane.f32.xlu0 %v148
    %v153 = vpop.xlane.xlu0 %152
    %154 = vadd.xlane.f32.xlu0 %v149
    %v155 = vpop.xlane.xlu0 %154
    %v156 = vrcp.pop 128.0
    %v157 = vmul.f32 %v153, %v156
    %v158 = vmul.f32 %v155, %v156
    %v159 = vsub.f32 %v148, %v157
    %v160 = vsub.f32 %v149, %v158
    %v161 = vmul.f32 %v159, %v159
    %v162 = vmul.f32 %v160, %v160
    %163 = vadd.xlane.f32.xlu0 %v161
    %v164 = vpop.xlane.xlu0 %163
    %165 = vadd.xlane.f32.xlu0 %v162
    %v166 = vpop.xlane.xlu0 %165
    %v167 = vmul.f32 %v164, %v156
    %v168 = vmul.f32 %v166, %v156
    %v169 = vadd.f32 %v167, 1e-12
    %v170 = vadd.f32 %v168, 1e-12
    %v171 = vrsqrt.pop %v169
    %v172 = vrsqrt.pop %v170
    %v173 = vmul.f32 %v159, %v171
    %v174 = vmul.f32 %v160, %v172
    %v176 = vlaneseq
    %v177 = vshrl.u32 %v176, 7
    %v178 = vsub.s32 0, %v177
    %v179 = vrot.slane %v150, %v178
    %v181 = vmul.f32 %v173, %v179
    %v182 = vmul.f32 %v174, %v179
    %v184 = vlaneseq
    %v185 = vshrl.u32 %v184, 7
    %v186 = vsub.s32 0, %v185
    %v187 = vrot.slane %v151, %v186
    %v189 = vadd.f32 %v181, %v187
    %v190 = vadd.f32 %v182, %v187
    %v191 = vld [vmem:[#allocation2] sm:$0xff]
    %v192 = vld [vmem:[#allocation2 + $0x8] sm:$0xf]
    %v193 = vld [vmem:[#allocation2 + $0xc] sm:$0xff]
    %v194 = vld [vmem:[#allocation2 + $0x14] sm:$0xf]
    %v195 = vld [vmem:[#allocation2 + $0x18] sm:$0xff]
    %v196 = vld [vmem:[#allocation2 + $0x20] sm:$0xf]
    %v197 = vld [vmem:[#allocation2 + $0x24] sm:$0xff]
    %v198 = vld [vmem:[#allocation2 + $0x2c] sm:$0xf]
    %v199 = vld [vmem:[#allocation2 + $0x30] sm:$0xff]
    %v200 = vld [vmem:[#allocation2 + $0x38] sm:$0xf]
    %v201 = vld [vmem:[#allocation2 + $0x3c] sm:$0xff]
    %v202 = vld [vmem:[#allocation2 + $0x44] sm:$0xf]
    %v203 = vld [vmem:[#allocation2 + $0x48] sm:$0xff]
    %v204 = vld [vmem:[#allocation2 + $0x50] sm:$0xf]
    %v205 = vld [vmem:[#allocation2 + $0x54] sm:$0xff]
    %v206 = vld [vmem:[#allocation2 + $0x5c] sm:$0xf]
    %v207 = vld [vmem:[#allocation2 + $0x60] sm:$0xff]
    %v208 = vld [vmem:[#allocation2 + $0x68] sm:$0xf]
    %v209 = vld [vmem:[#allocation2 + $0x6c] sm:$0xff]
    %v210 = vld [vmem:[#allocation2 + $0x74] sm:$0xf]
    %v211 = vld [vmem:[#allocation2 + $0x78] sm:$0xff]
    %v212 = vld [vmem:[#allocation2 + $0x80] sm:$0xf]
    %v213 = vld [vmem:[#allocation2 + $0x84] sm:$0xff]
    %v214 = vld [vmem:[#allocation2 + $0x8c] sm:$0xf]
    %v215 = vld [vmem:[#allocation2 + $0x90] sm:$0xff]
    %v216 = vld [vmem:[#allocation2 + $0x98] sm:$0xf]
    %v217 = vld [vmem:[#allocation2 + $0x9c] sm:$0xff]
    %v218 = vld [vmem:[#allocation2 + $0xa4] sm:$0xf]
    %v219 = vld [vmem:[#allocation2 + $0xa8] sm:$0xff]
    %v220 = vld [vmem:[#allocation2 + $0xb0] sm:$0xf]
    %v221 = vld [vmem:[#allocation2 + $0xb4] sm:$0xff]
    %v222 = vld [vmem:[#allocation2 + $0xbc] sm:$0xf]
    %v223 = vld [vmem:[%s5] sm:$0x7]
    %v224 = vpack.c.bf16 %v190, %v189
    %v226 = vlaneseq
    %v227 = vshrl.u32 %v226, 7
    %v228 = vsub.s32 0, %v227
    %v229 = vrot.slane %v223, %v228
    %v230 = vlaneseq
    %v231 = vshrl.u32 %v230, 7
    %v232 = vsub.s32 1, %v231
    %v233 = vrot.slane %v223, %v232
    %v234 = vlaneseq
    %v235 = vshrl.u32 %v234, 7
    %v236 = vsub.s32 2, %v235
    %v237 = vrot.slane %v223, %v236
    %v273 = vunpack.c.l.b16 %v191
    %v274 = vunpack.c.h.b16 %v191
    %v275 = vunpack.c.l.b16 %v192
    %v276 = vunpack.c.l.b16 %v193
    %v277 = vunpack.c.h.b16 %v193
    %v278 = vunpack.c.l.b16 %v194
    %v279 = vunpack.c.l.b16 %v195
    %v280 = vunpack.c.h.b16 %v195
    %v281 = vunpack.c.l.b16 %v196
    %v282 = vunpack.c.l.b16 %v197
    %v283 = vunpack.c.h.b16 %v197
    %v284 = vunpack.c.l.b16 %v198
    %v285 = vunpack.c.l.b16 %v199
    %v286 = vunpack.c.h.b16 %v199
    %v287 = vunpack.c.l.b16 %v200
    %v288 = vunpack.c.l.b16 %v201
    %v289 = vunpack.c.h.b16 %v201
    %v290 = vunpack.c.l.b16 %v202
    %v291 = vunpack.c.l.b16 %v203
    %v292 = vunpack.c.h.b16 %v203
    %v293 = vunpack.c.l.b16 %v204
    %v294 = vunpack.c.l.b16 %v205
    %v295 = vunpack.c.h.b16 %v205
    %v296 = vunpack.c.l.b16 %v206
    %v297 = vunpack.c.l.b16 %v207
    %v298 = vunpack.c.h.b16 %v207
    %v299 = vunpack.c.l.b16 %v208
    %v300 = vunpack.c.l.b16 %v209
    %v301 = vunpack.c.h.b16 %v209
    %v302 = vunpack.c.l.b16 %v210
    %v303 = vunpack.c.l.b16 %v211
    %v304 = vunpack.c.h.b16 %v211
    %v305 = vunpack.c.l.b16 %v212
    %v306 = vunpack.c.l.b16 %v213
    %v307 = vunpack.c.h.b16 %v213
    %v308 = vunpack.c.l.b16 %v214
    %v309 = vunpack.c.l.b16 %v215
    %v310 = vunpack.c.h.b16 %v215
    %v311 = vunpack.c.l.b16 %v216
    %v312 = vunpack.c.l.b16 %v217
    %v313 = vunpack.c.h.b16 %v217
    %v314 = vunpack.c.l.b16 %v218
    %v315 = vunpack.c.l.b16 %v219
    %v316 = vunpack.c.h.b16 %v219
    %v317 = vunpack.c.l.b16 %v220
    %v318 = vunpack.c.l.b16 %v221
    %v319 = vunpack.c.h.b16 %v221
    %v320 = vunpack.c.l.b16 %v222
    %v321 = vpack.c.b16 %v276, %v273
    %v322 = vpack.c.b16 %v277, %v274
    %v323 = vpack.c.b16 %v278, %v275
    %v324 = vpack.c.b16 %v282, %v279
    %v325 = vpack.c.b16 %v283, %v280
    %v326 = vpack.c.b16 %v284, %v281
    %v327 = vpack.c.b16 %v288, %v285
    %v328 = vpack.c.b16 %v289, %v286
    %v329 = vpack.c.b16 %v290, %v287
    %v330 = vpack.c.b16 %v294, %v291
    %v331 = vpack.c.b16 %v295, %v292
    %v332 = vpack.c.b16 %v296, %v293
    %v333 = vpack.c.b16 %v300, %v297
    %v334 = vpack.c.b16 %v301, %v298
    %v335 = vpack.c.b16 %v302, %v299
    %v336 = vpack.c.b16 %v306, %v303
    %v337 = vpack.c.b16 %v307, %v304
    %v338 = vpack.c.b16 %v308, %v305
    %v339 = vpack.c.b16 %v312, %v309
    %v340 = vpack.c.b16 %v313, %v310
    %v341 = vpack.c.b16 %v314, %v311
    %v342 = vpack.c.b16 %v318, %v315
    %v343 = vpack.c.b16 %v319, %v316
    %v344 = vpack.c.b16 %v320, %v317
    %369 = vmatprep.subr.bf16.mxu0 %v322
    %370 = vmatpush1.bf16.msra.mxu0 %v321
    %371 = vmatprep.subr.bf16.mxu0 %v325
    %372 = vmatpush1.bf16.msra.mxu0 %v324
    %373 = vmatprep.subr.bf16.mxu0 %v328
    %374 = vmatpush1.bf16.msra.mxu0 %v327
    %375 = vmatprep.subr.bf16.mxu0 %v331
    %376 = vmatpush1.bf16.msra.mxu0 %v330
    %377 = vmatprep.subr.bf16.mxu0 %v334
    %378 = vmatpush1.bf16.msra.mxu0 %v333
    %379 = vmatprep.subr.bf16.mxu0 %v337
    %380 = vmatpush1.bf16.msra.mxu0 %v336
    %381 = vmatprep.subr.bf16.mxu0 %v340
    %382 = vmatpush1.bf16.msra.mxu0 %v339
    %383 = vmatprep.subr.bf16.mxu0 %v343
    %384 = vmatpush1.bf16.msra.mxu0 %v342
    %385 = vmatprep.subr.bf16.mxu0 0
    %386 = vmatpush1.bf16.msra.mxu0 0
    %387 = vmatprep.subr.bf16.mxu0 0
    %388 = vmatpush1.bf16.msra.mxu0 0
    %389 = vmatprep.subr.bf16.mxu0 0
    %390 = vmatpush1.bf16.msra.mxu0 0
    %391 = vmatprep.subr.bf16.mxu0 0
    %392 = vmatpush1.bf16.msra.mxu0 0
    %393 = vmatprep.subr.bf16.mxu0 0
    %394 = vmatpush1.bf16.msra.mxu0 0
    %395 = vmatprep.subr.bf16.mxu0 0
    %396 = vmatpush1.bf16.msra.mxu0 0
    %397 = vmatprep.subr.bf16.mxu0 0
    %398 = vmatpush1.bf16.msra.mxu0 0
    %399 = vmatprep.subr.bf16.mxu0 0
    %400 = vmatpush1.bf16.msra.mxu0 0
    %401 = vmatprep.mubr.bf16.mxu0 0
    %402 = vmatmul.mubr.bf16.gmra.mrb[0].mxu0 %v224
    %v403 = vpop.f32.mrb[0].mxu0
    %v404 = vadd.f32 %v229, %v403
    %v405 = vpop.f32.mrb[0].mxu0
    %v406 = vadd.f32 %v233, %v405
    %v407 = vpop.f32.mrb[0].mxu0
    %v408 = vadd.f32 %v229, %v407
    %v409 = vpop.f32.mrb[0].mxu0
    %v410 = vadd.f32 %v233, %v409
    %411 = vdwg.mxu0
    %412 = vmatprep.subr.bf16.mxu0 0
    %413 = vmatpush1.bf16.msra.mxu0 %v323
    %414 = vmatprep.subr.bf16.mxu0 0
    %415 = vmatpush1.bf16.msra.mxu0 %v326
    %416 = vmatprep.subr.bf16.mxu0 0
    %417 = vmatpush1.bf16.msra.mxu0 %v329
    %418 = vmatprep.subr.bf16.mxu0 0
    %419 = vmatpush1.bf16.msra.mxu0 %v332
    %420 = vmatprep.subr.bf16.mxu0 0
    %421 = vmatpush1.bf16.msra.mxu0 %v335
    %422 = vmatprep.subr.bf16.mxu0 0
    %423 = vmatpush1.bf16.msra.mxu0 %v338
    %424 = vmatprep.subr.bf16.mxu0 0
    %425 = vmatpush1.bf16.msra.mxu0 %v341
    %426 = vmatprep.subr.bf16.mxu0 0
    %427 = vmatpush1.bf16.msra.mxu0 %v344
    %428 = vmatprep.subr.bf16.mxu0 0
    %429 = vmatpush1.bf16.msra.mxu0 0
    %430 = vmatprep.subr.bf16.mxu0 0
    %431 = vmatpush1.bf16.msra.mxu0 0
    %432 = vmatprep.subr.bf16.mxu0 0
    %433 = vmatpush1.bf16.msra.mxu0 0
    %434 = vmatprep.subr.bf16.mxu0 0
    %435 = vmatpush1.bf16.msra.mxu0 0
    %436 = vmatprep.subr.bf16.mxu0 0
    %437 = vmatpush1.bf16.msra.mxu0 0
    %438 = vmatprep.subr.bf16.mxu0 0
    %439 = vmatpush1.bf16.msra.mxu0 0
    %440 = vmatprep.subr.bf16.mxu0 0
    %441 = vmatpush1.bf16.msra.mxu0 0
    %442 = vmatprep.subr.bf16.mxu0 0
    %443 = vmatpush1.bf16.msra.mxu0 0
    %444 = vmatprep.mubr.bf16.mxu0 0
    %445 = vmatmul.mubr.bf16.gmra.mrb[0].mxu0 %v224
    %v446 = vpop.f32.mrb[0].mxu0
    %v447 = vadd.f32 %v237, %v446
    %v448 = vpop.f32.mrb[0].mxu0
    %v449 = vpop.f32.mrb[0].mxu0
    %v450 = vadd.f32 %v237, %v449
    %v451 = vpop.f32.mrb[0].mxu0
    %452 = vdwg.mxu0
    %v453 = vmul.f32 %v406, %v113
    %v454 = vmul.f32 %v410, %v113
    %455 = vmatprep.subr.mxu0 0.0
    %456 = vmatpush1.xpose.msra.mxu0 %v453
    %457 = vmatprep.subr.mxu0 0.0
    %458 = vmatpush1.xpose.msra.mxu0 0.0
    %459 = vmatprep.subr.mxu0 0.0
    %460 = vmatpush1.xpose.msra.mxu0 0.0
    %461 = vmatprep.subr.mxu0 0.0
    %462 = vmatpush1.xpose.msra.mxu0 0.0
    %463 = vmatprep.subr.mxu0 0.0
    %464 = vmatpush1.xpose.msra.mxu0 0.0
    %465 = vmatprep.subr.mxu0 0.0
    %466 = vmatpush1.xpose.msra.mxu0 0.0
    %467 = vmatprep.subr.mxu0 0.0
    %468 = vmatpush1.xpose.msra.mxu0 0.0
    %469 = vmatprep.subr.mxu0 0.0
    %470 = vmatpush1.xpose.msra.mxu0 0.0
    %471 = vmatprep.subr.mxu0 0.0
    %472 = vmatpush1.xpose.msra.mxu0 0.0
    %473 = vmatprep.subr.mxu0 0.0
    %474 = vmatpush1.xpose.msra.mxu0 0.0
    %475 = vmatprep.subr.mxu0 0.0
    %476 = vmatpush1.xpose.msra.mxu0 0.0
    %477 = vmatprep.subr.mxu0 0.0
    %478 = vmatpush1.xpose.msra.mxu0 0.0
    %479 = vmatprep.subr.mxu0 0.0
    %480 = vmatpush1.xpose.msra.mxu0 0.0
    %481 = vmatprep.subr.mxu0 0.0
    %482 = vmatpush1.xpose.msra.mxu0 0.0
    %483 = vmatprep.subr.mxu0 0.0
    %484 = vmatpush1.xpose.msra.mxu0 0.0
    %485 = vmatprep.subr.mxu0 0.0
    %486 = vmatpush1.xpose.msra.mxu0 0.0
    %487 = vmatprep.subr.mxu0 0.0
    %488 = vmatpush1.xpose.msra.mxu0 0.0
    %489 = vmatprep.subr.mxu0 0.0
    %490 = vmatpush1.xpose.msra.mxu0 0.0
    %491 = vmatprep.subr.mxu0 0.0
    %492 = vmatpush1.xpose.msra.mxu0 0.0
    %493 = vmatprep.subr.mxu0 0.0
    %494 = vmatpush1.xpose.msra.mxu0 0.0
    %495 = vmatprep.subr.mxu0 0.0
    %496 = vmatpush1.xpose.msra.mxu0 0.0
    %497 = vmatprep.subr.mxu0 0.0
    %498 = vmatpush1.xpose.msra.mxu0 0.0
    %499 = vmatprep.subr.mxu0 0.0
    %500 = vmatpush1.xpose.msra.mxu0 0.0
    %501 = vmatprep.subr.mxu0 0.0
    %502 = vmatpush1.xpose.msra.mxu0 0.0
    %503 = vmatprep.subr.mxu0 0.0
    %504 = vmatpush1.xpose.msra.mxu0 0.0
    %505 = vmatprep.subr.mxu0 0.0
    %506 = vmatpush1.xpose.msra.mxu0 0.0
    %507 = vmatprep.subr.mxu0 0.0
    %508 = vmatpush1.xpose.msra.mxu0 0.0
    %509 = vmatprep.subr.mxu0 0.0
    %510 = vmatpush1.xpose.msra.mxu0 0.0
    %511 = vmatprep.subr.mxu0 0.0
    %512 = vmatpush1.xpose.msra.mxu0 0.0
    %513 = vmatprep.subr.mxu0 0.0
    %514 = vmatpush1.xpose.msra.mxu0 0.0
    %515 = vmatprep.subr.mxu0 0.0
    %516 = vmatpush1.xpose.msra.mxu0 0.0
    %517 = vmatprep.subr.mxu0 0.0
    %518 = vmatpush1.xpose.msra.mxu0 0.0
    %519 = vmatprep.mubr.f32.mxu0 0.0
    %520 = vmatmul.mubr.f32.gmra.mrb[0].mxu0 %v404
    %v521 = vpop.f32.mrb[0].mxu0
    %v522 = vadd.f32 0.0, %v521
    %v523 = vpop.f32.mrb[0].mxu0
    %524 = vdwg.mxu0
    %525 = vmatprep.subr.mxu0 0.0
    %526 = vmatpush1.xpose.msra.mxu0 %v454
    %527 = vmatprep.subr.mxu0 0.0
    %528 = vmatpush1.xpose.msra.mxu0 0.0
    %529 = vmatprep.subr.mxu0 0.0
    %530 = vmatpush1.xpose.msra.mxu0 0.0
    %531 = vmatprep.subr.mxu0 0.0
    %532 = vmatpush1.xpose.msra.mxu0 0.0
    %533 = vmatprep.subr.mxu0 0.0
    %534 = vmatpush1.xpose.msra.mxu0 0.0
    %535 = vmatprep.subr.mxu0 0.0
    %536 = vmatpush1.xpose.msra.mxu0 0.0
    %537 = vmatprep.subr.mxu0 0.0
    %538 = vmatpush1.xpose.msra.mxu0 0.0
    %539 = vmatprep.subr.mxu0 0.0
    %540 = vmatpush1.xpose.msra.mxu0 0.0
    %541 = vmatprep.subr.mxu0 0.0
    %542 = vmatpush1.xpose.msra.mxu0 0.0
    %543 = vmatprep.subr.mxu0 0.0
    %544 = vmatpush1.xpose.msra.mxu0 0.0
    %545 = vmatprep.subr.mxu0 0.0
    %546 = vmatpush1.xpose.msra.mxu0 0.0
    %547 = vmatprep.subr.mxu0 0.0
    %548 = vmatpush1.xpose.msra.mxu0 0.0
    %549 = vmatprep.subr.mxu0 0.0
    %550 = vmatpush1.xpose.msra.mxu0 0.0
    %551 = vmatprep.subr.mxu0 0.0
    %552 = vmatpush1.xpose.msra.mxu0 0.0
    %553 = vmatprep.subr.mxu0 0.0
    %554 = vmatpush1.xpose.msra.mxu0 0.0
    %555 = vmatprep.subr.mxu0 0.0
    %556 = vmatpush1.xpose.msra.mxu0 0.0
    %557 = vmatprep.subr.mxu0 0.0
    %558 = vmatpush1.xpose.msra.mxu0 0.0
    %559 = vmatprep.subr.mxu0 0.0
    %560 = vmatpush1.xpose.msra.mxu0 0.0
    %561 = vmatprep.subr.mxu0 0.0
    %562 = vmatpush1.xpose.msra.mxu0 0.0
    %563 = vmatprep.subr.mxu0 0.0
    %564 = vmatpush1.xpose.msra.mxu0 0.0
    %565 = vmatprep.subr.mxu0 0.0
    %566 = vmatpush1.xpose.msra.mxu0 0.0
    %567 = vmatprep.subr.mxu0 0.0
    %568 = vmatpush1.xpose.msra.mxu0 0.0
    %569 = vmatprep.subr.mxu0 0.0
    %570 = vmatpush1.xpose.msra.mxu0 0.0
    %571 = vmatprep.subr.mxu0 0.0
    %572 = vmatpush1.xpose.msra.mxu0 0.0
    %573 = vmatprep.subr.mxu0 0.0
    %574 = vmatpush1.xpose.msra.mxu0 0.0
    %575 = vmatprep.subr.mxu0 0.0
    %576 = vmatpush1.xpose.msra.mxu0 0.0
    %577 = vmatprep.subr.mxu0 0.0
    %578 = vmatpush1.xpose.msra.mxu0 0.0
    %579 = vmatprep.subr.mxu0 0.0
    %580 = vmatpush1.xpose.msra.mxu0 0.0
    %581 = vmatprep.subr.mxu0 0.0
    %582 = vmatpush1.xpose.msra.mxu0 0.0
    %583 = vmatprep.subr.mxu0 0.0
    %584 = vmatpush1.xpose.msra.mxu0 0.0
    %585 = vmatprep.subr.mxu0 0.0
    %586 = vmatpush1.xpose.msra.mxu0 0.0
    %587 = vmatprep.subr.mxu0 0.0
    %588 = vmatpush1.xpose.msra.mxu0 0.0
    %589 = vmatprep.mubr.f32.mxu0 0.0
    %590 = vmatmul.mubr.f32.gmra.mrb[0].mxu0 %v408
    %v591 = vpop.f32.mrb[0].mxu0
    %v592 = vadd.f32 0.0, %v591
    %v593 = vpop.f32.mrb[0].mxu0
    %594 = vdwg.mxu0
    %v595 = vmul.f32 %v522, 0.125
    %v596 = vmul.f32 %v592, 0.125
    %v599 = vlaneseq
    %v600 = vshrl.u32 %v599, 7
    %v601 = vsub.s32 0, %v600
    %v602 = vrot.slane %v146, %v601
    %v603 = vlaneseq
    %v604 = vshrl.u32 %v603, 7
    %v605 = vsub.s32 0, %v604
    %v606 = vrot.slane %v147, %v605
    %v609 = vadd.f32 %v595, %v602
    %v610 = vadd.f32 %v596, %v606
    %vm611 = vcmask 64512
    %v612 = vsel %vm611, %v609, -inf
    %613 = vmax.xlane.f32.xlu0 %v612
    %v614 = vpop.xlane.xlu0 %613
    %v615 = vsel %vm611, %v610, -inf
    %616 = vmax.xlane.f32.xlu0 %v615
    %v617 = vpop.xlane.xlu0 %616
    %v618 = vsub.f32 %v609, %v614
    %v619 = vsub.f32 %v610, %v617
    %v620 = vmul.f32 %v618, 1.442695
    %v621 = vpow.pop %v620
    %v622 = vmul.f32 %v619, 1.442695
    %v623 = vpow.pop %v622
    %v624 = vsel %vm611, %v621, 0.0
    %625 = vadd.xlane.f32.xlu0 %v624
    %v626 = vpop.xlane.xlu0 %625
    %v627 = vsel %vm611, %v623, 0.0
    %628 = vadd.xlane.f32.xlu0 %v627
    %v629 = vpop.xlane.xlu0 %628
    %v630 = vrcp.pop %v626
    %v631 = vrcp.pop %v629
    %v632 = vmul.f32 %v621, %v630
    %v633 = vmul.f32 %v623, %v631
    %v634 = vmul.f32 %v447, %v113
    %v635 = vmul.f32 %v450, %v113
    %v636 = vmul.f32 %v406, %v118
    %v637 = vmul.f32 %v410, %v118
    %638 = vmatprep.subr.mxu0 0.0
    %639 = vmatpush1.xpose.msra.mxu0 %v636
    %640 = vmatprep.subr.mxu0 0.0
    %641 = vmatpush1.xpose.msra.mxu0 0.0
    %642 = vmatprep.subr.mxu0 0.0
    %643 = vmatpush1.xpose.msra.mxu0 0.0
    %644 = vmatprep.subr.mxu0 0.0
    %645 = vmatpush1.xpose.msra.mxu0 0.0
    %646 = vmatprep.subr.mxu0 0.0
    %647 = vmatpush1.xpose.msra.mxu0 0.0
    %648 = vmatprep.subr.mxu0 0.0
    %649 = vmatpush1.xpose.msra.mxu0 0.0
    %650 = vmatprep.subr.mxu0 0.0
    %651 = vmatpush1.xpose.msra.mxu0 0.0
    %652 = vmatprep.subr.mxu0 0.0
    %653 = vmatpush1.xpose.msra.mxu0 0.0
    %654 = vmatprep.subr.mxu0 0.0
    %655 = vmatpush1.xpose.msra.mxu0 0.0
    %656 = vmatprep.subr.mxu0 0.0
    %657 = vmatpush1.xpose.msra.mxu0 0.0
    %658 = vmatprep.subr.mxu0 0.0
    %659 = vmatpush1.xpose.msra.mxu0 0.0
    %660 = vmatprep.subr.mxu0 0.0
    %661 = vmatpush1.xpose.msra.mxu0 0.0
    %662 = vmatprep.subr.mxu0 0.0
    %663 = vmatpush1.xpose.msra.mxu0 0.0
    %664 = vmatprep.subr.mxu0 0.0
    %665 = vmatpush1.xpose.msra.mxu0 0.0
    %666 = vmatprep.subr.mxu0 0.0
    %667 = vmatpush1.xpose.msra.mxu0 0.0
    %668 = vmatprep.subr.mxu0 0.0
    %669 = vmatpush1.xpose.msra.mxu0 0.0
    %670 = vmatprep.subr.mxu0 0.0
    %671 = vmatpush1.xpose.msra.mxu0 0.0
    %672 = vmatprep.subr.mxu0 0.0
    %673 = vmatpush1.xpose.msra.mxu0 0.0
    %674 = vmatprep.subr.mxu0 0.0
    %675 = vmatpush1.xpose.msra.mxu0 0.0
    %676 = vmatprep.subr.mxu0 0.0
    %677 = vmatpush1.xpose.msra.mxu0 0.0
    %678 = vmatprep.subr.mxu0 0.0
    %679 = vmatpush1.xpose.msra.mxu0 0.0
    %680 = vmatprep.subr.mxu0 0.0
    %681 = vmatpush1.xpose.msra.mxu0 0.0
    %682 = vmatprep.subr.mxu0 0.0
    %683 = vmatpush1.xpose.msra.mxu0 0.0
    %684 = vmatprep.subr.mxu0 0.0
    %685 = vmatpush1.xpose.msra.mxu0 0.0
    %686 = vmatprep.subr.mxu0 0.0
    %687 = vmatpush1.xpose.msra.mxu0 0.0
    %688 = vmatprep.subr.mxu0 0.0
    %689 = vmatpush1.xpose.msra.mxu0 0.0
    %690 = vmatprep.subr.mxu0 0.0
    %691 = vmatpush1.xpose.msra.mxu0 0.0
    %692 = vmatprep.subr.mxu0 0.0
    %693 = vmatpush1.xpose.msra.mxu0 0.0
    %694 = vmatprep.subr.mxu0 0.0
    %695 = vmatpush1.xpose.msra.mxu0 0.0
    %696 = vmatprep.subr.mxu0 0.0
    %697 = vmatpush1.xpose.msra.mxu0 0.0
    %698 = vmatprep.subr.mxu0 0.0
    %699 = vmatpush1.xpose.msra.mxu0 0.0
    %700 = vmatprep.subr.mxu0 0.0
    %701 = vmatpush1.xpose.msra.mxu0 0.0
    %702 = vmatprep.mubr.f32.mxu0 0.0
    %703 = vmatmul.mubr.f32.gmra.mrb[0].mxu0 %v404
    %v704 = vpop.f32.mrb[0].mxu0
    %v705 = vadd.f32 0.0, %v704
    %v706 = vpop.f32.mrb[0].mxu0
    %707 = vdwg.mxu0
    %708 = vmatprep.subr.mxu0 0.0
    %709 = vmatpush1.xpose.msra.mxu0 %v637
    %710 = vmatprep.subr.mxu0 0.0
    %711 = vmatpush1.xpose.msra.mxu0 0.0
    %712 = vmatprep.subr.mxu0 0.0
    %713 = vmatpush1.xpose.msra.mxu0 0.0
    %714 = vmatprep.subr.mxu0 0.0
    %715 = vmatpush1.xpose.msra.mxu0 0.0
    %716 = vmatprep.subr.mxu0 0.0
    %717 = vmatpush1.xpose.msra.mxu0 0.0
    %718 = vmatprep.subr.mxu0 0.0
    %719 = vmatpush1.xpose.msra.mxu0 0.0
    %720 = vmatprep.subr.mxu0 0.0
    %721 = vmatpush1.xpose.msra.mxu0 0.0
    %722 = vmatprep.subr.mxu0 0.0
    %723 = vmatpush1.xpose.msra.mxu0 0.0
    %724 = vmatprep.subr.mxu0 0.0
    %725 = vmatpush1.xpose.msra.mxu0 0.0
    %726 = vmatprep.subr.mxu0 0.0
    %727 = vmatpush1.xpose.msra.mxu0 0.0
    %728 = vmatprep.subr.mxu0 0.0
    %729 = vmatpush1.xpose.msra.mxu0 0.0
    %730 = vmatprep.subr.mxu0 0.0
    %731 = vmatpush1.xpose.msra.mxu0 0.0
    %732 = vmatprep.subr.mxu0 0.0
    %733 = vmatpush1.xpose.msra.mxu0 0.0
    %734 = vmatprep.subr.mxu0 0.0
    %735 = vmatpush1.xpose.msra.mxu0 0.0
    %736 = vmatprep.subr.mxu0 0.0
    %737 = vmatpush1.xpose.msra.mxu0 0.0
    %738 = vmatprep.subr.mxu0 0.0
    %739 = vmatpush1.xpose.msra.mxu0 0.0
    %740 = vmatprep.subr.mxu0 0.0
    %741 = vmatpush1.xpose.msra.mxu0 0.0
    %742 = vmatprep.subr.mxu0 0.0
    %743 = vmatpush1.xpose.msra.mxu0 0.0
    %744 = vmatprep.subr.mxu0 0.0
    %745 = vmatpush1.xpose.msra.mxu0 0.0
    %746 = vmatprep.subr.mxu0 0.0
    %747 = vmatpush1.xpose.msra.mxu0 0.0
    %748 = vmatprep.subr.mxu0 0.0
    %749 = vmatpush1.xpose.msra.mxu0 0.0
    %750 = vmatprep.subr.mxu0 0.0
    %751 = vmatpush1.xpose.msra.mxu0 0.0
    %752 = vmatprep.subr.mxu0 0.0
    %753 = vmatpush1.xpose.msra.mxu0 0.0
    %754 = vmatprep.subr.mxu0 0.0
    %755 = vmatpush1.xpose.msra.mxu0 0.0
    %756 = vmatprep.subr.mxu0 0.0
    %757 = vmatpush1.xpose.msra.mxu0 0.0
    %758 = vmatprep.subr.mxu0 0.0
    %759 = vmatpush1.xpose.msra.mxu0 0.0
    %760 = vmatprep.subr.mxu0 0.0
    %761 = vmatpush1.xpose.msra.mxu0 0.0
    %762 = vmatprep.subr.mxu0 0.0
    %763 = vmatpush1.xpose.msra.mxu0 0.0
    %764 = vmatprep.subr.mxu0 0.0
    %765 = vmatpush1.xpose.msra.mxu0 0.0
    %766 = vmatprep.subr.mxu0 0.0
    %767 = vmatpush1.xpose.msra.mxu0 0.0
    %768 = vmatprep.subr.mxu0 0.0
    %769 = vmatpush1.xpose.msra.mxu0 0.0
    %770 = vmatprep.subr.mxu0 0.0
    %771 = vmatpush1.xpose.msra.mxu0 0.0
    %772 = vmatprep.mubr.f32.mxu0 0.0
    %773 = vmatmul.mubr.f32.gmra.mrb[0].mxu0 %v408
    %v774 = vpop.f32.mrb[0].mxu0
    %v775 = vadd.f32 0.0, %v774
    %v776 = vpop.f32.mrb[0].mxu0
    %777 = vdwg.mxu0
    %v778 = vmul.f32 %v705, 0.125
    %v779 = vmul.f32 %v775, 0.125
    %v780 = vadd.f32 %v778, %v602
    %v781 = vadd.f32 %v779, %v606
    %v782 = vsel %vm611, %v780, -inf
    %783 = vmax.xlane.f32.xlu0 %v782
    %v784 = vpop.xlane.xlu0 %783
    %v785 = vsel %vm611, %v781, -inf
    %786 = vmax.xlane.f32.xlu0 %v785
    %v787 = vpop.xlane.xlu0 %786
    %v788 = vsub.f32 %v780, %v784
    %v789 = vsub.f32 %v781, %v787
    %v790 = vmul.f32 %v788, 1.442695
    %v791 = vpow.pop %v790
    %v792 = vmul.f32 %v789, 1.442695
    %v793 = vpow.pop %v792
    %v794 = vsel %vm611, %v791, 0.0
    %795 = vadd.xlane.f32.xlu0 %v794
    %v796 = vpop.xlane.xlu0 %795
    %v797 = vsel %vm611, %v793, 0.0
    %798 = vadd.xlane.f32.xlu0 %v797
    %v799 = vpop.xlane.xlu0 %798
    %v800 = vrcp.pop %v796
    %v801 = vrcp.pop %v799
    %v802 = vmul.f32 %v791, %v800
    %v803 = vmul.f32 %v793, %v801
    %v804 = vmul.f32 %v447, %v118
    %v805 = vmul.f32 %v450, %v118
    %v807 = vsel %vm611, %v802, 0
    %809 = vmatprep.subr.mxu0 0.0
    %810 = vmatpush1.msra.mxu0 %v804
    %811 = vmatprep.subr.mxu0 0.0
    %812 = vmatpush1.msra.mxu0 0.0
    %813 = vmatprep.subr.mxu0 0.0
    %814 = vmatpush1.msra.mxu0 0.0
    %815 = vmatprep.subr.mxu0 0.0
    %816 = vmatpush1.msra.mxu0 0.0
    %817 = vmatprep.subr.mxu0 0.0
    %818 = vmatpush1.msra.mxu0 0.0
    %819 = vmatprep.subr.mxu0 0.0
    %820 = vmatpush1.msra.mxu0 0.0
    %821 = vmatprep.subr.mxu0 0.0
    %822 = vmatpush1.msra.mxu0 0.0
    %823 = vmatprep.subr.mxu0 0.0
    %824 = vmatpush1.msra.mxu0 0.0
    %825 = vmatprep.subr.mxu0 0.0
    %826 = vmatpush1.msra.mxu0 0.0
    %827 = vmatprep.subr.mxu0 0.0
    %828 = vmatpush1.msra.mxu0 0.0
    %829 = vmatprep.subr.mxu0 0.0
    %830 = vmatpush1.msra.mxu0 0.0
    %831 = vmatprep.subr.mxu0 0.0
    %832 = vmatpush1.msra.mxu0 0.0
    %833 = vmatprep.subr.mxu0 0.0
    %834 = vmatpush1.msra.mxu0 0.0
    %835 = vmatprep.subr.mxu0 0.0
    %836 = vmatpush1.msra.mxu0 0.0
    %837 = vmatprep.subr.mxu0 0.0
    %838 = vmatpush1.msra.mxu0 0.0
    %839 = vmatprep.subr.mxu0 0.0
    %840 = vmatpush1.msra.mxu0 0.0
    %841 = vmatprep.subr.mxu0 0.0
    %842 = vmatpush1.msra.mxu0 0.0
    %843 = vmatprep.subr.mxu0 0.0
    %844 = vmatpush1.msra.mxu0 0.0
    %845 = vmatprep.subr.mxu0 0.0
    %846 = vmatpush1.msra.mxu0 0.0
    %847 = vmatprep.subr.mxu0 0.0
    %848 = vmatpush1.msra.mxu0 0.0
    %849 = vmatprep.subr.mxu0 0.0
    %850 = vmatpush1.msra.mxu0 0.0
    %851 = vmatprep.subr.mxu0 0.0
    %852 = vmatpush1.msra.mxu0 0.0
    %853 = vmatprep.subr.mxu0 0.0
    %854 = vmatpush1.msra.mxu0 0.0
    %855 = vmatprep.subr.mxu0 0.0
    %856 = vmatpush1.msra.mxu0 0.0
    %857 = vmatprep.subr.mxu0 0.0
    %858 = vmatpush1.msra.mxu0 0.0
    %859 = vmatprep.subr.mxu0 0.0
    %860 = vmatpush1.msra.mxu0 0.0
    %861 = vmatprep.subr.mxu0 0.0
    %862 = vmatpush1.msra.mxu0 0.0
    %863 = vmatprep.subr.mxu0 0.0
    %864 = vmatpush1.msra.mxu0 0.0
    %865 = vmatprep.subr.mxu0 0.0
    %866 = vmatpush1.msra.mxu0 0.0
    %867 = vmatprep.subr.mxu0 0.0
    %868 = vmatpush1.msra.mxu0 0.0
    %869 = vmatprep.subr.mxu0 0.0
    %870 = vmatpush1.msra.mxu0 0.0
    %871 = vmatprep.subr.mxu0 0.0
    %872 = vmatpush1.msra.mxu0 0.0
    %873 = vmatprep.mubr.f32.mxu0 0.0
    %874 = vmatmul.mubr.f32.gmra.mrb[0].mxu0 %v807
    %v875 = vpop.f32.mrb[0].mxu0
    %v876 = vadd.f32 0.0, %v875
    %v877 = vpop.f32.mrb[0].mxu0
    %878 = vdwg.mxu0
    %v880 = vsel %vm611, %v803, 0
    %882 = vmatprep.subr.mxu0 0.0
    %883 = vmatpush1.msra.mxu0 %v805
    %884 = vmatprep.subr.mxu0 0.0
    %885 = vmatpush1.msra.mxu0 0.0
    %886 = vmatprep.subr.mxu0 0.0
    %887 = vmatpush1.msra.mxu0 0.0
    %888 = vmatprep.subr.mxu0 0.0
    %889 = vmatpush1.msra.mxu0 0.0
    %890 = vmatprep.subr.mxu0 0.0
    %891 = vmatpush1.msra.mxu0 0.0
    %892 = vmatprep.subr.mxu0 0.0
    %893 = vmatpush1.msra.mxu0 0.0
    %894 = vmatprep.subr.mxu0 0.0
    %895 = vmatpush1.msra.mxu0 0.0
    %896 = vmatprep.subr.mxu0 0.0
    %897 = vmatpush1.msra.mxu0 0.0
    %898 = vmatprep.subr.mxu0 0.0
    %899 = vmatpush1.msra.mxu0 0.0
    %900 = vmatprep.subr.mxu0 0.0
    %901 = vmatpush1.msra.mxu0 0.0
    %902 = vmatprep.subr.mxu0 0.0
    %903 = vmatpush1.msra.mxu0 0.0
    %904 = vmatprep.subr.mxu0 0.0
    %905 = vmatpush1.msra.mxu0 0.0
    %906 = vmatprep.subr.mxu0 0.0
    %907 = vmatpush1.msra.mxu0 0.0
    %908 = vmatprep.subr.mxu0 0.0
    %909 = vmatpush1.msra.mxu0 0.0
    %910 = vmatprep.subr.mxu0 0.0
    %911 = vmatpush1.msra.mxu0 0.0
    %912 = vmatprep.subr.mxu0 0.0
    %913 = vmatpush1.msra.mxu0 0.0
    %914 = vmatprep.subr.mxu0 0.0
    %915 = vmatpush1.msra.mxu0 0.0
    %916 = vmatprep.subr.mxu0 0.0
    %917 = vmatpush1.msra.mxu0 0.0
    %918 = vmatprep.subr.mxu0 0.0
    %919 = vmatpush1.msra.mxu0 0.0
    %920 = vmatprep.subr.mxu0 0.0
    %921 = vmatpush1.msra.mxu0 0.0
    %922 = vmatprep.subr.mxu0 0.0
    %923 = vmatpush1.msra.mxu0 0.0
    %924 = vmatprep.subr.mxu0 0.0
    %925 = vmatpush1.msra.mxu0 0.0
    %926 = vmatprep.subr.mxu0 0.0
    %927 = vmatpush1.msra.mxu0 0.0
    %928 = vmatprep.subr.mxu0 0.0
    %929 = vmatpush1.msra.mxu0 0.0
    %930 = vmatprep.subr.mxu0 0.0
    %931 = vmatpush1.msra.mxu0 0.0
    %932 = vmatprep.subr.mxu0 0.0
    %933 = vmatpush1.msra.mxu0 0.0
    %934 = vmatprep.subr.mxu0 0.0
    %935 = vmatpush1.msra.mxu0 0.0
    %936 = vmatprep.subr.mxu0 0.0
    %937 = vmatpush1.msra.mxu0 0.0
    %938 = vmatprep.subr.mxu0 0.0
    %939 = vmatpush1.msra.mxu0 0.0
    %940 = vmatprep.subr.mxu0 0.0
    %941 = vmatpush1.msra.mxu0 0.0
    %942 = vmatprep.subr.mxu0 0.0
    %943 = vmatpush1.msra.mxu0 0.0
    %944 = vmatprep.subr.mxu0 0.0
    %945 = vmatpush1.msra.mxu0 0.0
    %946 = vmatprep.mubr.f32.mxu0 0.0
    %947 = vmatmul.mubr.f32.gmra.mrb[0].mxu0 %v880
    %v948 = vpop.f32.mrb[0].mxu0
    %v949 = vadd.f32 0.0, %v948
    %v950 = vpop.f32.mrb[0].mxu0
    %951 = vdwg.mxu0
    %v953 = vsel %vm611, %v632, 0
    %955 = vmatprep.subr.mxu0 0.0
    %956 = vmatpush1.msra.mxu0 %v634
    %957 = vmatprep.subr.mxu0 0.0
    %958 = vmatpush1.msra.mxu0 0.0
    %959 = vmatprep.subr.mxu0 0.0
    %960 = vmatpush1.msra.mxu0 0.0
    %961 = vmatprep.subr.mxu0 0.0
    %962 = vmatpush1.msra.mxu0 0.0
    %963 = vmatprep.subr.mxu0 0.0
    %964 = vmatpush1.msra.mxu0 0.0
    %965 = vmatprep.subr.mxu0 0.0
    %966 = vmatpush1.msra.mxu0 0.0
    %967 = vmatprep.subr.mxu0 0.0
    %968 = vmatpush1.msra.mxu0 0.0
    %969 = vmatprep.subr.mxu0 0.0
    %970 = vmatpush1.msra.mxu0 0.0
    %971 = vmatprep.subr.mxu0 0.0
    %972 = vmatpush1.msra.mxu0 0.0
    %973 = vmatprep.subr.mxu0 0.0
    %974 = vmatpush1.msra.mxu0 0.0
    %975 = vmatprep.subr.mxu0 0.0
    %976 = vmatpush1.msra.mxu0 0.0
    %977 = vmatprep.subr.mxu0 0.0
    %978 = vmatpush1.msra.mxu0 0.0
    %979 = vmatprep.subr.mxu0 0.0
    %980 = vmatpush1.msra.mxu0 0.0
    %981 = vmatprep.subr.mxu0 0.0
    %982 = vmatpush1.msra.mxu0 0.0
    %983 = vmatprep.subr.mxu0 0.0
    %984 = vmatpush1.msra.mxu0 0.0
    %985 = vmatprep.subr.mxu0 0.0
    %986 = vmatpush1.msra.mxu0 0.0
    %987 = vmatprep.subr.mxu0 0.0
    %988 = vmatpush1.msra.mxu0 0.0
    %989 = vmatprep.subr.mxu0 0.0
    %990 = vmatpush1.msra.mxu0 0.0
    %991 = vmatprep.subr.mxu0 0.0
    %992 = vmatpush1.msra.mxu0 0.0
    %993 = vmatprep.subr.mxu0 0.0
    %994 = vmatpush1.msra.mxu0 0.0
    %995 = vmatprep.subr.mxu0 0.0
    %996 = vmatpush1.msra.mxu0 0.0
    %997 = vmatprep.subr.mxu0 0.0
    %998 = vmatpush1.msra.mxu0 0.0
    %999 = vmatprep.subr.mxu0 0.0
    %1000 = vmatpush1.msra.mxu0 0.0
    %1001 = vmatprep.subr.mxu0 0.0
    %1002 = vmatpush1.msra.mxu0 0.0
    %1003 = vmatprep.subr.mxu0 0.0
    %1004 = vmatpush1.msra.mxu0 0.0
    %1005 = vmatprep.subr.mxu0 0.0
    %1006 = vmatpush1.msra.mxu0 0.0
    %1007 = vmatprep.subr.mxu0 0.0
    %1008 = vmatpush1.msra.mxu0 0.0
    %1009 = vmatprep.subr.mxu0 0.0
    %1010 = vmatpush1.msra.mxu0 0.0
    %1011 = vmatprep.subr.mxu0 0.0
    %1012 = vmatpush1.msra.mxu0 0.0
    %1013 = vmatprep.subr.mxu0 0.0
    %1014 = vmatpush1.msra.mxu0 0.0
    %1015 = vmatprep.subr.mxu0 0.0
    %1016 = vmatpush1.msra.mxu0 0.0
    %1017 = vmatprep.subr.mxu0 0.0
    %1018 = vmatpush1.msra.mxu0 0.0
    %1019 = vmatprep.mubr.f32.mxu0 0.0
    %1020 = vmatmul.mubr.f32.gmra.mrb[0].mxu0 %v953
    %v1021 = vpop.f32.mrb[0].mxu0
    %v1022 = vadd.f32 %v876, %v1021
    %v1023 = vpop.f32.mrb[0].mxu0
    %1024 = vdwg.mxu0
    %v1026 = vsel %vm611, %v633, 0
    %1028 = vmatprep.subr.mxu0 0.0
    %1029 = vmatpush1.msra.mxu0 %v635
    %1030 = vmatprep.subr.mxu0 0.0
    %1031 = vmatpush1.msra.mxu0 0.0
    %1032 = vmatprep.subr.mxu0 0.0
    %1033 = vmatpush1.msra.mxu0 0.0
    %1034 = vmatprep.subr.mxu0 0.0
    %1035 = vmatpush1.msra.mxu0 0.0
    %1036 = vmatprep.subr.mxu0 0.0
    %1037 = vmatpush1.msra.mxu0 0.0
    %1038 = vmatprep.subr.mxu0 0.0
    %1039 = vmatpush1.msra.mxu0 0.0
    %1040 = vmatprep.subr.mxu0 0.0
    %1041 = vmatpush1.msra.mxu0 0.0
    %1042 = vmatprep.subr.mxu0 0.0
    %1043 = vmatpush1.msra.mxu0 0.0
    %1044 = vmatprep.subr.mxu0 0.0
    %1045 = vmatpush1.msra.mxu0 0.0
    %1046 = vmatprep.subr.mxu0 0.0
    %1047 = vmatpush1.msra.mxu0 0.0
    %1048 = vmatprep.subr.mxu0 0.0
    %1049 = vmatpush1.msra.mxu0 0.0
    %1050 = vmatprep.subr.mxu0 0.0
    %1051 = vmatpush1.msra.mxu0 0.0
    %1052 = vmatprep.subr.mxu0 0.0
    %1053 = vmatpush1.msra.mxu0 0.0
    %1054 = vmatprep.subr.mxu0 0.0
    %1055 = vmatpush1.msra.mxu0 0.0
    %1056 = vmatprep.subr.mxu0 0.0
    %1057 = vmatpush1.msra.mxu0 0.0
    %1058 = vmatprep.subr.mxu0 0.0
    %1059 = vmatpush1.msra.mxu0 0.0
    %1060 = vmatprep.subr.mxu0 0.0
    %1061 = vmatpush1.msra.mxu0 0.0
    %1062 = vmatprep.subr.mxu0 0.0
    %1063 = vmatpush1.msra.mxu0 0.0
    %1064 = vmatprep.subr.mxu0 0.0
    %1065 = vmatpush1.msra.mxu0 0.0
    %1066 = vmatprep.subr.mxu0 0.0
    %1067 = vmatpush1.msra.mxu0 0.0
    %1068 = vmatprep.subr.mxu0 0.0
    %1069 = vmatpush1.msra.mxu0 0.0
    %1070 = vmatprep.subr.mxu0 0.0
    %1071 = vmatpush1.msra.mxu0 0.0
    %1072 = vmatprep.subr.mxu0 0.0
    %1073 = vmatpush1.msra.mxu0 0.0
    %1074 = vmatprep.subr.mxu0 0.0
    %1075 = vmatpush1.msra.mxu0 0.0
    %1076 = vmatprep.subr.mxu0 0.0
    %1077 = vmatpush1.msra.mxu0 0.0
    %1078 = vmatprep.subr.mxu0 0.0
    %1079 = vmatpush1.msra.mxu0 0.0
    %1080 = vmatprep.subr.mxu0 0.0
    %1081 = vmatpush1.msra.mxu0 0.0
    %1082 = vmatprep.subr.mxu0 0.0
    %1083 = vmatpush1.msra.mxu0 0.0
    %1084 = vmatprep.subr.mxu0 0.0
    %1085 = vmatpush1.msra.mxu0 0.0
    %1086 = vmatprep.subr.mxu0 0.0
    %1087 = vmatpush1.msra.mxu0 0.0
    %1088 = vmatprep.subr.mxu0 0.0
    %1089 = vmatpush1.msra.mxu0 0.0
    %1090 = vmatprep.subr.mxu0 0.0
    %1091 = vmatpush1.msra.mxu0 0.0
    %1092 = vmatprep.mubr.f32.mxu0 0.0
    %1093 = vmatmul.mubr.f32.gmra.mrb[0].mxu0 %v1026
    %v1094 = vpop.f32.mrb[0].mxu0
    %v1095 = vadd.f32 %v949, %v1094
    %v1096 = vpop.f32.mrb[0].mxu0
    %1097 = vdwg.mxu0
    %v1098 = vld [vmem:[%s6] sm:$0xf]
    %v1099 = vld [vmem:[%s6 + $0x4] sm:$0xf]
    %v1100 = vld [vmem:[%s6 + $0x8] sm:$0xf]
    %v1101 = vld [vmem:[%s6 + $0xc] sm:$0xf]
    %v1102 = vld [vmem:[%s6 + $0x10] sm:$0xf]
    %v1103 = vld [vmem:[%s6 + $0x14] sm:$0xf]
    %v1104 = vld [vmem:[%s6 + $0x18] sm:$0xf]
    %v1105 = vld [vmem:[%s6 + $0x1c] sm:$0xf]
    %v1106 = vld [vmem:[%s6 + $0x20] sm:$0xf]
    %v1107 = vld [vmem:[%s6 + $0x24] sm:$0xf]
    %v1108 = vld [vmem:[%s6 + $0x28] sm:$0xf]
    %v1109 = vld [vmem:[%s6 + $0x2c] sm:$0xf]
    %v1110 = vld [vmem:[%s6 + $0x30] sm:$0xf]
    %v1111 = vld [vmem:[%s6 + $0x34] sm:$0xf]
    %v1112 = vld [vmem:[%s6 + $0x38] sm:$0xf]
    %v1113 = vld [vmem:[%s6 + $0x3c] sm:$0xf]
    %v1114 = vld [vmem:[%s7] sm:$0x1]
    %v1115 = vpack.c.bf16 %v1095, %v1022
    %v1117 = vlaneseq
    %v1118 = vshrl.u32 %v1117, 7
    %v1119 = vsub.s32 0, %v1118
    %v1120 = vrot.slane %v1114, %v1119
    %v1138 = vunpack.c.l.b16 %v1098
    %v1139 = vunpack.c.l.b16 %v1099
    %v1140 = vunpack.c.l.b16 %v1100
    %v1141 = vunpack.c.l.b16 %v1101
    %v1142 = vunpack.c.l.b16 %v1102
    %v1143 = vunpack.c.l.b16 %v1103
    %v1144 = vunpack.c.l.b16 %v1104
    %v1145 = vunpack.c.l.b16 %v1105
    %v1146 = vunpack.c.l.b16 %v1106
    %v1147 = vunpack.c.l.b16 %v1107
    %v1148 = vunpack.c.l.b16 %v1108
    %v1149 = vunpack.c.l.b16 %v1109
    %v1150 = vunpack.c.l.b16 %v1110
    %v1151 = vunpack.c.l.b16 %v1111
    %v1152 = vunpack.c.l.b16 %v1112
    %v1153 = vunpack.c.l.b16 %v1113
    %v1154 = vpack.c.b16 %v1139, %v1138
    %v1155 = vpack.c.b16 %v1141, %v1140
    %v1156 = vpack.c.b16 %v1143, %v1142
    %v1157 = vpack.c.b16 %v1145, %v1144
    %v1158 = vpack.c.b16 %v1147, %v1146
    %v1159 = vpack.c.b16 %v1149, %v1148
    %v1160 = vpack.c.b16 %v1151, %v1150
    %v1161 = vpack.c.b16 %v1153, %v1152
    %1170 = vmatprep.subr.bf16.mxu0 0
    %1171 = vmatpush1.bf16.msra.mxu0 %v1154
    %1172 = vmatprep.subr.bf16.mxu0 0
    %1173 = vmatpush1.bf16.msra.mxu0 %v1155
    %1174 = vmatprep.subr.bf16.mxu0 0
    %1175 = vmatpush1.bf16.msra.mxu0 %v1156
    %1176 = vmatprep.subr.bf16.mxu0 0
    %1177 = vmatpush1.bf16.msra.mxu0 %v1157
    %1178 = vmatprep.subr.bf16.mxu0 0
    %1179 = vmatpush1.bf16.msra.mxu0 %v1158
    %1180 = vmatprep.subr.bf16.mxu0 0
    %1181 = vmatpush1.bf16.msra.mxu0 %v1159
    %1182 = vmatprep.subr.bf16.mxu0 0
    %1183 = vmatpush1.bf16.msra.mxu0 %v1160
    %1184 = vmatprep.subr.bf16.mxu0 0
    %1185 = vmatpush1.bf16.msra.mxu0 %v1161
    %1186 = vmatprep.subr.bf16.mxu0 0
    %1187 = vmatpush1.bf16.msra.mxu0 0
    %1188 = vmatprep.subr.bf16.mxu0 0
    %1189 = vmatpush1.bf16.msra.mxu0 0
    %1190 = vmatprep.subr.bf16.mxu0 0
    %1191 = vmatpush1.bf16.msra.mxu0 0
    %1192 = vmatprep.subr.bf16.mxu0 0
    %1193 = vmatpush1.bf16.msra.mxu0 0
    %1194 = vmatprep.subr.bf16.mxu0 0
    %1195 = vmatpush1.bf16.msra.mxu0 0
    %1196 = vmatprep.subr.bf16.mxu0 0
    %1197 = vmatpush1.bf16.msra.mxu0 0
    %1198 = vmatprep.subr.bf16.mxu0 0
    %1199 = vmatpush1.bf16.msra.mxu0 0
    %1200 = vmatprep.subr.bf16.mxu0 0
    %1201 = vmatpush1.bf16.msra.mxu0 0
    %1202 = vmatprep.mubr.bf16.mxu0 0
    %1203 = vmatmul.mubr.bf16.gmra.mrb[0].mxu0 %v1115
    %v1204 = vpop.f32.mrb[0].mxu0
    %v1205 = vadd.f32 %v1120, %v1204
    %v1206 = vpop.f32.mrb[0].mxu0
    %v1207 = vpop.f32.mrb[0].mxu0
    %v1208 = vadd.f32 %v1120, %v1207
    %v1209 = vpop.f32.mrb[0].mxu0
    %1210 = vdwg.mxu0
    %v1211 = vadd.f32 %v189, %v1205
    %v1212 = vadd.f32 %v190, %v1208
    %v1213 = vld [vmem:[%s8] sm:$0x1]
    %v1214 = vld [vmem:[%s9] sm:$0x1]
    %1215 = vadd.xlane.f32.xlu0 %v1211
    %v1216 = vpop.xlane.xlu0 %1215
    %1217 = vadd.xlane.f32.xlu0 %v1212
    %v1218 = vpop.xlane.xlu0 %1217
    %v1219 = vmul.f32 %v1216, %v156
    %v1220 = vmul.f32 %v1218, %v156
    %v1221 = vsub.f32 %v1211, %v1219
    %v1222 = vsub.f32 %v1212, %v1220
    %v1223 = vmul.f32 %v1221, %v1221
    %v1224 = vmul.f32 %v1222, %v1222
    %1225 = vadd.xlane.f32.xlu0 %v1223
    %v1226 = vpop.xlane.xlu0 %1225
    %1227 = vadd.xlane.f32.xlu0 %v1224
    %v1228 = vpop.xlane.xlu0 %1227
    %v1229 = vmul.f32 %v1226, %v156
    %v1230 = vmul.f32 %v1228, %v156
    %v1231 = vadd.f32 %v1229, 1e-12
    %v1232 = vadd.f32 %v1230, 1e-12
    %v1233 = vrsqrt.pop %v1231
    %v1234 = vrsqrt.pop %v1232
    %v1235 = vmul.f32 %v1221, %v1233
    %v1236 = vmul.f32 %v1222, %v1234
    %v1238 = vlaneseq
    %v1239 = vshrl.u32 %v1238, 7
    %v1240 = vsub.s32 0, %v1239
    %v1241 = vrot.slane %v1213, %v1240
    %v1243 = vmul.f32 %v1235, %v1241
    %v1244 = vmul.f32 %v1236, %v1241
    %v1246 = vlaneseq
    %v1247 = vshrl.u32 %v1246, 7
    %v1248 = vsub.s32 0, %v1247
    %v1249 = vrot.slane %v1214, %v1248
    %v1251 = vadd.f32 %v1243, %v1249
    %v1252 = vadd.f32 %v1244, %v1249
    %v1253 = vld [vmem:[#allocation4] sm:$0xff]
    %v1254 = vld [vmem:[#allocation4 + $0x8] sm:$0xff]
    %v1255 = vld [vmem:[#allocation4 + $0x10] sm:$0xff]
    %v1256 = vld [vmem:[#allocation4 + $0x18] sm:$0xff]
    %v1257 = vld [vmem:[#allocation4 + $0x20] sm:$0xff]
    %v1258 = vld [vmem:[#allocation4 + $0x28] sm:$0xff]
    %v1259 = vld [vmem:[#allocation4 + $0x30] sm:$0xff]
    %v1260 = vld [vmem:[#allocation4 + $0x38] sm:$0xff]
    %v1261 = vld [vmem:[#allocation4 + $0x40] sm:$0xff]
    %v1262 = vld [vmem:[#allocation4 + $0x48] sm:$0xff]
    %v1263 = vld [vmem:[#allocation4 + $0x50] sm:$0xff]
    %v1264 = vld [vmem:[#allocation4 + $0x58] sm:$0xff]
    %v1265 = vld [vmem:[#allocation4 + $0x60] sm:$0xff]
    %v1266 = vld [vmem:[#allocation4 + $0x68] sm:$0xff]
    %v1267 = vld [vmem:[#allocation4 + $0x70] sm:$0xff]
    %v1268 = vld [vmem:[#allocation4 + $0x78] sm:$0xff]
    %v1269 = vld [vmem:[#allocation4 + $0x80] sm:$0xff]
    %v1270 = vld [vmem:[#allocation4 + $0x88] sm:$0xff]
    %v1271 = vld [vmem:[#allocation4 + $0x90] sm:$0xff]
    %v1272 = vld [vmem:[#allocation4 + $0x98] sm:$0xff]
    %v1273 = vld [vmem:[#allocation4 + $0xa0] sm:$0xff]
    %v1274 = vld [vmem:[#allocation4 + $0xa8] sm:$0xff]
    %v1275 = vld [vmem:[#allocation4 + $0xb0] sm:$0xff]
    %v1276 = vld [vmem:[#allocation4 + $0xb8] sm:$0xff]
    %v1277 = vld [vmem:[#allocation4 + $0xc0] sm:$0xff]
    %v1278 = vld [vmem:[#allocation4 + $0xc8] sm:$0xff]
    %v1279 = vld [vmem:[#allocation4 + $0xd0] sm:$0xff]
    %v1280 = vld [vmem:[#allocation4 + $0xd8] sm:$0xff]
    %v1281 = vld [vmem:[#allocation4 + $0xe0] sm:$0xff]
    %v1282 = vld [vmem:[#allocation4 + $0xe8] sm:$0xff]
    %v1283 = vld [vmem:[#allocation4 + $0xf0] sm:$0xff]
    %v1284 = vld [vmem:[#allocation4 + $0xf8] sm:$0xff]
    %v1285 = vld [vmem:[%s11] sm:$0xf]
    %v1286 = vpack.c.bf16 %v1252, %v1251
    %v1288 = vlaneseq
    %v1289 = vshrl.u32 %v1288, 7
    %v1290 = vsub.s32 0, %v1289
    %v1291 = vrot.slane %v1285, %v1290
    %v1292 = vlaneseq
    %v1293 = vshrl.u32 %v1292, 7
    %v1294 = vsub.s32 1, %v1293
    %v1295 = vrot.slane %v1285, %v1294
    %v1296 = vlaneseq
    %v1297 = vshrl.u32 %v1296, 7
    %v1298 = vsub.s32 2, %v1297
    %v1299 = vrot.slane %v1285, %v1298
    %v1300 = vlaneseq
    %v1301 = vshrl.u32 %v1300, 7
    %v1302 = vsub.s32 3, %v1301
    %v1303 = vrot.slane %v1285, %v1302
    %v1340 = vunpack.c.l.b16 %v1253
    %v1341 = vunpack.c.h.b16 %v1253
    %v1342 = vunpack.c.l.b16 %v1254
    %v1343 = vunpack.c.h.b16 %v1254
    %v1344 = vunpack.c.l.b16 %v1255
    %v1345 = vunpack.c.h.b16 %v1255
    %v1346 = vunpack.c.l.b16 %v1256
    %v1347 = vunpack.c.h.b16 %v1256
    %v1348 = vunpack.c.l.b16 %v1257
    %v1349 = vunpack.c.h.b16 %v1257
    %v1350 = vunpack.c.l.b16 %v1258
    %v1351 = vunpack.c.h.b16 %v1258
    %v1352 = vunpack.c.l.b16 %v1259
    %v1353 = vunpack.c.h.b16 %v1259
    %v1354 = vunpack.c.l.b16 %v1260
    %v1355 = vunpack.c.h.b16 %v1260
    %v1356 = vunpack.c.l.b16 %v1261
    %v1357 = vunpack.c.h.b16 %v1261
    %v1358 = vunpack.c.l.b16 %v1262
    %v1359 = vunpack.c.h.b16 %v1262
    %v1360 = vunpack.c.l.b16 %v1263
    %v1361 = vunpack.c.h.b16 %v1263
    %v1362 = vunpack.c.l.b16 %v1264
    %v1363 = vunpack.c.h.b16 %v1264
    %v1364 = vunpack.c.l.b16 %v1265
    %v1365 = vunpack.c.h.b16 %v1265
    %v1366 = vunpack.c.l.b16 %v1266
    %v1367 = vunpack.c.h.b16 %v1266
    %v1368 = vunpack.c.l.b16 %v1267
    %v1369 = vunpack.c.h.b16 %v1267
    %v1370 = vunpack.c.l.b16 %v1268
    %v1371 = vunpack.c.h.b16 %v1268
    %v1372 = vunpack.c.l.b16 %v1269
    %v1373 = vunpack.c.h.b16 %v1269
    %v1374 = vunpack.c.l.b16 %v1270
    %v1375 = vunpack.c.h.b16 %v1270
    %v1376 = vunpack.c.l.b16 %v1271
    %v1377 = vunpack.c.h.b16 %v1271
    %v1378 = vunpack.c.l.b16 %v1272
    %v1379 = vunpack.c.h.b16 %v1272
    %v1380 = vunpack.c.l.b16 %v1273
    %v1381 = vunpack.c.h.b16 %v1273
    %v1382 = vunpack.c.l.b16 %v1274
    %v1383 = vunpack.c.h.b16 %v1274
    %v1384 = vunpack.c.l.b16 %v1275
    %v1385 = vunpack.c.h.b16 %v1275
    %v1386 = vunpack.c.l.b16 %v1276
    %v1387 = vunpack.c.h.b16 %v1276
    %v1388 = vunpack.c.l.b16 %v1277
    %v1389 = vunpack.c.h.b16 %v1277
    %v1390 = vunpack.c.l.b16 %v1278
    %v1391 = vunpack.c.h.b16 %v1278
    %v1392 = vunpack.c.l.b16 %v1279
    %v1393 = vunpack.c.h.b16 %v1279
    %v1394 = vunpack.c.l.b16 %v1280
    %v1395 = vunpack.c.h.b16 %v1280
    %v1396 = vunpack.c.l.b16 %v1281
    %v1397 = vunpack.c.h.b16 %v1281
    %v1398 = vunpack.c.l.b16 %v1282
    %v1399 = vunpack.c.h.b16 %v1282
    %v1400 = vunpack.c.l.b16 %v1283
    %v1401 = vunpack.c.h.b16 %v1283
    %v1402 = vunpack.c.l.b16 %v1284
    %v1403 = vunpack.c.h.b16 %v1284
    %v1404 = vpack.c.b16 %v1344, %v1340
    %v1405 = vpack.c.b16 %v1345, %v1341
    %v1406 = vpack.c.b16 %v1346, %v1342
    %v1407 = vpack.c.b16 %v1347, %v1343
    %v1408 = vpack.c.b16 %v1352, %v1348
    %v1409 = vpack.c.b16 %v1353, %v1349
    %v1410 = vpack.c.b16 %v1354, %v1350
    %v1411 = vpack.c.b16 %v1355, %v1351
    %v1412 = vpack.c.b16 %v1360, %v1356
    %v1413 = vpack.c.b16 %v1361, %v1357
    %v1414 = vpack.c.b16 %v1362, %v1358
    %v1415 = vpack.c.b16 %v1363, %v1359
    %v1416 = vpack.c.b16 %v1368, %v1364
    %v1417 = vpack.c.b16 %v1369, %v1365
    %v1418 = vpack.c.b16 %v1370, %v1366
    %v1419 = vpack.c.b16 %v1371, %v1367
    %v1420 = vpack.c.b16 %v1376, %v1372
    %v1421 = vpack.c.b16 %v1377, %v1373
    %v1422 = vpack.c.b16 %v1378, %v1374
    %v1423 = vpack.c.b16 %v1379, %v1375
    %v1424 = vpack.c.b16 %v1384, %v1380
    %v1425 = vpack.c.b16 %v1385, %v1381
    %v1426 = vpack.c.b16 %v1386, %v1382
    %v1427 = vpack.c.b16 %v1387, %v1383
    %v1428 = vpack.c.b16 %v1392, %v1388
    %v1429 = vpack.c.b16 %v1393, %v1389
    %v1430 = vpack.c.b16 %v1394, %v1390
    %v1431 = vpack.c.b16 %v1395, %v1391
    %v1432 = vpack.c.b16 %v1400, %v1396
    %v1433 = vpack.c.b16 %v1401, %v1397
    %v1434 = vpack.c.b16 %v1402, %v1398
    %v1435 = vpack.c.b16 %v1403, %v1399
    %1468 = vmatprep.subr.bf16.mxu0 %v1405
    %1469 = vmatpush1.bf16.msra.mxu0 %v1404
    %1470 = vmatprep.subr.bf16.mxu0 %v1409
    %1471 = vmatpush1.bf16.msra.mxu0 %v1408
    %1472 = vmatprep.subr.bf16.mxu0 %v1413
    %1473 = vmatpush1.bf16.msra.mxu0 %v1412
    %1474 = vmatprep.subr.bf16.mxu0 %v1417
    %1475 = vmatpush1.bf16.msra.mxu0 %v1416
    %1476 = vmatprep.subr.bf16.mxu0 %v1421
    %1477 = vmatpush1.bf16.msra.mxu0 %v1420
    %1478 = vmatprep.subr.bf16.mxu0 %v1425
    %1479 = vmatpush1.bf16.msra.mxu0 %v1424
    %1480 = vmatprep.subr.bf16.mxu0 %v1429
    %1481 = vmatpush1.bf16.msra.mxu0 %v1428
    %1482 = vmatprep.subr.bf16.mxu0 %v1433
    %1483 = vmatpush1.bf16.msra.mxu0 %v1432
    %1484 = vmatprep.subr.bf16.mxu0 0
    %1485 = vmatpush1.bf16.msra.mxu0 0
    %1486 = vmatprep.subr.bf16.mxu0 0
    %1487 = vmatpush1.bf16.msra.mxu0 0
    %1488 = vmatprep.subr.bf16.mxu0 0
    %1489 = vmatpush1.bf16.msra.mxu0 0
    %1490 = vmatprep.subr.bf16.mxu0 0
    %1491 = vmatpush1.bf16.msra.mxu0 0
    %1492 = vmatprep.subr.bf16.mxu0 0
    %1493 = vmatpush1.bf16.msra.mxu0 0
    %1494 = vmatprep.subr.bf16.mxu0 0
    %1495 = vmatpush1.bf16.msra.mxu0 0
    %1496 = vmatprep.subr.bf16.mxu0 0
    %1497 = vmatpush1.bf16.msra.mxu0 0
    %1498 = vmatprep.subr.bf16.mxu0 0
    %1499 = vmatpush1.bf16.msra.mxu0 0
    %1500 = vmatprep.mubr.bf16.mxu0 0
    %1501 = vmatmul.mubr.bf16.gmra.mrb[0].mxu0 %v1286
    %v1502 = vpop.f32.mrb[0].mxu0
    %v1503 = vadd.f32 %v1291, %v1502
    %v1504 = vpop.f32.mrb[0].mxu0
    %v1505 = vadd.f32 %v1295, %v1504
    %v1506 = vpop.f32.mrb[0].mxu0
    %v1507 = vadd.f32 %v1291, %v1506
    %v1508 = vpop.f32.mrb[0].mxu0
    %v1509 = vadd.f32 %v1295, %v1508
    %1510 = vdwg.mxu0
    %1511 = vmatprep.subr.bf16.mxu0 %v1407
    %1512 = vmatpush1.bf16.msra.mxu0 %v1406
    %1513 = vmatprep.subr.bf16.mxu0 %v1411
    %1514 = vmatpush1.bf16.msra.mxu0 %v1410
    %1515 = vmatprep.subr.bf16.mxu0 %v1415
    %1516 = vmatpush1.bf16.msra.mxu0 %v1414
    %1517 = vmatprep.subr.bf16.mxu0 %v1419
    %1518 = vmatpush1.bf16.msra.mxu0 %v1418
    %1519 = vmatprep.subr.bf16.mxu0 %v1423
    %1520 = vmatpush1.bf16.msra.mxu0 %v1422
    %1521 = vmatprep.subr.bf16.mxu0 %v1427
    %1522 = vmatpush1.bf16.msra.mxu0 %v1426
    %1523 = vmatprep.subr.bf16.mxu0 %v1431
    %1524 = vmatpush1.bf16.msra.mxu0 %v1430
    %1525 = vmatprep.subr.bf16.mxu0 %v1435
    %1526 = vmatpush1.bf16.msra.mxu0 %v1434
    %1527 = vmatprep.subr.bf16.mxu0 0
    %1528 = vmatpush1.bf16.msra.mxu0 0
    %1529 = vmatprep.subr.bf16.mxu0 0
    %1530 = vmatpush1.bf16.msra.mxu0 0
    %1531 = vmatprep.subr.bf16.mxu0 0
    %1532 = vmatpush1.bf16.msra.mxu0 0
    %1533 = vmatprep.subr.bf16.mxu0 0
    %1534 = vmatpush1.bf16.msra.mxu0 0
    %1535 = vmatprep.subr.bf16.mxu0 0
    %1536 = vmatpush1.bf16.msra.mxu0 0
    %1537 = vmatprep.subr.bf16.mxu0 0
    %1538 = vmatpush1.bf16.msra.mxu0 0
    %1539 = vmatprep.subr.bf16.mxu0 0
    %1540 = vmatpush1.bf16.msra.mxu0 0
    %1541 = vmatprep.subr.bf16.mxu0 0
    %1542 = vmatpush1.bf16.msra.mxu0 0
    %1543 = vmatprep.mubr.bf16.mxu0 0
    %1544 = vmatmul.mubr.bf16.gmra.mrb[0].mxu0 %v1286
    %v1545 = vpop.f32.mrb[0].mxu0
    %v1546 = vadd.f32 %v1299, %v1545
    %v1547 = vpop.f32.mrb[0].mxu0
    %v1548 = vadd.f32 %v1303, %v1547
    %v1549 = vpop.f32.mrb[0].mxu0
    %v1550 = vadd.f32 %v1299, %v1549
    %v1551 = vpop.f32.mrb[0].mxu0
    %v1552 = vadd.f32 %v1303, %v1551
    %1553 = vdwg.mxu0
    %v1554 = vmul.f32 %v1503, 0.5
    %v1555 = vmul.f32 %v1505, 0.5
    %v1556 = vmul.f32 %v1546, 0.5
    %v1557 = vmul.f32 %v1548, 0.5
    %v1558 = vmul.f32 %v1507, 0.5
    %v1559 = vmul.f32 %v1509, 0.5
    %v1560 = vmul.f32 %v1550, 0.5
    %v1561 = vmul.f32 %v1552, 0.5
    %v1562 = vmul.f32 %v1503, 0.70710677
    %v1563 = vmul.f32 %v1505, 0.70710677
    %v1564 = vmul.f32 %v1546, 0.70710677
    %v1565 = vmul.f32 %v1548, 0.70710677
    %v1566 = vmul.f32 %v1507, 0.70710677
    %v1567 = vmul.f32 %v1509, 0.70710677
    %v1568 = vmul.f32 %v1550, 0.70710677
    %v1569 = vmul.f32 %v1552, 0.70710677
    %v1570 = verf.f32.pop %v1562
    %v1571 = verf.f32.pop %v1563
    %v1572 = verf.f32.pop %v1564
    %v1573 = verf.f32.pop %v1565
    %v1574 = verf.f32.pop %v1566
    %v1575 = verf.f32.pop %v1567
    %v1576 = verf.f32.pop %v1568
    %v1577 = verf.f32.pop %v1569
    %v1578 = vadd.f32 %v1570, 1.0
    %v1579 = vadd.f32 %v1571, 1.0
    %v1580 = vadd.f32 %v1572, 1.0
    %v1581 = vadd.f32 %v1573, 1.0
    %v1582 = vadd.f32 %v1574, 1.0
    %v1583 = vadd.f32 %v1575, 1.0
    %v1584 = vadd.f32 %v1576, 1.0
    %v1585 = vadd.f32 %v1577, 1.0
    %v1586 = vmul.f32 %v1554, %v1578
    %v1587 = vmul.f32 %v1555, %v1579
    %v1588 = vmul.f32 %v1556, %v1580
    %v1589 = vmul.f32 %v1557, %v1581
    %v1590 = vmul.f32 %v1558, %v1582
    %v1591 = vmul.f32 %v1559, %v1583
    %v1592 = vmul.f32 %v1560, %v1584
    %v1593 = vmul.f32 %v1561, %v1585
    %v1594 = vld [vmem:[#allocation6] sm:$0xf]
    %v1595 = vld [vmem:[#allocation6 + $0x4] sm:$0xf]
    %v1596 = vld [vmem:[#allocation6 + $0x8] sm:$0xf]
    %v1597 = vld [vmem:[#allocation6 + $0xc] sm:$0xf]
    %v1598 = vld [vmem:[#allocation6 + $0x10] sm:$0xf]
    %v1599 = vld [vmem:[#allocation6 + $0x14] sm:$0xf]
    %v1600 = vld [vmem:[#allocation6 + $0x18] sm:$0xf]
    %v1601 = vld [vmem:[#allocation6 + $0x1c] sm:$0xf]
    %v1602 = vld [vmem:[#allocation6 + $0x20] sm:$0xf]
    %v1603 = vld [vmem:[#allocation6 + $0x24] sm:$0xf]
    %v1604 = vld [vmem:[#allocation6 + $0x28] sm:$0xf]
    %v1605 = vld [vmem:[#allocation6 + $0x2c] sm:$0xf]
    %v1606 = vld [vmem:[#allocation6 + $0x30] sm:$0xf]
    %v1607 = vld [vmem:[#allocation6 + $0x34] sm:$0xf]
    %v1608 = vld [vmem:[#allocation6 + $0x38] sm:$0xf]
    %v1609 = vld [vmem:[#allocation6 + $0x3c] sm:$0xf]
    %v1610 = vld [vmem:[#allocation6 + $0x40] sm:$0xf]
    %v1611 = vld [vmem:[#allocation6 + $0x44] sm:$0xf]
    %v1612 = vld [vmem:[#allocation6 + $0x48] sm:$0xf]
    %v1613 = vld [vmem:[#allocation6 + $0x4c] sm:$0xf]
    %v1614 = vld [vmem:[#allocation6 + $0x50] sm:$0xf]
    %v1615 = vld [vmem:[#allocation6 + $0x54] sm:$0xf]
    %v1616 = vld [vmem:[#allocation6 + $0x58] sm:$0xf]
    %v1617 = vld [vmem:[#allocation6 + $0x5c] sm:$0xf]
    %v1618 = vld [vmem:[#allocation6 + $0x60] sm:$0xf]
    %v1619 = vld [vmem:[#allocation6 + $0x64] sm:$0xf]
    %v1620 = vld [vmem:[#allocation6 + $0x68] sm:$0xf]
    %v1621 = vld [vmem:[#allocation6 + $0x6c] sm:$0xf]
    %v1622 = vld [vmem:[#allocation6 + $0x70] sm:$0xf]
    %v1623 = vld [vmem:[#allocation6 + $0x74] sm:$0xf]
    %v1624 = vld [vmem:[#allocation6 + $0x78] sm:$0xf]
    %v1625 = vld [vmem:[#allocation6 + $0x7c] sm:$0xf]
    %v1626 = vld [vmem:[#allocation6 + $0x80] sm:$0xf]
    %v1627 = vld [vmem:[#allocation6 + $0x84] sm:$0xf]
    %v1628 = vld [vmem:[#allocation6 + $0x88] sm:$0xf]
    %v1629 = vld [vmem:[#allocation6 + $0x8c] sm:$0xf]
    %v1630 = vld [vmem:[#allocation6 + $0x90] sm:$0xf]
    %v1631 = vld [vmem:[#allocation6 + $0x94] sm:$0xf]
    %v1632 = vld [vmem:[#allocation6 + $0x98] sm:$0xf]
    %v1633 = vld [vmem:[#allocation6 + $0x9c] sm:$0xf]
    %v1634 = vld [vmem:[#allocation6 + $0xa0] sm:$0xf]
    %v1635 = vld [vmem:[#allocation6 + $0xa4] sm:$0xf]
    %v1636 = vld [vmem:[#allocation6 + $0xa8] sm:$0xf]
    %v1637 = vld [vmem:[#allocation6 + $0xac] sm:$0xf]
    %v1638 = vld [vmem:[#allocation6 + $0xb0] sm:$0xf]
    %v1639 = vld [vmem:[#allocation6 + $0xb4] sm:$0xf]
    %v1640 = vld [vmem:[#allocation6 + $0xb8] sm:$0xf]
    %v1641 = vld [vmem:[#allocation6 + $0xbc] sm:$0xf]
    %v1642 = vld [vmem:[#allocation6 + $0xc0] sm:$0xf]
    %v1643 = vld [vmem:[#allocation6 + $0xc4] sm:$0xf]
    %v1644 = vld [vmem:[#allocation6 + $0xc8] sm:$0xf]
    %v1645 = vld [vmem:[#allocation6 + $0xcc] sm:$0xf]
    %v1646 = vld [vmem:[#allocation6 + $0xd0] sm:$0xf]
    %v1647 = vld [vmem:[#allocation6 + $0xd4] sm:$0xf]
    %v1648 = vld [vmem:[#allocation6 + $0xd8] sm:$0xf]
    %v1649 = vld [vmem:[#allocation6 + $0xdc] sm:$0xf]
    %v1650 = vld [vmem:[#allocation6 + $0xe0] sm:$0xf]
    %v1651 = vld [vmem:[#allocation6 + $0xe4] sm:$0xf]
    %v1652 = vld [vmem:[#allocation6 + $0xe8] sm:$0xf]
    %v1653 = vld [vmem:[#allocation6 + $0xec] sm:$0xf]
    %v1654 = vld [vmem:[#allocation6 + $0xf0] sm:$0xf]
    %v1655 = vld [vmem:[#allocation6 + $0xf4] sm:$0xf]
    %v1656 = vld [vmem:[#allocation6 + $0xf8] sm:$0xf]
    %v1657 = vld [vmem:[#allocation6 + $0xfc] sm:$0xf]
    %v1658 = vld [vmem:[%s13] sm:$0x1]
    %v1659 = vpack.c.bf16 %v1590, %v1586
    %v1660 = vpack.c.bf16 %v1591, %v1587
    %v1661 = vpack.c.bf16 %v1592, %v1588
    %v1662 = vpack.c.bf16 %v1593, %v1589
    %v1664 = vlaneseq
    %v1665 = vshrl.u32 %v1664, 7
    %v1666 = vsub.s32 0, %v1665
    %v1667 = vrot.slane %v1658, %v1666
    %v1733 = vunpack.c.l.b16 %v1594
    %v1734 = vunpack.c.l.b16 %v1595
    %v1735 = vunpack.c.l.b16 %v1596
    %v1736 = vunpack.c.l.b16 %v1597
    %v1737 = vunpack.c.l.b16 %v1598
    %v1738 = vunpack.c.l.b16 %v1599
    %v1739 = vunpack.c.l.b16 %v1600
    %v1740 = vunpack.c.l.b16 %v1601
    %v1741 = vunpack.c.l.b16 %v1602
    %v1742 = vunpack.c.l.b16 %v1603
    %v1743 = vunpack.c.l.b16 %v1604
    %v1744 = vunpack.c.l.b16 %v1605
    %v1745 = vunpack.c.l.b16 %v1606
    %v1746 = vunpack.c.l.b16 %v1607
    %v1747 = vunpack.c.l.b16 %v1608
    %v1748 = vunpack.c.l.b16 %v1609
    %v1749 = vunpack.c.l.b16 %v1610
    %v1750 = vunpack.c.l.b16 %v1611
    %v1751 = vunpack.c.l.b16 %v1612
    %v1752 = vunpack.c.l.b16 %v1613
    %v1753 = vunpack.c.l.b16 %v1614
    %v1754 = vunpack.c.l.b16 %v1615
    %v1755 = vunpack.c.l.b16 %v1616
    %v1756 = vunpack.c.l.b16 %v1617
    %v1757 = vunpack.c.l.b16 %v1618
    %v1758 = vunpack.c.l.b16 %v1619
    %v1759 = vunpack.c.l.b16 %v1620
    %v1760 = vunpack.c.l.b16 %v1621
    %v1761 = vunpack.c.l.b16 %v1622
    %v1762 = vunpack.c.l.b16 %v1623
    %v1763 = vunpack.c.l.b16 %v1624
    %v1764 = vunpack.c.l.b16 %v1625
    %v1765 = vunpack.c.l.b16 %v1626
    %v1766 = vunpack.c.l.b16 %v1627
    %v1767 = vunpack.c.l.b16 %v1628
    %v1768 = vunpack.c.l.b16 %v1629
    %v1769 = vunpack.c.l.b16 %v1630
    %v1770 = vunpack.c.l.b16 %v1631
    %v1771 = vunpack.c.l.b16 %v1632
    %v1772 = vunpack.c.l.b16 %v1633
    %v1773 = vunpack.c.l.b16 %v1634
    %v1774 = vunpack.c.l.b16 %v1635
    %v1775 = vunpack.c.l.b16 %v1636
    %v1776 = vunpack.c.l.b16 %v1637
    %v1777 = vunpack.c.l.b16 %v1638
    %v1778 = vunpack.c.l.b16 %v1639
    %v1779 = vunpack.c.l.b16 %v1640
    %v1780 = vunpack.c.l.b16 %v1641
    %v1781 = vunpack.c.l.b16 %v1642
    %v1782 = vunpack.c.l.b16 %v1643
    %v1783 = vunpack.c.l.b16 %v1644
    %v1784 = vunpack.c.l.b16 %v1645
    %v1785 = vunpack.c.l.b16 %v1646
    %v1786 = vunpack.c.l.b16 %v1647
    %v1787 = vunpack.c.l.b16 %v1648
    %v1788 = vunpack.c.l.b16 %v1649
    %v1789 = vunpack.c.l.b16 %v1650
    %v1790 = vunpack.c.l.b16 %v1651
    %v1791 = vunpack.c.l.b16 %v1652
    %v1792 = vunpack.c.l.b16 %v1653
    %v1793 = vunpack.c.l.b16 %v1654
    %v1794 = vunpack.c.l.b16 %v1655
    %v1795 = vunpack.c.l.b16 %v1656
    %v1796 = vunpack.c.l.b16 %v1657
    %v1797 = vpack.c.b16 %v1734, %v1733
    %v1798 = vpack.c.b16 %v1736, %v1735
    %v1799 = vpack.c.b16 %v1738, %v1737
    %v1800 = vpack.c.b16 %v1740, %v1739
    %v1801 = vpack.c.b16 %v1742, %v1741
    %v1802 = vpack.c.b16 %v1744, %v1743
    %v1803 = vpack.c.b16 %v1746, %v1745
    %v1804 = vpack.c.b16 %v1748, %v1747
    %v1805 = vpack.c.b16 %v1750, %v1749
    %v1806 = vpack.c.b16 %v1752, %v1751
    %v1807 = vpack.c.b16 %v1754, %v1753
    %v1808 = vpack.c.b16 %v1756, %v1755
    %v1809 = vpack.c.b16 %v1758, %v1757
    %v1810 = vpack.c.b16 %v1760, %v1759
    %v1811 = vpack.c.b16 %v1762, %v1761
    %v1812 = vpack.c.b16 %v1764, %v1763
    %v1813 = vpack.c.b16 %v1766, %v1765
    %v1814 = vpack.c.b16 %v1768, %v1767
    %v1815 = vpack.c.b16 %v1770, %v1769
    %v1816 = vpack.c.b16 %v1772, %v1771
    %v1817 = vpack.c.b16 %v1774, %v1773
    %v1818 = vpack.c.b16 %v1776, %v1775
    %v1819 = vpack.c.b16 %v1778, %v1777
    %v1820 = vpack.c.b16 %v1780, %v1779
    %v1821 = vpack.c.b16 %v1782, %v1781
    %v1822 = vpack.c.b16 %v1784, %v1783
    %v1823 = vpack.c.b16 %v1786, %v1785
    %v1824 = vpack.c.b16 %v1788, %v1787
    %v1825 = vpack.c.b16 %v1790, %v1789
    %v1826 = vpack.c.b16 %v1792, %v1791
    %v1827 = vpack.c.b16 %v1794, %v1793
    %v1828 = vpack.c.b16 %v1796, %v1795
    %1861 = vmatprep.subr.bf16.mxu0 0
    %1862 = vmatpush1.bf16.msra.mxu0 %v1797
    %1863 = vmatprep.subr.bf16.mxu0 0
    %1864 = vmatpush1.bf16.msra.mxu0 %v1798
    %1865 = vmatprep.subr.bf16.mxu0 0
    %1866 = vmatpush1.bf16.msra.mxu0 %v1799
    %1867 = vmatprep.subr.bf16.mxu0 0
    %1868 = vmatpush1.bf16.msra.mxu0 %v1800
    %1869 = vmatprep.subr.bf16.mxu0 0
    %1870 = vmatpush1.bf16.msra.mxu0 %v1801
    %1871 = vmatprep.subr.bf16.mxu0 0
    %1872 = vmatpush1.bf16.msra.mxu0 %v1802
    %1873 = vmatprep.subr.bf16.mxu0 0
    %1874 = vmatpush1.bf16.msra.mxu0 %v1803
    %1875 = vmatprep.subr.bf16.mxu0 0
    %1876 = vmatpush1.bf16.msra.mxu0 %v1804
    %1877 = vmatprep.subr.bf16.mxu0 0
    %1878 = vmatpush1.bf16.msra.mxu0 %v1805
    %1879 = vmatprep.subr.bf16.mxu0 0
    %1880 = vmatpush1.bf16.msra.mxu0 %v1806
    %1881 = vmatprep.subr.bf16.mxu0 0
    %1882 = vmatpush1.bf16.msra.mxu0 %v1807
    %1883 = vmatprep.subr.bf16.mxu0 0
    %1884 = vmatpush1.bf16.msra.mxu0 %v1808
    %1885 = vmatprep.subr.bf16.mxu0 0
    %1886 = vmatpush1.bf16.msra.mxu0 %v1809
    %1887 = vmatprep.subr.bf16.mxu0 0
    %1888 = vmatpush1.bf16.msra.mxu0 %v1810
    %1889 = vmatprep.subr.bf16.mxu0 0
    %1890 = vmatpush1.bf16.msra.mxu0 %v1811
    %1891 = vmatprep.subr.bf16.mxu0 0
    %1892 = vmatpush1.bf16.msra.mxu0 %v1812
    %1893 = vmatprep.mubr.bf16.mxu0 %v1660
    %1894 = vmatmul.mubr.bf16.gmra.mrb[0].mxu0 %v1659
    %v1895 = vpop.f32.mrb[0].mxu0
    %v1896 = vadd.f32 %v1667, %v1895
    %v1897 = vpop.f32.mrb[0].mxu0
    %v1898 = vpop.f32.mrb[0].mxu0
    %v1899 = vadd.f32 %v1667, %v1898
    %v1900 = vpop.f32.mrb[0].mxu0
    %1901 = vdwg.mxu0
    %1902 = vmatprep.subr.bf16.mxu0 0
    %1903 = vmatpush1.bf16.msra.mxu0 %v1813
    %1904 = vmatprep.subr.bf16.mxu0 0
    %1905 = vmatpush1.bf16.msra.mxu0 %v1814
    %1906 = vmatprep.subr.bf16.mxu0 0
    %1907 = vmatpush1.bf16.msra.mxu0 %v1815
    %1908 = vmatprep.subr.bf16.mxu0 0
    %1909 = vmatpush1.bf16.msra.mxu0 %v1816
    %1910 = vmatprep.subr.bf16.mxu0 0
    %1911 = vmatpush1.bf16.msra.mxu0 %v1817
    %1912 = vmatprep.subr.bf16.mxu0 0
    %1913 = vmatpush1.bf16.msra.mxu0 %v1818
    %1914 = vmatprep.subr.bf16.mxu0 0
    %1915 = vmatpush1.bf16.msra.mxu0 %v1819
    %1916 = vmatprep.subr.bf16.mxu0 0
    %1917 = vmatpush1.bf16.msra.mxu0 %v1820
    %1918 = vmatprep.subr.bf16.mxu0 0
    %1919 = vmatpush1.bf16.msra.mxu0 %v1821
    %1920 = vmatprep.subr.bf16.mxu0 0
    %1921 = vmatpush1.bf16.msra.mxu0 %v1822
    %1922 = vmatprep.subr.bf16.mxu0 0
    %1923 = vmatpush1.bf16.msra.mxu0 %v1823
    %1924 = vmatprep.subr.bf16.mxu0 0
    %1925 = vmatpush1.bf16.msra.mxu0 %v1824
    %1926 = vmatprep.subr.bf16.mxu0 0
    %1927 = vmatpush1.bf16.msra.mxu0 %v1825
    %1928 = vmatprep.subr.bf16.mxu0 0
    %1929 = vmatpush1.bf16.msra.mxu0 %v1826
    %1930 = vmatprep.subr.bf16.mxu0 0
    %1931 = vmatpush1.bf16.msra.mxu0 %v1827
    %1932 = vmatprep.subr.bf16.mxu0 0
    %1933 = vmatpush1.bf16.msra.mxu0 %v1828
    %1934 = vmatprep.mubr.bf16.mxu0 %v1662
    %1935 = vmatmul.mubr.bf16.gmra.mrb[0].mxu0 %v1661
    %v1936 = vpop.f32.mrb[0].mxu0
    %v1937 = vadd.f32 %v1896, %v1936
    %v1938 = vpop.f32.mrb[0].mxu0
    %v1939 = vpop.f32.mrb[0].mxu0
    %v1940 = vadd.f32 %v1899, %v1939
    %v1941 = vpop.f32.mrb[0].mxu0
    %1942 = vdwg.mxu0
    %v1943 = vadd.f32 %v1251, %v1937
    %v1944 = vadd.f32 %v1252, %v1940
    %v1945 = vld [vmem:[%s14] sm:$0x1]
    %v1946 = vld [vmem:[%s15] sm:$0x1]
    %1947 = vadd.xlane.f32.xlu0 %v1943
    %v1948 = vpop.xlane.xlu0 %1947
    %1949 = vadd.xlane.f32.xlu0 %v1944
    %v1950 = vpop.xlane.xlu0 %1949
    %v1951 = vmul.f32 %v1948, %v156
    %v1952 = vmul.f32 %v1950, %v156
    %v1953 = vsub.f32 %v1943, %v1951
    %v1954 = vsub.f32 %v1944, %v1952
    %v1955 = vmul.f32 %v1953, %v1953
    %v1956 = vmul.f32 %v1954, %v1954
    %1957 = vadd.xlane.f32.xlu0 %v1955
    %v1958 = vpop.xlane.xlu0 %1957
    %1959 = vadd.xlane.f32.xlu0 %v1956
    %v1960 = vpop.xlane.xlu0 %1959
    %v1961 = vmul.f32 %v1958, %v156
    %v1962 = vmul.f32 %v1960, %v156
    %v1963 = vadd.f32 %v1961, 1e-12
    %v1964 = vadd.f32 %v1962, 1e-12
    %v1965 = vrsqrt.pop %v1963
    %v1966 = vrsqrt.pop %v1964
    %v1967 = vmul.f32 %v1953, %v1965
    %v1968 = vmul.f32 %v1954, %v1966
    %v1970 = vlaneseq
    %v1971 = vshrl.u32 %v1970, 7
    %v1972 = vsub.s32 0, %v1971
    %v1973 = vrot.slane %v1945, %v1972
    %v1975 = vmul.f32 %v1967, %v1973
    %v1976 = vmul.f32 %v1968, %v1973
    %v1978 = vlaneseq
    %v1979 = vshrl.u32 %v1978, 7
    %v1980 = vsub.s32 0, %v1979
    %v1981 = vrot.slane %v1946, %v1980
    %v1983 = vadd.f32 %v1975, %v1981
    %v1984 = vadd.f32 %v1976, %v1981
    %s1985 = scalar_lea.vmem [#allocation2], 192
    %v1986 = vld [vmem:[%s1985] sm:$0xff]
    %v1987 = vld [vmem:[%s1985 + $0x8] sm:$0xf]
    %v1988 = vld [vmem:[%s1985 + $0xc] sm:$0xff]
    %v1989 = vld [vmem:[%s1985 + $0x14] sm:$0xf]
    %v1990 = vld [vmem:[%s1985 + $0x18] sm:$0xff]
    %v1991 = vld [vmem:[%s1985 + $0x20] sm:$0xf]
    %v1992 = vld [vmem:[%s1985 + $0x24] sm:$0xff]
    %v1993 = vld [vmem:[%s1985 + $0x2c] sm:$0xf]
    %v1994 = vld [vmem:[%s1985 + $0x30] sm:$0xff]
    %v1995 = vld [vmem:[%s1985 + $0x38] sm:$0xf]
    %v1996 = vld [vmem:[%s1985 + $0x3c] sm:$0xff]
    %v1997 = vld [vmem:[%s1985 + $0x44] sm:$0xf]
    %v1998 = vld [vmem:[%s1985 + $0x48] sm:$0xff]
    %v1999 = vld [vmem:[%s1985 + $0x50] sm:$0xf]
    %v2000 = vld [vmem:[%s1985 + $0x54] sm:$0xff]
    %v2001 = vld [vmem:[%s1985 + $0x5c] sm:$0xf]
    %v2002 = vld [vmem:[%s1985 + $0x60] sm:$0xff]
    %v2003 = vld [vmem:[%s1985 + $0x68] sm:$0xf]
    %v2004 = vld [vmem:[%s1985 + $0x6c] sm:$0xff]
    %v2005 = vld [vmem:[%s1985 + $0x74] sm:$0xf]
    %v2006 = vld [vmem:[%s1985 + $0x78] sm:$0xff]
    %v2007 = vld [vmem:[%s1985 + $0x80] sm:$0xf]
    %v2008 = vld [vmem:[%s1985 + $0x84] sm:$0xff]
    %v2009 = vld [vmem:[%s1985 + $0x8c] sm:$0xf]
    %v2010 = vld [vmem:[%s1985 + $0x90] sm:$0xff]
    %v2011 = vld [vmem:[%s1985 + $0x98] sm:$0xf]
    %v2012 = vld [vmem:[%s1985 + $0x9c] sm:$0xff]
    %v2013 = vld [vmem:[%s1985 + $0xa4] sm:$0xf]
    %v2014 = vld [vmem:[%s1985 + $0xa8] sm:$0xff]
    %v2015 = vld [vmem:[%s1985 + $0xb0] sm:$0xf]
    %v2016 = vld [vmem:[%s1985 + $0xb4] sm:$0xff]
    %v2017 = vld [vmem:[%s1985 + $0xbc] sm:$0xf]
    %s2018 = scalar_lea.vmem %s5, 3
    %v2019 = vld [vmem:[%s2018] sm:$0x7]
    %v2020 = vpack.c.bf16 %v1984, %v1983
    %v2022 = vlaneseq
    %v2023 = vshrl.u32 %v2022, 7
    %v2024 = vsub.s32 0, %v2023
    %v2025 = vrot.slane %v2019, %v2024
    %v2026 = vlaneseq
    %v2027 = vshrl.u32 %v2026, 7
    %v2028 = vsub.s32 1, %v2027
    %v2029 = vrot.slane %v2019, %v2028
    %v2030 = vlaneseq
    %v2031 = vshrl.u32 %v2030, 7
    %v2032 = vsub.s32 2, %v2031
    %v2033 = vrot.slane %v2019, %v2032
    %v2069 = vunpack.c.l.b16 %v1986
    %v2070 = vunpack.c.h.b16 %v1986
    %v2071 = vunpack.c.l.b16 %v1987
    %v2072 = vunpack.c.l.b16 %v1988
    %v2073 = vunpack.c.h.b16 %v1988
    %v2074 = vunpack.c.l.b16 %v1989
    %v2075 = vunpack.c.l.b16 %v1990
    %v2076 = vunpack.c.h.b16 %v1990
    %v2077 = vunpack.c.l.b16 %v1991
    %v2078 = vunpack.c.l.b16 %v1992
    %v2079 = vunpack.c.h.b16 %v1992
    %v2080 = vunpack.c.l.b16 %v1993
    %v2081 = vunpack.c.l.b16 %v1994
    %v2082 = vunpack.c.h.b16 %v1994
    %v2083 = vunpack.c.l.b16 %v1995
    %v2084 = vunpack.c.l.b16 %v1996
    %v2085 = vunpack.c.h.b16 %v1996
    %v2086 = vunpack.c.l.b16 %v1997
    %v2087 = vunpack.c.l.b16 %v1998
    %v2088 = vunpack.c.h.b16 %v1998
    %v2089 = vunpack.c.l.b16 %v1999
    %v2090 = vunpack.c.l.b16 %v2000
    %v2091 = vunpack.c.h.b16 %v2000
    %v2092 = vunpack.c.l.b16 %v2001
    %v2093 = vunpack.c.l.b16 %v2002
    %v2094 = vunpack.c.h.b16 %v2002
    %v2095 = vunpack.c.l.b16 %v2003
    %v2096 = vunpack.c.l.b16 %v2004
    %v2097 = vunpack.c.h.b16 %v2004
    %v2098 = vunpack.c.l.b16 %v2005
    %v2099 = vunpack.c.l.b16 %v2006
    %v2100 = vunpack.c.h.b16 %v2006
    %v2101 = vunpack.c.l.b16 %v2007
    %v2102 = vunpack.c.l.b16 %v2008
    %v2103 = vunpack.c.h.b16 %v2008
    %v2104 = vunpack.c.l.b16 %v2009
    %v2105 = vunpack.c.l.b16 %v2010
    %v2106 = vunpack.c.h.b16 %v2010
    %v2107 = vunpack.c.l.b16 %v2011
    %v2108 = vunpack.c.l.b16 %v2012
    %v2109 = vunpack.c.h.b16 %v2012
    %v2110 = vunpack.c.l.b16 %v2013
    %v2111 = vunpack.c.l.b16 %v2014
    %v2112 = vunpack.c.h.b16 %v2014
    %v2113 = vunpack.c.l.b16 %v2015
    %v2114 = vunpack.c.l.b16 %v2016
    %v2115 = vunpack.c.h.b16 %v2016
    %v2116 = vunpack.c.l.b16 %v2017
    %v2117 = vpack.c.b16 %v2072, %v2069
    %v2118 = vpack.c.b16 %v2073, %v2070
    %v2119 = vpack.c.b16 %v2074, %v2071
    %v2120 = vpack.c.b16 %v2078, %v2075
    %v2121 = vpack.c.b16 %v2079, %v2076
    %v2122 = vpack.c.b16 %v2080, %v2077
    %v2123 = vpack.c.b16 %v2084, %v2081
    %v2124 = vpack.c.b16 %v2085, %v2082
    %v2125 = vpack.c.b16 %v2086, %v2083
    %v2126 = vpack.c.b16 %v2090, %v2087
    %v2127 = vpack.c.b16 %v2091, %v2088
    %v2128 = vpack.c.b16 %v2092, %v2089
    %v2129 = vpack.c.b16 %v2096, %v2093
    %v2130 = vpack.c.b16 %v2097, %v2094
    %v2131 = vpack.c.b16 %v2098, %v2095
    %v2132 = vpack.c.b16 %v2102, %v2099
    %v2133 = vpack.c.b16 %v2103, %v2100
    %v2134 = vpack.c.b16 %v2104, %v2101
    %v2135 = vpack.c.b16 %v2108, %v2105
    %v2136 = vpack.c.b16 %v2109, %v2106
    %v2137 = vpack.c.b16 %v2110, %v2107
    %v2138 = vpack.c.b16 %v2114, %v2111
    %v2139 = vpack.c.b16 %v2115, %v2112
    %v2140 = vpack.c.b16 %v2116, %v2113
    %2165 = vmatprep.subr.bf16.mxu0 %v2118
    %2166 = vmatpush1.bf16.msra.mxu0 %v2117
    %2167 = vmatprep.subr.bf16.mxu0 %v2121
    %2168 = vmatpush1.bf16.msra.mxu0 %v2120
    %2169 = vmatprep.subr.bf16.mxu0 %v2124
    %2170 = vmatpush1.bf16.msra.mxu0 %v2123
    %2171 = vmatprep.subr.bf16.mxu0 %v2127
    %2172 = vmatpush1.bf16.msra.mxu0 %v2126
    %2173 = vmatprep.subr.bf16.mxu0 %v2130
    %2174 = vmatpush1.bf16.msra.mxu0 %v2129
    %2175 = vmatprep.subr.bf16.mxu0 %v2133
    %2176 = vmatpush1.bf16.msra.mxu0 %v2132
    %2177 = vmatprep.subr.bf16.mxu0 %v2136
    %2178 = vmatpush1.bf16.msra.mxu0 %v2135
    %2179 = vmatprep.subr.bf16.mxu0 %v2139
    %2180 = vmatpush1.bf16.msra.mxu0 %v2138
    %2181 = vmatprep.subr.bf16.mxu0 0
    %2182 = vmatpush1.bf16.msra.mxu0 0
    %2183 = vmatprep.subr.bf16.mxu0 0
    %2184 = vmatpush1.bf16.msra.mxu0 0
    %2185 = vmatprep.subr.bf16.mxu0 0
    %2186 = vmatpush1.bf16.msra.mxu0 0
    %2187 = vmatprep.subr.bf16.mxu0 0
    %2188 = vmatpush1.bf16.msra.mxu0 0
    %2189 = vmatprep.subr.bf16.mxu0 0
    %2190 = vmatpush1.bf16.msra.mxu0 0
    %2191 = vmatprep.subr.bf16.mxu0 0
    %2192 = vmatpush1.bf16.msra.mxu0 0
    %2193 = vmatprep.subr.bf16.mxu0 0
    %2194 = vmatpush1.bf16.msra.mxu0 0
    %2195 = vmatprep.subr.bf16.mxu0 0
    %2196 = vmatpush1.bf16.msra.mxu0 0
    %2197 = vmatprep.mubr.bf16.mxu0 0
    %2198 = vmatmul.mubr.bf16.gmra.mrb[0].mxu0 %v2020
    %v2199 = vpop.f32.mrb[0].mxu0
    %v2200 = vadd.f32 %v2025, %v2199
    %v2201 = vpop.f32.mrb[0].mxu0
    %v2202 = vadd.f32 %v2029, %v2201
    %v2203 = vpop.f32.mrb[0].mxu0
    %v2204 = vadd.f32 %v2025, %v2203
    %v2205 = vpop.f32.mrb[0].mxu0
    %v2206 = vadd.f32 %v2029, %v2205
    %2207 = vdwg.mxu0
    %2208 = vmatprep.subr.bf16.mxu0 0
    %2209 = vmatpush1.bf16.msra.mxu0 %v2119
    %2210 = vmatprep.subr.bf16.mxu0 0
    %2211 = vmatpush1.bf16.msra.mxu0 %v2122
    %2212 = vmatprep.subr.bf16.mxu0 0
    %2213 = vmatpush1.bf16.msra.mxu0 %v2125
    %2214 = vmatprep.subr.bf16.mxu0 0
    %2215 = vmatpush1.bf16.msra.mxu0 %v2128
    %2216 = vmatprep.subr.bf16.mxu0 0
    %2217 = vmatpush1.bf16.msra.mxu0 %v2131
    %2218 = vmatprep.subr.bf16.mxu0 0
    %2219 = vmatpush1.bf16.msra.mxu0 %v2134
    %2220 = vmatprep.subr.bf16.mxu0 0
    %2221 = vmatpush1.bf16.msra.mxu0 %v2137
    %2222 = vmatprep.subr.bf16.mxu0 0
    %2223 = vmatpush1.bf16.msra.mxu0 %v2140
    %2224 = vmatprep.subr.bf16.mxu0 0
    %2225 = vmatpush1.bf16.msra.mxu0 0
    %2226 = vmatprep.subr.bf16.mxu0 0
    %2227 = vmatpush1.bf16.msra.mxu0 0
    %2228 = vmatprep.subr.bf16.mxu0 0
    %2229 = vmatpush1.bf16.msra.mxu0 0
    %2230 = vmatprep.subr.bf16.mxu0 0
    %2231 = vmatpush1.bf16.msra.mxu0 0
    %2232 = vmatprep.subr.bf16.mxu0 0
    %2233 = vmatpush1.bf16.msra.mxu0 0
    %2234 = vmatprep.subr.bf16.mxu0 0
    %2235 = vmatpush1.bf16.msra.mxu0 0
    %2236 = vmatprep.subr.bf16.mxu0 0
    %2237 = vmatpush1.bf16.msra.mxu0 0
    %2238 = vmatprep.subr.bf16.mxu0 0
    %2239 = vmatpush1.bf16.msra.mxu0 0
    %2240 = vmatprep.mubr.bf16.mxu0 0
    %2241 = vmatmul.mubr.bf16.gmra.mrb[0].mxu0 %v2020
    %v2242 = vpop.f32.mrb[0].mxu0
    %v2243 = vadd.f32 %v2033, %v2242
    %v2244 = vpop.f32.mrb[0].mxu0
    %v2245 = vpop.f32.mrb[0].mxu0
    %v2246 = vadd.f32 %v2033, %v2245
    %v2247 = vpop.f32.mrb[0].mxu0
    %2248 = vdwg.mxu0
    %v2249 = vmul.f32 %v2202, %v113
    %v2250 = vmul.f32 %v2206, %v113
    %2251 = vmatprep.subr.mxu0 0.0
    %2252 = vmatpush1.xpose.msra.mxu0 %v2249
    %2253 = vmatprep.subr.mxu0 0.0
    %2254 = vmatpush1.xpose.msra.mxu0 0.0
    %2255 = vmatprep.subr.mxu0 0.0
    %2256 = vmatpush1.xpose.msra.mxu0 0.0
    %2257 = vmatprep.subr.mxu0 0.0
    %2258 = vmatpush1.xpose.msra.mxu0 0.0
    %2259 = vmatprep.subr.mxu0 0.0
    %2260 = vmatpush1.xpose.msra.mxu0 0.0
    %2261 = vmatprep.subr.mxu0 0.0
    %2262 = vmatpush1.xpose.msra.mxu0 0.0
    %2263 = vmatprep.subr.mxu0 0.0
    %2264 = vmatpush1.xpose.msra.mxu0 0.0
    %2265 = vmatprep.subr.mxu0 0.0
    %2266 = vmatpush1.xpose.msra.mxu0 0.0
    %2267 = vmatprep.subr.mxu0 0.0
    %2268 = vmatpush1.xpose.msra.mxu0 0.0
    %2269 = vmatprep.subr.mxu0 0.0
    %2270 = vmatpush1.xpose.msra.mxu0 0.0
    %2271 = vmatprep.subr.mxu0 0.0
    %2272 = vmatpush1.xpose.msra.mxu0 0.0
    %2273 = vmatprep.subr.mxu0 0.0
    %2274 = vmatpush1.xpose.msra.mxu0 0.0
    %2275 = vmatprep.subr.mxu0 0.0
    %2276 = vmatpush1.xpose.msra.mxu0 0.0
    %2277 = vmatprep.subr.mxu0 0.0
    %2278 = vmatpush1.xpose.msra.mxu0 0.0
    %2279 = vmatprep.subr.mxu0 0.0
    %2280 = vmatpush1.xpose.msra.mxu0 0.0
    %2281 = vmatprep.subr.mxu0 0.0
    %2282 = vmatpush1.xpose.msra.mxu0 0.0
    %2283 = vmatprep.subr.mxu0 0.0
    %2284 = vmatpush1.xpose.msra.mxu0 0.0
    %2285 = vmatprep.subr.mxu0 0.0
    %2286 = vmatpush1.xpose.msra.mxu0 0.0
    %2287 = vmatprep.subr.mxu0 0.0
    %2288 = vmatpush1.xpose.msra.mxu0 0.0
    %2289 = vmatprep.subr.mxu0 0.0
    %2290 = vmatpush1.xpose.msra.mxu0 0.0
    %2291 = vmatprep.subr.mxu0 0.0
    %2292 = vmatpush1.xpose.msra.mxu0 0.0
    %2293 = vmatprep.subr.mxu0 0.0
    %2294 = vmatpush1.xpose.msra.mxu0 0.0
    %2295 = vmatprep.subr.mxu0 0.0
    %2296 = vmatpush1.xpose.msra.mxu0 0.0
    %2297 = vmatprep.subr.mxu0 0.0
    %2298 = vmatpush1.xpose.msra.mxu0 0.0
    %2299 = vmatprep.subr.mxu0 0.0
    %2300 = vmatpush1.xpose.msra.mxu0 0.0
    %2301 = vmatprep.subr.mxu0 0.0
    %2302 = vmatpush1.xpose.msra.mxu0 0.0
    %2303 = vmatprep.subr.mxu0 0.0
    %2304 = vmatpush1.xpose.msra.mxu0 0.0
    %2305 = vmatprep.subr.mxu0 0.0
    %2306 = vmatpush1.xpose.msra.mxu0 0.0
    %2307 = vmatprep.subr.mxu0 0.0
    %2308 = vmatpush1.xpose.msra.mxu0 0.0
    %2309 = vmatprep.subr.mxu0 0.0
    %2310 = vmatpush1.xpose.msra.mxu0 0.0
    %2311 = vmatprep.subr.mxu0 0.0
    %2312 = vmatpush1.xpose.msra.mxu0 0.0
    %2313 = vmatprep.subr.mxu0 0.0
    %2314 = vmatpush1.xpose.msra.mxu0 0.0
    %2315 = vmatprep.mubr.f32.mxu0 0.0
    %2316 = vmatmul.mubr.f32.gmra.mrb[0].mxu0 %v2200
    %v2317 = vpop.f32.mrb[0].mxu0
    %v2318 = vadd.f32 0.0, %v2317
    %v2319 = vpop.f32.mrb[0].mxu0
    %2320 = vdwg.mxu0
    %2321 = vmatprep.subr.mxu0 0.0
    %2322 = vmatpush1.xpose.msra.mxu0 %v2250
    %2323 = vmatprep.subr.mxu0 0.0
    %2324 = vmatpush1.xpose.msra.mxu0 0.0
    %2325 = vmatprep.subr.mxu0 0.0
    %2326 = vmatpush1.xpose.msra.mxu0 0.0
    %2327 = vmatprep.subr.mxu0 0.0
    %2328 = vmatpush1.xpose.msra.mxu0 0.0
    %2329 = vmatprep.subr.mxu0 0.0
    %2330 = vmatpush1.xpose.msra.mxu0 0.0
    %2331 = vmatprep.subr.mxu0 0.0
    %2332 = vmatpush1.xpose.msra.mxu0 0.0
    %2333 = vmatprep.subr.mxu0 0.0
    %2334 = vmatpush1.xpose.msra.mxu0 0.0
    %2335 = vmatprep.subr.mxu0 0.0
    %2336 = vmatpush1.xpose.msra.mxu0 0.0
    %2337 = vmatprep.subr.mxu0 0.0
    %2338 = vmatpush1.xpose.msra.mxu0 0.0
    %2339 = vmatprep.subr.mxu0 0.0
    %2340 = vmatpush1.xpose.msra.mxu0 0.0
    %2341 = vmatprep.subr.mxu0 0.0
    %2342 = vmatpush1.xpose.msra.mxu0 0.0
    %2343 = vmatprep.subr.mxu0 0.0
    %2344 = vmatpush1.xpose.msra.mxu0 0.0
    %2345 = vmatprep.subr.mxu0 0.0
    %2346 = vmatpush1.xpose.msra.mxu0 0.0
    %2347 = vmatprep.subr.mxu0 0.0
    %2348 = vmatpush1.xpose.msra.mxu0 0.0
    %2349 = vmatprep.subr.mxu0 0.0
    %2350 = vmatpush1.xpose.msra.mxu0 0.0
    %2351 = vmatprep.subr.mxu0 0.0
    %2352 = vmatpush1.xpose.msra.mxu0 0.0
    %2353 = vmatprep.subr.mxu0 0.0
    %2354 = vmatpush1.xpose.msra.mxu0 0.0
    %2355 = vmatprep.subr.mxu0 0.0
    %2356 = vmatpush1.xpose.msra.mxu0 0.0
    %2357 = vmatprep.subr.mxu0 0.0
    %2358 = vmatpush1.xpose.msra.mxu0 0.0
    %2359 = vmatprep.subr.mxu0 0.0
    %2360 = vmatpush1.xpose.msra.mxu0 0.0
    %2361 = vmatprep.subr.mxu0 0.0
    %2362 = vmatpush1.xpose.msra.mxu0 0.0
    %2363 = vmatprep.subr.mxu0 0.0
    %2364 = vmatpush1.xpose.msra.mxu0 0.0
    %2365 = vmatprep.subr.mxu0 0.0
    %2366 = vmatpush1.xpose.msra.mxu0 0.0
    %2367 = vmatprep.subr.mxu0 0.0
    %2368 = vmatpush1.xpose.msra.mxu0 0.0
    %2369 = vmatprep.subr.mxu0 0.0
    %2370 = vmatpush1.xpose.msra.mxu0 0.0
    %2371 = vmatprep.subr.mxu0 0.0
    %2372 = vmatpush1.xpose.msra.mxu0 0.0
    %2373 = vmatprep.subr.mxu0 0.0
    %2374 = vmatpush1.xpose.msra.mxu0 0.0
    %2375 = vmatprep.subr.mxu0 0.0
    %2376 = vmatpush1.xpose.msra.mxu0 0.0
    %2377 = vmatprep.subr.mxu0 0.0
    %2378 = vmatpush1.xpose.msra.mxu0 0.0
    %2379 = vmatprep.subr.mxu0 0.0
    %2380 = vmatpush1.xpose.msra.mxu0 0.0
    %2381 = vmatprep.subr.mxu0 0.0
    %2382 = vmatpush1.xpose.msra.mxu0 0.0
    %2383 = vmatprep.subr.mxu0 0.0
    %2384 = vmatpush1.xpose.msra.mxu0 0.0
    %2385 = vmatprep.mubr.f32.mxu0 0.0
    %2386 = vmatmul.mubr.f32.gmra.mrb[0].mxu0 %v2204
    %v2387 = vpop.f32.mrb[0].mxu0
    %v2388 = vadd.f32 0.0, %v2387
    %v2389 = vpop.f32.mrb[0].mxu0
    %2390 = vdwg.mxu0
    %v2391 = vmul.f32 %v2318, 0.125
    %v2392 = vmul.f32 %v2388, 0.125
    %v2393 = vadd.f32 %v2391, %v602
    %v2394 = vadd.f32 %v2392, %v606
    %v2395 = vsel %vm611, %v2393, -inf
    %2396 = vmax.xlane.f32.xlu0 %v2395
    %v2397 = vpop.xlane.xlu0 %2396
    %v2398 = vsel %vm611, %v2394, -inf
    %2399 = vmax.xlane.f32.xlu0 %v2398
    %v2400 = vpop.xlane.xlu0 %2399
    %v2401 = vsub.f32 %v2393, %v2397
    %v2402 = vsub.f32 %v2394, %v2400
    %v2403 = vmul.f32 %v2401, 1.442695
    %v2404 = vpow.pop %v2403
    %v2405 = vmul.f32 %v2402, 1.442695
    %v2406 = vpow.pop %v2405
    %v2407 = vsel %vm611, %v2404, 0.0
    %2408 = vadd.xlane.f32.xlu0 %v2407
    %v2409 = vpop.xlane.xlu0 %2408
    %v2410 = vsel %vm611, %v2406, 0.0
    %2411 = vadd.xlane.f32.xlu0 %v2410
    %v2412 = vpop.xlane.xlu0 %2411
    %v2413 = vrcp.pop %v2409
    %v2414 = vrcp.pop %v2412
    %v2415 = vmul.f32 %v2404, %v2413
    %v2416 = vmul.f32 %v2406, %v2414
    %v2417 = vmul.f32 %v2243, %v113
    %v2418 = vmul.f32 %v2246, %v113
    %v2419 = vmul.f32 %v2202, %v118
    %v2420 = vmul.f32 %v2206, %v118
    %2421 = vmatprep.subr.mxu0 0.0
    %2422 = vmatpush1.xpose.msra.mxu0 %v2419
    %2423 = vmatprep.subr.mxu0 0.0
    %2424 = vmatpush1.xpose.msra.mxu0 0.0
    %2425 = vmatprep.subr.mxu0 0.0
    %2426 = vmatpush1.xpose.msra.mxu0 0.0
    %2427 = vmatprep.subr.mxu0 0.0
    %2428 = vmatpush1.xpose.msra.mxu0 0.0
    %2429 = vmatprep.subr.mxu0 0.0
    %2430 = vmatpush1.xpose.msra.mxu0 0.0
    %2431 = vmatprep.subr.mxu0 0.0
    %2432 = vmatpush1.xpose.msra.mxu0 0.0
    %2433 = vmatprep.subr.mxu0 0.0
    %2434 = vmatpush1.xpose.msra.mxu0 0.0
    %2435 = vmatprep.subr.mxu0 0.0
    %2436 = vmatpush1.xpose.msra.mxu0 0.0
    %2437 = vmatprep.subr.mxu0 0.0
    %2438 = vmatpush1.xpose.msra.mxu0 0.0
    %2439 = vmatprep.subr.mxu0 0.0
    %2440 = vmatpush1.xpose.msra.mxu0 0.0
    %2441 = vmatprep.subr.mxu0 0.0
    %2442 = vmatpush1.xpose.msra.mxu0 0.0
    %2443 = vmatprep.subr.mxu0 0.0
    %2444 = vmatpush1.xpose.msra.mxu0 0.0
    %2445 = vmatprep.subr.mxu0 0.0
    %2446 = vmatpush1.xpose.msra.mxu0 0.0
    %2447 = vmatprep.subr.mxu0 0.0
    %2448 = vmatpush1.xpose.msra.mxu0 0.0
    %2449 = vmatprep.subr.mxu0 0.0
    %2450 = vmatpush1.xpose.msra.mxu0 0.0
    %2451 = vmatprep.subr.mxu0 0.0
    %2452 = vmatpush1.xpose.msra.mxu0 0.0
    %2453 = vmatprep.subr.mxu0 0.0
    %2454 = vmatpush1.xpose.msra.mxu0 0.0
    %2455 = vmatprep.subr.mxu0 0.0
    %2456 = vmatpush1.xpose.msra.mxu0 0.0
    %2457 = vmatprep.subr.mxu0 0.0
    %2458 = vmatpush1.xpose.msra.mxu0 0.0
    %2459 = vmatprep.subr.mxu0 0.0
    %2460 = vmatpush1.xpose.msra.mxu0 0.0
    %2461 = vmatprep.subr.mxu0 0.0
    %2462 = vmatpush1.xpose.msra.mxu0 0.0
    %2463 = vmatprep.subr.mxu0 0.0
    %2464 = vmatpush1.xpose.msra.mxu0 0.0
    %2465 = vmatprep.subr.mxu0 0.0
    %2466 = vmatpush1.xpose.msra.mxu0 0.0
    %2467 = vmatprep.subr.mxu0 0.0
    %2468 = vmatpush1.xpose.msra.mxu0 0.0
    %2469 = vmatprep.subr.mxu0 0.0
    %2470 = vmatpush1.xpose.msra.mxu0 0.0
    %2471 = vmatprep.subr.mxu0 0.0
    %2472 = vmatpush1.xpose.msra.mxu0 0.0
    %2473 = vmatprep.subr.mxu0 0.0
    %2474 = vmatpush1.xpose.msra.mxu0 0.0
    %2475 = vmatprep.subr.mxu0 0.0
    %2476 = vmatpush1.xpose.msra.mxu0 0.0
    %2477 = vmatprep.subr.mxu0 0.0
    %2478 = vmatpush1.xpose.msra.mxu0 0.0
    %2479 = vmatprep.subr.mxu0 0.0
    %2480 = vmatpush1.xpose.msra.mxu0 0.0
    %2481 = vmatprep.subr.mxu0 0.0
    %2482 = vmatpush1.xpose.msra.mxu0 0.0
    %2483 = vmatprep.subr.mxu0 0.0
    %2484 = vmatpush1.xpose.msra.mxu0 0.0
    %2485 = vmatprep.mubr.f32.mxu0 0.0
    %2486 = vmatmul.mubr.f32.gmra.mrb[0].mxu0 %v2200
    %v2487 = vpop.f32.mrb[0].mxu0
    %v2488 = vadd.f32 0.0, %v2487
    %v2489 = vpop.f32.mrb[0].mxu0
    %2490 = vdwg.mxu0
    %2491 = vmatprep.subr.mxu0 0.0
    %2492 = vmatpush1.xpose.msra.mxu0 %v2420
    %2493 = vmatprep.subr.mxu0 0.0
    %2494 = vmatpush1.xpose.msra.mxu0 0.0
    %2495 = vmatprep.subr.mxu0 0.0
    %2496 = vmatpush1.xpose.msra.mxu0 0.0
    %2497 = vmatprep.subr.mxu0 0.0
    %2498 = vmatpush1.xpose.msra.mxu0 0.0
    %2499 = vmatprep.subr.mxu0 0.0
    %2500 = vmatpush1.xpose.msra.mxu0 0.0
    %2501 = vmatprep.subr.mxu0 0.0
    %2502 = vmatpush1.xpose.msra.mxu0 0.0
    %2503 = vmatprep.subr.mxu0 0.0
    %2504 = vmatpush1.xpose.msra.mxu0 0.0
    %2505 = vmatprep.subr.mxu0 0.0
    %2506 = vmatpush1.xpose.msra.mxu0 0.0
    %2507 = vmatprep.subr.mxu0 0.0
    %2508 = vmatpush1.xpose.msra.mxu0 0.0
    %2509 = vmatprep.subr.mxu0 0.0
    %2510 = vmatpush1.xpose.msra.mxu0 0.0
    %2511 = vmatprep.subr.mxu0 0.0
    %2512 = vmatpush1.xpose.msra.mxu0 0.0
    %2513 = vmatprep.subr.mxu0 0.0
    %2514 = vmatpush1.xpose.msra.mxu0 0.0
    %2515 = vmatprep.subr.mxu0 0.0
    %2516 = vmatpush1.xpose.msra.mxu0 0.0
    %2517 = vmatprep.subr.mxu0 0.0
    %2518 = vmatpush1.xpose.msra.mxu0 0.0
    %2519 = vmatprep.subr.mxu0 0.0
    %2520 = vmatpush1.xpose.msra.mxu0 0.0
    %2521 = vmatprep.subr.mxu0 0.0
    %2522 = vmatpush1.xpose.msra.mxu0 0.0
    %2523 = vmatprep.subr.mxu0 0.0
    %2524 = vmatpush1.xpose.msra.mxu0 0.0
    %2525 = vmatprep.subr.mxu0 0.0
    %2526 = vmatpush1.xpose.msra.mxu0 0.0
    %2527 = vmatprep.subr.mxu0 0.0
    %2528 = vmatpush1.xpose.msra.mxu0 0.0
    %2529 = vmatprep.subr.mxu0 0.0
    %2530 = vmatpush1.xpose.msra.mxu0 0.0
    %2531 = vmatprep.subr.mxu0 0.0
    %2532 = vmatpush1.xpose.msra.mxu0 0.0
    %2533 = vmatprep.subr.mxu0 0.0
    %2534 = vmatpush1.xpose.msra.mxu0 0.0
    %2535 = vmatprep.subr.mxu0 0.0
    %2536 = vmatpush1.xpose.msra.mxu0 0.0
    %2537 = vmatprep.subr.mxu0 0.0
    %2538 = vmatpush1.xpose.msra.mxu0 0.0
    %2539 = vmatprep.subr.mxu0 0.0
    %2540 = vmatpush1.xpose.msra.mxu0 0.0
    %2541 = vmatprep.subr.mxu0 0.0
    %2542 = vmatpush1.xpose.msra.mxu0 0.0
    %2543 = vmatprep.subr.mxu0 0.0
    %2544 = vmatpush1.xpose.msra.mxu0 0.0
    %2545 = vmatprep.subr.mxu0 0.0
    %2546 = vmatpush1.xpose.msra.mxu0 0.0
    %2547 = vmatprep.subr.mxu0 0.0
    %2548 = vmatpush1.xpose.msra.mxu0 0.0
    %2549 = vmatprep.subr.mxu0 0.0
    %2550 = vmatpush1.xpose.msra.mxu0 0.0
    %2551 = vmatprep.subr.mxu0 0.0
    %2552 = vmatpush1.xpose.msra.mxu0 0.0
    %2553 = vmatprep.subr.mxu0 0.0
    %2554 = vmatpush1.xpose.msra.mxu0 0.0
    %2555 = vmatprep.mubr.f32.mxu0 0.0
    %2556 = vmatmul.mubr.f32.gmra.mrb[0].mxu0 %v2204
    %v2557 = vpop.f32.mrb[0].mxu0
    %v2558 = vadd.f32 0.0, %v2557
    %v2559 = vpop.f32.mrb[0].mxu0
    %2560 = vdwg.mxu0
    %v2561 = vmul.f32 %v2488, 0.125
    %v2562 = vmul.f32 %v2558, 0.125
    %v2563 = vadd.f32 %v2561, %v602
    %v2564 = vadd.f32 %v2562, %v606
    %v2565 = vsel %vm611, %v2563, -inf
    %2566 = vmax.xlane.f32.xlu0 %v2565
    %v2567 = vpop.xlane.xlu0 %2566
    %v2568 = vsel %vm611, %v2564, -inf
    %2569 = vmax.xlane.f32.xlu0 %v2568
    %v2570 = vpop.xlane.xlu0 %2569
    %v2571 = vsub.f32 %v2563, %v2567
    %v2572 = vsub.f32 %v2564, %v2570
    %v2573 = vmul.f32 %v2571, 1.442695
    %v2574 = vpow.pop %v2573
    %v2575 = vmul.f32 %v2572, 1.442695
    %v2576 = vpow.pop %v2575
    %v2577 = vsel %vm611, %v2574, 0.0
    %2578 = vadd.xlane.f32.xlu0 %v2577
    %v2579 = vpop.xlane.xlu0 %2578
    %v2580 = vsel %vm611, %v2576, 0.0
    %2581 = vadd.xlane.f32.xlu0 %v2580
    %v2582 = vpop.xlane.xlu0 %2581
    %v2583 = vrcp.pop %v2579
    %v2584 = vrcp.pop %v2582
    %v2585 = vmul.f32 %v2574, %v2583
    %v2586 = vmul.f32 %v2576, %v2584
    %v2587 = vmul.f32 %v2243, %v118
    %v2588 = vmul.f32 %v2246, %v118
    %v2590 = vsel %vm611, %v2585, 0
    %2592 = vmatprep.subr.mxu0 0.0
    %2593 = vmatpush1.msra.mxu0 %v2587
    %2594 = vmatprep.subr.mxu0 0.0
    %2595 = vmatpush1.msra.mxu0 0.0
    %2596 = vmatprep.subr.mxu0 0.0
    %2597 = vmatpush1.msra.mxu0 0.0
    %2598 = vmatprep.subr.mxu0 0.0
    %2599 = vmatpush1.msra.mxu0 0.0
    %2600 = vmatprep.subr.mxu0 0.0
    %2601 = vmatpush1.msra.mxu0 0.0
    %2602 = vmatprep.subr.mxu0 0.0
    %2603 = vmatpush1.msra.mxu0 0.0
    %2604 = vmatprep.subr.mxu0 0.0
    %2605 = vmatpush1.msra.mxu0 0.0
    %2606 = vmatprep.subr.mxu0 0.0
    %2607 = vmatpush1.msra.mxu0 0.0
    %2608 = vmatprep.subr.mxu0 0.0
    %2609 = vmatpush1.msra.mxu0 0.0
    %2610 = vmatprep.subr.mxu0 0.0
    %2611 = vmatpush1.msra.mxu0 0.0
    %2612 = vmatprep.subr.mxu0 0.0
    %2613 = vmatpush1.msra.mxu0 0.0
    %2614 = vmatprep.subr.mxu0 0.0
    %2615 = vmatpush1.msra.mxu0 0.0
    %2616 = vmatprep.subr.mxu0 0.0
    %2617 = vmatpush1.msra.mxu0 0.0
    %2618 = vmatprep.subr.mxu0 0.0
    %2619 = vmatpush1.msra.mxu0 0.0
    %2620 = vmatprep.subr.mxu0 0.0
    %2621 = vmatpush1.msra.mxu0 0.0
    %2622 = vmatprep.subr.mxu0 0.0
    %2623 = vmatpush1.msra.mxu0 0.0
    %2624 = vmatprep.subr.mxu0 0.0
    %2625 = vmatpush1.msra.mxu0 0.0
    %2626 = vmatprep.subr.mxu0 0.0
    %2627 = vmatpush1.msra.mxu0 0.0
    %2628 = vmatprep.subr.mxu0 0.0
    %2629 = vmatpush1.msra.mxu0 0.0
    %2630 = vmatprep.subr.mxu0 0.0
    %2631 = vmatpush1.msra.mxu0 0.0
    %2632 = vmatprep.subr.mxu0 0.0
    %2633 = vmatpush1.msra.mxu0 0.0
    %2634 = vmatprep.subr.mxu0 0.0
    %2635 = vmatpush1.msra.mxu0 0.0
    %2636 = vmatprep.subr.mxu0 0.0
    %2637 = vmatpush1.msra.mxu0 0.0
    %2638 = vmatprep.subr.mxu0 0.0
    %2639 = vmatpush1.msra.mxu0 0.0
    %2640 = vmatprep.subr.mxu0 0.0
    %2641 = vmatpush1.msra.mxu0 0.0
    %2642 = vmatprep.subr.mxu0 0.0
    %2643 = vmatpush1.msra.mxu0 0.0
    %2644 = vmatprep.subr.mxu0 0.0
    %2645 = vmatpush1.msra.mxu0 0.0
    %2646 = vmatprep.subr.mxu0 0.0
    %2647 = vmatpush1.msra.mxu0 0.0
    %2648 = vmatprep.subr.mxu0 0.0
    %2649 = vmatpush1.msra.mxu0 0.0
    %2650 = vmatprep.subr.mxu0 0.0
    %2651 = vmatpush1.msra.mxu0 0.0
    %2652 = vmatprep.subr.mxu0 0.0
    %2653 = vmatpush1.msra.mxu0 0.0
    %2654 = vmatprep.subr.mxu0 0.0
    %2655 = vmatpush1.msra.mxu0 0.0
    %2656 = vmatprep.mubr.f32.mxu0 0.0
    %2657 = vmatmul.mubr.f32.gmra.mrb[0].mxu0 %v2590
    %v2658 = vpop.f32.mrb[0].mxu0
    %v2659 = vadd.f32 0.0, %v2658
    %v2660 = vpop.f32.mrb[0].mxu0
    %2661 = vdwg.mxu0
    %v2663 = vsel %vm611, %v2586, 0
    %2665 = vmatprep.subr.mxu0 0.0
    %2666 = vmatpush1.msra.mxu0 %v2588
    %2667 = vmatprep.subr.mxu0 0.0
    %2668 = vmatpush1.msra.mxu0 0.0
    %2669 = vmatprep.subr.mxu0 0.0
    %2670 = vmatpush1.msra.mxu0 0.0
    %2671 = vmatprep.subr.mxu0 0.0
    %2672 = vmatpush1.msra.mxu0 0.0
    %2673 = vmatprep.subr.mxu0 0.0
    %2674 = vmatpush1.msra.mxu0 0.0
    %2675 = vmatprep.subr.mxu0 0.0
    %2676 = vmatpush1.msra.mxu0 0.0
    %2677 = vmatprep.subr.mxu0 0.0
    %2678 = vmatpush1.msra.mxu0 0.0
    %2679 = vmatprep.subr.mxu0 0.0
    %2680 = vmatpush1.msra.mxu0 0.0
    %2681 = vmatprep.subr.mxu0 0.0
    %2682 = vmatpush1.msra.mxu0 0.0
    %2683 = vmatprep.subr.mxu0 0.0
    %2684 = vmatpush1.msra.mxu0 0.0
    %2685 = vmatprep.subr.mxu0 0.0
    %2686 = vmatpush1.msra.mxu0 0.0
    %2687 = vmatprep.subr.mxu0 0.0
    %2688 = vmatpush1.msra.mxu0 0.0
    %2689 = vmatprep.subr.mxu0 0.0
    %2690 = vmatpush1.msra.mxu0 0.0
    %2691 = vmatprep.subr.mxu0 0.0
    %2692 = vmatpush1.msra.mxu0 0.0
    %2693 = vmatprep.subr.mxu0 0.0
    %2694 = vmatpush1.msra.mxu0 0.0
    %2695 = vmatprep.subr.mxu0 0.0
    %2696 = vmatpush1.msra.mxu0 0.0
    %2697 = vmatprep.subr.mxu0 0.0
    %2698 = vmatpush1.msra.mxu0 0.0
    %2699 = vmatprep.subr.mxu0 0.0
    %2700 = vmatpush1.msra.mxu0 0.0
    %2701 = vmatprep.subr.mxu0 0.0
    %2702 = vmatpush1.msra.mxu0 0.0
    %2703 = vmatprep.subr.mxu0 0.0
    %2704 = vmatpush1.msra.mxu0 0.0
    %2705 = vmatprep.subr.mxu0 0.0
    %2706 = vmatpush1.msra.mxu0 0.0
    %2707 = vmatprep.subr.mxu0 0.0
    %2708 = vmatpush1.msra.mxu0 0.0
    %2709 = vmatprep.subr.mxu0 0.0
    %2710 = vmatpush1.msra.mxu0 0.0
    %2711 = vmatprep.subr.mxu0 0.0
    %2712 = vmatpush1.msra.mxu0 0.0
    %2713 = vmatprep.subr.mxu0 0.0
    %2714 = vmatpush1.msra.mxu0 0.0
    %2715 = vmatprep.subr.mxu0 0.0
    %2716 = vmatpush1.msra.mxu0 0.0
    %2717 = vmatprep.subr.mxu0 0.0
    %2718 = vmatpush1.msra.mxu0 0.0
    %2719 = vmatprep.subr.mxu0 0.0
    %2720 = vmatpush1.msra.mxu0 0.0
    %2721 = vmatprep.subr.mxu0 0.0
    %2722 = vmatpush1.msra.mxu0 0.0
    %2723 = vmatprep.subr.mxu0 0.0
    %2724 = vmatpush1.msra.mxu0 0.0
    %2725 = vmatprep.subr.mxu0 0.0
    %2726 = vmatpush1.msra.mxu0 0.0
    %2727 = vmatprep.subr.mxu0 0.0
    %2728 = vmatpush1.msra.mxu0 0.0
    %2729 = vmatprep.mubr.f32.mxu0 0.0
    %2730 = vmatmul.mubr.f32.gmra.mrb[0].mxu0 %v2663
    %v2731 = vpop.f32.mrb[0].mxu0
    %v2732 = vadd.f32 0.0, %v2731
    %v2733 = vpop.f32.mrb[0].mxu0
    %2734 = vdwg.mxu0
    %v2736 = vsel %vm611, %v2415, 0
    %2738 = vmatprep.subr.mxu0 0.0
    %2739 = vmatpush1.msra.mxu0 %v2417
    %2740 = vmatprep.subr.mxu0 0.0
    %2741 = vmatpush1.msra.mxu0 0.0
    %2742 = vmatprep.subr.mxu0 0.0
    %2743 = vmatpush1.msra.mxu0 0.0
    %2744 = vmatprep.subr.mxu0 0.0
    %2745 = vmatpush1.msra.mxu0 0.0
    %2746 = vmatprep.subr.mxu0 0.0
    %2747 = vmatpush1.msra.mxu0 0.0
    %2748 = vmatprep.subr.mxu0 0.0
    %2749 = vmatpush1.msra.mxu0 0.0
    %2750 = vmatprep.subr.mxu0 0.0
    %2751 = vmatpush1.msra.mxu0 0.0
    %2752 = vmatprep.subr.mxu0 0.0
    %2753 = vmatpush1.msra.mxu0 0.0
    %2754 = vmatprep.subr.mxu0 0.0
    %2755 = vmatpush1.msra.mxu0 0.0
    %2756 = vmatprep.subr.mxu0 0.0
    %2757 = vmatpush1.msra.mxu0 0.0
    %2758 = vmatprep.subr.mxu0 0.0
    %2759 = vmatpush1.msra.mxu0 0.0
    %2760 = vmatprep.subr.mxu0 0.0
    %2761 = vmatpush1.msra.mxu0 0.0
    %2762 = vmatprep.subr.mxu0 0.0
    %2763 = vmatpush1.msra.mxu0 0.0
    %2764 = vmatprep.subr.mxu0 0.0
    %2765 = vmatpush1.msra.mxu0 0.0
    %2766 = vmatprep.subr.mxu0 0.0
    %2767 = vmatpush1.msra.mxu0 0.0
    %2768 = vmatprep.subr.mxu0 0.0
    %2769 = vmatpush1.msra.mxu0 0.0
    %2770 = vmatprep.subr.mxu0 0.0
    %2771 = vmatpush1.msra.mxu0 0.0
    %2772 = vmatprep.subr.mxu0 0.0
    %2773 = vmatpush1.msra.mxu0 0.0
    %2774 = vmatprep.subr.mxu0 0.0
    %2775 = vmatpush1.msra.mxu0 0.0
    %2776 = vmatprep.subr.mxu0 0.0
    %2777 = vmatpush1.msra.mxu0 0.0
    %2778 = vmatprep.subr.mxu0 0.0
    %2779 = vmatpush1.msra.mxu0 0.0
    %2780 = vmatprep.subr.mxu0 0.0
    %2781 = vmatpush1.msra.mxu0 0.0
    %2782 = vmatprep.subr.mxu0 0.0
    %2783 = vmatpush1.msra.mxu0 0.0
    %2784 = vmatprep.subr.mxu0 0.0
    %2785 = vmatpush1.msra.mxu0 0.0
    %2786 = vmatprep.subr.mxu0 0.0
    %2787 = vmatpush1.msra.mxu0 0.0
    %2788 = vmatprep.subr.mxu0 0.0
    %2789 = vmatpush1.msra.mxu0 0.0
    %2790 = vmatprep.subr.mxu0 0.0
    %2791 = vmatpush1.msra.mxu0 0.0
    %2792 = vmatprep.subr.mxu0 0.0
    %2793 = vmatpush1.msra.mxu0 0.0
    %2794 = vmatprep.subr.mxu0 0.0
    %2795 = vmatpush1.msra.mxu0 0.0
    %2796 = vmatprep.subr.mxu0 0.0
    %2797 = vmatpush1.msra.mxu0 0.0
    %2798 = vmatprep.subr.mxu0 0.0
    %2799 = vmatpush1.msra.mxu0 0.0
    %2800 = vmatprep.subr.mxu0 0.0
    %2801 = vmatpush1.msra.mxu0 0.0
    %2802 = vmatprep.mubr.f32.mxu0 0.0
    %2803 = vmatmul.mubr.f32.gmra.mrb[0].mxu0 %v2736
    %v2804 = vpop.f32.mrb[0].mxu0
    %v2805 = vadd.f32 %v2659, %v2804
    %v2806 = vpop.f32.mrb[0].mxu0
    %2807 = vdwg.mxu0
    %v2809 = vsel %vm611, %v2416, 0
    %2811 = vmatprep.subr.mxu0 0.0
    %2812 = vmatpush1.msra.mxu0 %v2418
    %2813 = vmatprep.subr.mxu0 0.0
    %2814 = vmatpush1.msra.mxu0 0.0
    %2815 = vmatprep.subr.mxu0 0.0
    %2816 = vmatpush1.msra.mxu0 0.0
    %2817 = vmatprep.subr.mxu0 0.0
    %2818 = vmatpush1.msra.mxu0 0.0
    %2819 = vmatprep.subr.mxu0 0.0
    %2820 = vmatpush1.msra.mxu0 0.0
    %2821 = vmatprep.subr.mxu0 0.0
    %2822 = vmatpush1.msra.mxu0 0.0
    %2823 = vmatprep.subr.mxu0 0.0
    %2824 = vmatpush1.msra.mxu0 0.0
    %2825 = vmatprep.subr.mxu0 0.0
    %2826 = vmatpush1.msra.mxu0 0.0
    %2827 = vmatprep.subr.mxu0 0.0
    %2828 = vmatpush1.msra.mxu0 0.0
    %2829 = vmatprep.subr.mxu0 0.0
    %2830 = vmatpush1.msra.mxu0 0.0
    %2831 = vmatprep.subr.mxu0 0.0
    %2832 = vmatpush1.msra.mxu0 0.0
    %2833 = vmatprep.subr.mxu0 0.0
    %2834 = vmatpush1.msra.mxu0 0.0
    %2835 = vmatprep.subr.mxu0 0.0
    %2836 = vmatpush1.msra.mxu0 0.0
    %2837 = vmatprep.subr.mxu0 0.0
    %2838 = vmatpush1.msra.mxu0 0.0
    %2839 = vmatprep.subr.mxu0 0.0
    %2840 = vmatpush1.msra.mxu0 0.0
    %2841 = vmatprep.subr.mxu0 0.0
    %2842 = vmatpush1.msra.mxu0 0.0
    %2843 = vmatprep.subr.mxu0 0.0
    %2844 = vmatpush1.msra.mxu0 0.0
    %2845 = vmatprep.subr.mxu0 0.0
    %2846 = vmatpush1.msra.mxu0 0.0
    %2847 = vmatprep.subr.mxu0 0.0
    %2848 = vmatpush1.msra.mxu0 0.0
    %2849 = vmatprep.subr.mxu0 0.0
    %2850 = vmatpush1.msra.mxu0 0.0
    %2851 = vmatprep.subr.mxu0 0.0
    %2852 = vmatpush1.msra.mxu0 0.0
    %2853 = vmatprep.subr.mxu0 0.0
    %2854 = vmatpush1.msra.mxu0 0.0
    %2855 = vmatprep.subr.mxu0 0.0
    %2856 = vmatpush1.msra.mxu0 0.0
    %2857 = vmatprep.subr.mxu0 0.0
    %2858 = vmatpush1.msra.mxu0 0.0
    %2859 = vmatprep.subr.mxu0 0.0
    %2860 = vmatpush1.msra.mxu0 0.0
    %2861 = vmatprep.subr.mxu0 0.0
    %2862 = vmatpush1.msra.mxu0 0.0
    %2863 = vmatprep.subr.mxu0 0.0
    %2864 = vmatpush1.msra.mxu0 0.0
    %2865 = vmatprep.subr.mxu0 0.0
    %2866 = vmatpush1.msra.mxu0 0.0
    %2867 = vmatprep.subr.mxu0 0.0
    %2868 = vmatpush1.msra.mxu0 0.0
    %2869 = vmatprep.subr.mxu0 0.0
    %2870 = vmatpush1.msra.mxu0 0.0
    %2871 = vmatprep.subr.mxu0 0.0
    %2872 = vmatpush1.msra.mxu0 0.0
    %2873 = vmatprep.subr.mxu0 0.0
    %2874 = vmatpush1.msra.mxu0 0.0
    %2875 = vmatprep.mubr.f32.mxu0 0.0
    %2876 = vmatmul.mubr.f32.gmra.mrb[0].mxu0 %v2809
    %v2877 = vpop.f32.mrb[0].mxu0
    %v2878 = vadd.f32 %v2732, %v2877
    %v2879 = vpop.f32.mrb[0].mxu0
    %2880 = vdwg.mxu0
    %s2881 = scalar_lea.vmem %s6, 64
    %v2882 = vld [vmem:[%s2881] sm:$0xf]
    %v2883 = vld [vmem:[%s2881 + $0x4] sm:$0xf]
    %v2884 = vld [vmem:[%s2881 + $0x8] sm:$0xf]
    %v2885 = vld [vmem:[%s2881 + $0xc] sm:$0xf]
    %v2886 = vld [vmem:[%s2881 + $0x10] sm:$0xf]
    %v2887 = vld [vmem:[%s2881 + $0x14] sm:$0xf]
    %v2888 = vld [vmem:[%s2881 + $0x18] sm:$0xf]
    %v2889 = vld [vmem:[%s2881 + $0x1c] sm:$0xf]
    %v2890 = vld [vmem:[%s2881 + $0x20] sm:$0xf]
    %v2891 = vld [vmem:[%s2881 + $0x24] sm:$0xf]
    %v2892 = vld [vmem:[%s2881 + $0x28] sm:$0xf]
    %v2893 = vld [vmem:[%s2881 + $0x2c] sm:$0xf]
    %v2894 = vld [vmem:[%s2881 + $0x30] sm:$0xf]
    %v2895 = vld [vmem:[%s2881 + $0x34] sm:$0xf]
    %v2896 = vld [vmem:[%s2881 + $0x38] sm:$0xf]
    %v2897 = vld [vmem:[%s2881 + $0x3c] sm:$0xf]
    %s2898 = scalar_lea.vmem %s7, 1
    %v2899 = vld [vmem:[%s2898] sm:$0x1]
    %v2900 = vpack.c.bf16 %v2878, %v2805
    %v2902 = vlaneseq
    %v2903 = vshrl.u32 %v2902, 7
    %v2904 = vsub.s32 0, %v2903
    %v2905 = vrot.slane %v2899, %v2904
    %v2923 = vunpack.c.l.b16 %v2882
    %v2924 = vunpack.c.l.b16 %v2883
    %v2925 = vunpack.c.l.b16 %v2884
    %v2926 = vunpack.c.l.b16 %v2885
    %v2927 = vunpack.c.l.b16 %v2886
    %v2928 = vunpack.c.l.b16 %v2887
    %v2929 = vunpack.c.l.b16 %v2888
    %v2930 = vunpack.c.l.b16 %v2889
    %v2931 = vunpack.c.l.b16 %v2890
    %v2932 = vunpack.c.l.b16 %v2891
    %v2933 = vunpack.c.l.b16 %v2892
    %v2934 = vunpack.c.l.b16 %v2893
    %v2935 = vunpack.c.l.b16 %v2894
    %v2936 = vunpack.c.l.b16 %v2895
    %v2937 = vunpack.c.l.b16 %v2896
    %v2938 = vunpack.c.l.b16 %v2897
    %v2939 = vpack.c.b16 %v2924, %v2923
    %v2940 = vpack.c.b16 %v2926, %v2925
    %v2941 = vpack.c.b16 %v2928, %v2927
    %v2942 = vpack.c.b16 %v2930, %v2929
    %v2943 = vpack.c.b16 %v2932, %v2931
    %v2944 = vpack.c.b16 %v2934, %v2933
    %v2945 = vpack.c.b16 %v2936, %v2935
    %v2946 = vpack.c.b16 %v2938, %v2937
    %2955 = vmatprep.subr.bf16.mxu0 0
    %2956 = vmatpush1.bf16.msra.mxu0 %v2939
    %2957 = vmatprep.subr.bf16.mxu0 0
    %2958 = vmatpush1.bf16.msra.mxu0 %v2940
    %2959 = vmatprep.subr.bf16.mxu0 0
    %2960 = vmatpush1.bf16.msra.mxu0 %v2941
    %2961 = vmatprep.subr.bf16.mxu0 0
    %2962 = vmatpush1.bf16.msra.mxu0 %v2942
    %2963 = vmatprep.subr.bf16.mxu0 0
    %2964 = vmatpush1.bf16.msra.mxu0 %v2943
    %2965 = vmatprep.subr.bf16.mxu0 0
    %2966 = vmatpush1.bf16.msra.mxu0 %v2944
    %2967 = vmatprep.subr.bf16.mxu0 0
    %2968 = vmatpush1.bf16.msra.mxu0 %v2945
    %2969 = vmatprep.subr.bf16.mxu0 0
    %2970 = vmatpush1.bf16.msra.mxu0 %v2946
    %2971 = vmatprep.subr.bf16.mxu0 0
    %2972 = vmatpush1.bf16.msra.mxu0 0
    %2973 = vmatprep.subr.bf16.mxu0 0
    %2974 = vmatpush1.bf16.msra.mxu0 0
    %2975 = vmatprep.subr.bf16.mxu0 0
    %2976 = vmatpush1.bf16.msra.mxu0 0
    %2977 = vmatprep.subr.bf16.mxu0 0
    %2978 = vmatpush1.bf16.msra.mxu0 0
    %2979 = vmatprep.subr.bf16.mxu0 0
    %2980 = vmatpush1.bf16.msra.mxu0 0
    %2981 = vmatprep.subr.bf16.mxu0 0
    %2982 = vmatpush1.bf16.msra.mxu0 0
    %2983 = vmatprep.subr.bf16.mxu0 0
    %2984 = vmatpush1.bf16.msra.mxu0 0
    %2985 = vmatprep.subr.bf16.mxu0 0
    %2986 = vmatpush1.bf16.msra.mxu0 0
    %2987 = vmatprep.mubr.bf16.mxu0 0
    %2988 = vmatmul.mubr.bf16.gmra.mrb[0].mxu0 %v2900
    %v2989 = vpop.f32.mrb[0].mxu0
    %v2990 = vadd.f32 %v2905, %v2989
    %v2991 = vpop.f32.mrb[0].mxu0
    %v2992 = vpop.f32.mrb[0].mxu0
    %v2993 = vadd.f32 %v2905, %v2992
    %v2994 = vpop.f32.mrb[0].mxu0
    %2995 = vdwg.mxu0
    %v2996 = vadd.f32 %v1983, %v2990
    %v2997 = vadd.f32 %v1984, %v2993
    %s2998 = scalar_lea.vmem %s8, 1
    %v2999 = vld [vmem:[%s2998] sm:$0x1]
    %s3000 = scalar_lea.vmem %s9, 1
    %v3001 = vld [vmem:[%s3000] sm:$0x1]
    %3002 = vadd.xlane.f32.xlu0 %v2996
    %v3003 = vpop.xlane.xlu0 %3002
    %3004 = vadd.xlane.f32.xlu0 %v2997
    %v3005 = vpop.xlane.xlu0 %3004
    %v3006 = vmul.f32 %v3003, %v156
    %v3007 = vmul.f32 %v3005, %v156
    %v3008 = vsub.f32 %v2996, %v3006
    %v3009 = vsub.f32 %v2997, %v3007
    %v3010 = vmul.f32 %v3008, %v3008
    %v3011 = vmul.f32 %v3009, %v3009
    %3012 = vadd.xlane.f32.xlu0 %v3010
    %v3013 = vpop.xlane.xlu0 %3012
    %3014 = vadd.xlane.f32.xlu0 %v3011
    %v3015 = vpop.xlane.xlu0 %3014
    %v3016 = vmul.f32 %v3013, %v156
    %v3017 = vmul.f32 %v3015, %v156
    %v3018 = vadd.f32 %v3016, 1e-12
    %v3019 = vadd.f32 %v3017, 1e-12
    %v3020 = vrsqrt.pop %v3018
    %v3021 = vrsqrt.pop %v3019
    %v3022 = vmul.f32 %v3008, %v3020
    %v3023 = vmul.f32 %v3009, %v3021
    %v3025 = vlaneseq
    %v3026 = vshrl.u32 %v3025, 7
    %v3027 = vsub.s32 0, %v3026
    %v3028 = vrot.slane %v2999, %v3027
    %v3030 = vmul.f32 %v3022, %v3028
    %v3031 = vmul.f32 %v3023, %v3028
    %v3033 = vlaneseq
    %v3034 = vshrl.u32 %v3033, 7
    %v3035 = vsub.s32 0, %v3034
    %v3036 = vrot.slane %v3001, %v3035
    %v3038 = vadd.f32 %v3030, %v3036
    %v3039 = vadd.f32 %v3031, %v3036
    %s3040 = scalar_lea.vmem [#allocation4], 256
    %v3041 = vld [vmem:[%s3040] sm:$0xff]
    %v3042 = vld [vmem:[%s3040 + $0x8] sm:$0xff]
    %v3043 = vld [vmem:[%s3040 + $0x10] sm:$0xff]
    %v3044 = vld [vmem:[%s3040 + $0x18] sm:$0xff]
    %v3045 = vld [vmem:[%s3040 + $0x20] sm:$0xff]
    %v3046 = vld [vmem:[%s3040 + $0x28] sm:$0xff]
    %v3047 = vld [vmem:[%s3040 + $0x30] sm:$0xff]
    %v3048 = vld [vmem:[%s3040 + $0x38] sm:$0xff]
    %v3049 = vld [vmem:[%s3040 + $0x40] sm:$0xff]
    %v3050 = vld [vmem:[%s3040 + $0x48] sm:$0xff]
    %v3051 = vld [vmem:[%s3040 + $0x50] sm:$0xff]
    %v3052 = vld [vmem:[%s3040 + $0x58] sm:$0xff]
    %v3053 = vld [vmem:[%s3040 + $0x60] sm:$0xff]
    %v3054 = vld [vmem:[%s3040 + $0x68] sm:$0xff]
    %v3055 = vld [vmem:[%s3040 + $0x70] sm:$0xff]
    %v3056 = vld [vmem:[%s3040 + $0x78] sm:$0xff]
    %v3057 = vld [vmem:[%s3040 + $0x80] sm:$0xff]
    %v3058 = vld [vmem:[%s3040 + $0x88] sm:$0xff]
    %v3059 = vld [vmem:[%s3040 + $0x90] sm:$0xff]
    %v3060 = vld [vmem:[%s3040 + $0x98] sm:$0xff]
    %v3061 = vld [vmem:[%s3040 + $0xa0] sm:$0xff]
    %v3062 = vld [vmem:[%s3040 + $0xa8] sm:$0xff]
    %v3063 = vld [vmem:[%s3040 + $0xb0] sm:$0xff]
    %v3064 = vld [vmem:[%s3040 + $0xb8] sm:$0xff]
    %v3065 = vld [vmem:[%s3040 + $0xc0] sm:$0xff]
    %v3066 = vld [vmem:[%s3040 + $0xc8] sm:$0xff]
    %v3067 = vld [vmem:[%s3040 + $0xd0] sm:$0xff]
    %v3068 = vld [vmem:[%s3040 + $0xd8] sm:$0xff]
    %v3069 = vld [vmem:[%s3040 + $0xe0] sm:$0xff]
    %v3070 = vld [vmem:[%s3040 + $0xe8] sm:$0xff]
    %v3071 = vld [vmem:[%s3040 + $0xf0] sm:$0xff]
    %v3072 = vld [vmem:[%s3040 + $0xf8] sm:$0xff]
    %s3073 = scalar_lea.vmem %s11, 4
    %v3074 = vld [vmem:[%s3073] sm:$0xf]
    %v3075 = vpack.c.bf16 %v3039, %v3038
    %v3077 = vlaneseq
    %v3078 = vshrl.u32 %v3077, 7
    %v3079 = vsub.s32 0, %v3078
    %v3080 = vrot.slane %v3074, %v3079
    %v3081 = vlaneseq
    %v3082 = vshrl.u32 %v3081, 7
    %v3083 = vsub.s32 1, %v3082
    %v3084 = vrot.slane %v3074, %v3083
    %v3085 = vlaneseq
    %v3086 = vshrl.u32 %v3085, 7
    %v3087 = vsub.s32 2, %v3086
    %v3088 = vrot.slane %v3074, %v3087
    %v3089 = vlaneseq
    %v3090 = vshrl.u32 %v3089, 7
    %v3091 = vsub.s32 3, %v3090
    %v3092 = vrot.slane %v3074, %v3091
    %v3129 = vunpack.c.l.b16 %v3041
    %v3130 = vunpack.c.h.b16 %v3041
    %v3131 = vunpack.c.l.b16 %v3042
    %v3132 = vunpack.c.h.b16 %v3042
    %v3133 = vunpack.c.l.b16 %v3043
    %v3134 = vunpack.c.h.b16 %v3043
    %v3135 = vunpack.c.l.b16 %v3044
    %v3136 = vunpack.c.h.b16 %v3044
    %v3137 = vunpack.c.l.b16 %v3045
    %v3138 = vunpack.c.h.b16 %v3045
    %v3139 = vunpack.c.l.b16 %v3046
    %v3140 = vunpack.c.h.b16 %v3046
    %v3141 = vunpack.c.l.b16 %v3047
    %v3142 = vunpack.c.h.b16 %v3047
    %v3143 = vunpack.c.l.b16 %v3048
    %v3144 = vunpack.c.h.b16 %v3048
    %v3145 = vunpack.c.l.b16 %v3049
    %v3146 = vunpack.c.h.b16 %v3049
    %v3147 = vunpack.c.l.b16 %v3050
    %v3148 = vunpack.c.h.b16 %v3050
    %v3149 = vunpack.c.l.b16 %v3051
    %v3150 = vunpack.c.h.b16 %v3051
    %v3151 = vunpack.c.l.b16 %v3052
    %v3152 = vunpack.c.h.b16 %v3052
    %v3153 = vunpack.c.l.b16 %v3053
    %v3154 = vunpack.c.h.b16 %v3053
    %v3155 = vunpack.c.l.b16 %v3054
    %v3156 = vunpack.c.h.b16 %v3054
    %v3157 = vunpack.c.l.b16 %v3055
    %v3158 = vunpack.c.h.b16 %v3055
    %v3159 = vunpack.c.l.b16 %v3056
    %v3160 = vunpack.c.h.b16 %v3056
    %v3161 = vunpack.c.l.b16 %v3057
    %v3162 = vunpack.c.h.b16 %v3057
    %v3163 = vunpack.c.l.b16 %v3058
    %v3164 = vunpack.c.h.b16 %v3058
    %v3165 = vunpack.c.l.b16 %v3059
    %v3166 = vunpack.c.h.b16 %v3059
    %v3167 = vunpack.c.l.b16 %v3060
    %v3168 = vunpack.c.h.b16 %v3060
    %v3169 = vunpack.c.l.b16 %v3061
    %v3170 = vunpack.c.h.b16 %v3061
    %v3171 = vunpack.c.l.b16 %v3062
    %v3172 = vunpack.c.h.b16 %v3062
    %v3173 = vunpack.c.l.b16 %v3063
    %v3174 = vunpack.c.h.b16 %v3063
    %v3175 = vunpack.c.l.b16 %v3064
    %v3176 = vunpack.c.h.b16 %v3064
    %v3177 = vunpack.c.l.b16 %v3065
    %v3178 = vunpack.c.h.b16 %v3065
    %v3179 = vunpack.c.l.b16 %v3066
    %v3180 = vunpack.c.h.b16 %v3066
    %v3181 = vunpack.c.l.b16 %v3067
    %v3182 = vunpack.c.h.b16 %v3067
    %v3183 = vunpack.c.l.b16 %v3068
    %v3184 = vunpack.c.h.b16 %v3068
    %v3185 = vunpack.c.l.b16 %v3069
    %v3186 = vunpack.c.h.b16 %v3069
    %v3187 = vunpack.c.l.b16 %v3070
    %v3188 = vunpack.c.h.b16 %v3070
    %v3189 = vunpack.c.l.b16 %v3071
    %v3190 = vunpack.c.h.b16 %v3071
    %v3191 = vunpack.c.l.b16 %v3072
    %v3192 = vunpack.c.h.b16 %v3072
    %v3193 = vpack.c.b16 %v3133, %v3129
    %v3194 = vpack.c.b16 %v3134, %v3130
    %v3195 = vpack.c.b16 %v3135, %v3131
    %v3196 = vpack.c.b16 %v3136, %v3132
    %v3197 = vpack.c.b16 %v3141, %v3137
    %v3198 = vpack.c.b16 %v3142, %v3138
    %v3199 = vpack.c.b16 %v3143, %v3139
    %v3200 = vpack.c.b16 %v3144, %v3140
    %v3201 = vpack.c.b16 %v3149, %v3145
    %v3202 = vpack.c.b16 %v3150, %v3146
    %v3203 = vpack.c.b16 %v3151, %v3147
    %v3204 = vpack.c.b16 %v3152, %v3148
    %v3205 = vpack.c.b16 %v3157, %v3153
    %v3206 = vpack.c.b16 %v3158, %v3154
    %v3207 = vpack.c.b16 %v3159, %v3155
    %v3208 = vpack.c.b16 %v3160, %v3156
    %v3209 = vpack.c.b16 %v3165, %v3161
    %v3210 = vpack.c.b16 %v3166, %v3162
    %v3211 = vpack.c.b16 %v3167, %v3163
    %v3212 = vpack.c.b16 %v3168, %v3164
    %v3213 = vpack.c.b16 %v3173, %v3169
    %v3214 = vpack.c.b16 %v3174, %v3170
    %v3215 = vpack.c.b16 %v3175, %v3171
    %v3216 = vpack.c.b16 %v3176, %v3172
    %v3217 = vpack.c.b16 %v3181, %v3177
    %v3218 = vpack.c.b16 %v3182, %v3178
    %v3219 = vpack.c.b16 %v3183, %v3179
    %v3220 = vpack.c.b16 %v3184, %v3180
    %v3221 = vpack.c.b16 %v3189, %v3185
    %v3222 = vpack.c.b16 %v3190, %v3186
    %v3223 = vpack.c.b16 %v3191, %v3187
    %v3224 = vpack.c.b16 %v3192, %v3188
    %3257 = vmatprep.subr.bf16.mxu0 %v3194
    %3258 = vmatpush1.bf16.msra.mxu0 %v3193
    %3259 = vmatprep.subr.bf16.mxu0 %v3198
    %3260 = vmatpush1.bf16.msra.mxu0 %v3197
    %3261 = vmatprep.subr.bf16.mxu0 %v3202
    %3262 = vmatpush1.bf16.msra.mxu0 %v3201
    %3263 = vmatprep.subr.bf16.mxu0 %v3206
    %3264 = vmatpush1.bf16.msra.mxu0 %v3205
    %3265 = vmatprep.subr.bf16.mxu0 %v3210
    %3266 = vmatpush1.bf16.msra.mxu0 %v3209
    %3267 = vmatprep.subr.bf16.mxu0 %v3214
    %3268 = vmatpush1.bf16.msra.mxu0 %v3213
    %3269 = vmatprep.subr.bf16.mxu0 %v3218
    %3270 = vmatpush1.bf16.msra.mxu0 %v3217
    %3271 = vmatprep.subr.bf16.mxu0 %v3222
    %3272 = vmatpush1.bf16.msra.mxu0 %v3221
    %3273 = vmatprep.subr.bf16.mxu0 0
    %3274 = vmatpush1.bf16.msra.mxu0 0
    %3275 = vmatprep.subr.bf16.mxu0 0
    %3276 = vmatpush1.bf16.msra.mxu0 0
    %3277 = vmatprep.subr.bf16.mxu0 0
    %3278 = vmatpush1.bf16.msra.mxu0 0
    %3279 = vmatprep.subr.bf16.mxu0 0
    %3280 = vmatpush1.bf16.msra.mxu0 0
    %3281 = vmatprep.subr.bf16.mxu0 0
    %3282 = vmatpush1.bf16.msra.mxu0 0
    %3283 = vmatprep.subr.bf16.mxu0 0
    %3284 = vmatpush1.bf16.msra.mxu0 0
    %3285 = vmatprep.subr.bf16.mxu0 0
    %3286 = vmatpush1.bf16.msra.mxu0 0
    %3287 = vmatprep.subr.bf16.mxu0 0
    %3288 = vmatpush1.bf16.msra.mxu0 0
    %3289 = vmatprep.mubr.bf16.mxu0 0
    %3290 = vmatmul.mubr.bf16.gmra.mrb[0].mxu0 %v3075
    %v3291 = vpop.f32.mrb[0].mxu0
    %v3292 = vadd.f32 %v3080, %v3291
    %v3293 = vpop.f32.mrb[0].mxu0
    %v3294 = vadd.f32 %v3084, %v3293
    %v3295 = vpop.f32.mrb[0].mxu0
    %v3296 = vadd.f32 %v3080, %v3295
    %v3297 = vpop.f32.mrb[0].mxu0
    %v3298 = vadd.f32 %v3084, %v3297
    %3299 = vdwg.mxu0
    %3300 = vmatprep.subr.bf16.mxu0 %v3196
    %3301 = vmatpush1.bf16.msra.mxu0 %v3195
    %3302 = vmatprep.subr.bf16.mxu0 %v3200
    %3303 = vmatpush1.bf16.msra.mxu0 %v3199
    %3304 = vmatprep.subr.bf16.mxu0 %v3204
    %3305 = vmatpush1.bf16.msra.mxu0 %v3203
    %3306 = vmatprep.subr.bf16.mxu0 %v3208
    %3307 = vmatpush1.bf16.msra.mxu0 %v3207
    %3308 = vmatprep.subr.bf16.mxu0 %v3212
    %3309 = vmatpush1.bf16.msra.mxu0 %v3211
    %3310 = vmatprep.subr.bf16.mxu0 %v3216
    %3311 = vmatpush1.bf16.msra.mxu0 %v3215
    %3312 = vmatprep.subr.bf16.mxu0 %v3220
    %3313 = vmatpush1.bf16.msra.mxu0 %v3219
    %3314 = vmatprep.subr.bf16.mxu0 %v3224
    %3315 = vmatpush1.bf16.msra.mxu0 %v3223
    %3316 = vmatprep.subr.bf16.mxu0 0
    %3317 = vmatpush1.bf16.msra.mxu0 0
    %3318 = vmatprep.subr.bf16.mxu0 0
    %3319 = vmatpush1.bf16.msra.mxu0 0
    %3320 = vmatprep.subr.bf16.mxu0 0
    %3321 = vmatpush1.bf16.msra.mxu0 0
    %3322 = vmatprep.subr.bf16.mxu0 0
    %3323 = vmatpush1.bf16.msra.mxu0 0
    %3324 = vmatprep.subr.bf16.mxu0 0
    %3325 = vmatpush1.bf16.msra.mxu0 0
    %3326 = vmatprep.subr.bf16.mxu0 0
    %3327 = vmatpush1.bf16.msra.mxu0 0
    %3328 = vmatprep.subr.bf16.mxu0 0
    %3329 = vmatpush1.bf16.msra.mxu0 0
    %3330 = vmatprep.subr.bf16.mxu0 0
    %3331 = vmatpush1.bf16.msra.mxu0 0
    %3332 = vmatprep.mubr.bf16.mxu0 0
    %3333 = vmatmul.mubr.bf16.gmra.mrb[0].mxu0 %v3075
    %v3334 = vpop.f32.mrb[0].mxu0
    %v3335 = vadd.f32 %v3088, %v3334
    %v3336 = vpop.f32.mrb[0].mxu0
    %v3337 = vadd.f32 %v3092, %v3336
    %v3338 = vpop.f32.mrb[0].mxu0
    %v3339 = vadd.f32 %v3088, %v3338
    %v3340 = vpop.f32.mrb[0].mxu0
    %v3341 = vadd.f32 %v3092, %v3340
    %3342 = vdwg.mxu0
    %v3343 = vmul.f32 %v3292, 0.5
    %v3344 = vmul.f32 %v3294, 0.5
    %v3345 = vmul.f32 %v3335, 0.5
    %v3346 = vmul.f32 %v3337, 0.5
    %v3347 = vmul.f32 %v3296, 0.5
    %v3348 = vmul.f32 %v3298, 0.5
    %v3349 = vmul.f32 %v3339, 0.5
    %v3350 = vmul.f32 %v3341, 0.5
    %v3351 = vmul.f32 %v3292, 0.70710677
    %v3352 = vmul.f32 %v3294, 0.70710677
    %v3353 = vmul.f32 %v3335, 0.70710677
    %v3354 = vmul.f32 %v3337, 0.70710677
    %v3355 = vmul.f32 %v3296, 0.70710677
    %v3356 = vmul.f32 %v3298, 0.70710677
    %v3357 = vmul.f32 %v3339, 0.70710677
    %v3358 = vmul.f32 %v3341, 0.70710677
    %v3359 = verf.f32.pop %v3351
    %v3360 = verf.f32.pop %v3352
    %v3361 = verf.f32.pop %v3353
    %v3362 = verf.f32.pop %v3354
    %v3363 = verf.f32.pop %v3355
    %v3364 = verf.f32.pop %v3356
    %v3365 = verf.f32.pop %v3357
    %v3366 = verf.f32.pop %v3358
    %v3367 = vadd.f32 %v3359, 1.0
    %v3368 = vadd.f32 %v3360, 1.0
    %v3369 = vadd.f32 %v3361, 1.0
    %v3370 = vadd.f32 %v3362, 1.0
    %v3371 = vadd.f32 %v3363, 1.0
    %v3372 = vadd.f32 %v3364, 1.0
    %v3373 = vadd.f32 %v3365, 1.0
    %v3374 = vadd.f32 %v3366, 1.0
    %v3375 = vmul.f32 %v3343, %v3367
    %v3376 = vmul.f32 %v3344, %v3368
    %v3377 = vmul.f32 %v3345, %v3369
    %v3378 = vmul.f32 %v3346, %v3370
    %v3379 = vmul.f32 %v3347, %v3371
    %v3380 = vmul.f32 %v3348, %v3372
    %v3381 = vmul.f32 %v3349, %v3373
    %v3382 = vmul.f32 %v3350, %v3374
    %s3383 = scalar_lea.vmem [#allocation6], 256
    %v3384 = vld [vmem:[%s3383] sm:$0xf]
    %v3385 = vld [vmem:[%s3383 + $0x4] sm:$0xf]
    %v3386 = vld [vmem:[%s3383 + $0x8] sm:$0xf]
    %v3387 = vld [vmem:[%s3383 + $0xc] sm:$0xf]
    %v3388 = vld [vmem:[%s3383 + $0x10] sm:$0xf]
    %v3389 = vld [vmem:[%s3383 + $0x14] sm:$0xf]
    %v3390 = vld [vmem:[%s3383 + $0x18] sm:$0xf]
    %v3391 = vld [vmem:[%s3383 + $0x1c] sm:$0xf]
    %v3392 = vld [vmem:[%s3383 + $0x20] sm:$0xf]
    %v3393 = vld [vmem:[%s3383 + $0x24] sm:$0xf]
    %v3394 = vld [vmem:[%s3383 + $0x28] sm:$0xf]
    %v3395 = vld [vmem:[%s3383 + $0x2c] sm:$0xf]
    %v3396 = vld [vmem:[%s3383 + $0x30] sm:$0xf]
    %v3397 = vld [vmem:[%s3383 + $0x34] sm:$0xf]
    %v3398 = vld [vmem:[%s3383 + $0x38] sm:$0xf]
    %v3399 = vld [vmem:[%s3383 + $0x3c] sm:$0xf]
    %v3400 = vld [vmem:[%s3383 + $0x40] sm:$0xf]
    %v3401 = vld [vmem:[%s3383 + $0x44] sm:$0xf]
    %v3402 = vld [vmem:[%s3383 + $0x48] sm:$0xf]
    %v3403 = vld [vmem:[%s3383 + $0x4c] sm:$0xf]
    %v3404 = vld [vmem:[%s3383 + $0x50] sm:$0xf]
    %v3405 = vld [vmem:[%s3383 + $0x54] sm:$0xf]
    %v3406 = vld [vmem:[%s3383 + $0x58] sm:$0xf]
    %v3407 = vld [vmem:[%s3383 + $0x5c] sm:$0xf]
    %v3408 = vld [vmem:[%s3383 + $0x60] sm:$0xf]
    %v3409 = vld [vmem:[%s3383 + $0x64] sm:$0xf]
    %v3410 = vld [vmem:[%s3383 + $0x68] sm:$0xf]
    %v3411 = vld [vmem:[%s3383 + $0x6c] sm:$0xf]
    %v3412 = vld [vmem:[%s3383 + $0x70] sm:$0xf]
    %v3413 = vld [vmem:[%s3383 + $0x74] sm:$0xf]
    %v3414 = vld [vmem:[%s3383 + $0x78] sm:$0xf]
    %v3415 = vld [vmem:[%s3383 + $0x7c] sm:$0xf]
    %v3416 = vld [vmem:[%s3383 + $0x80] sm:$0xf]
    %v3417 = vld [vmem:[%s3383 + $0x84] sm:$0xf]
    %v3418 = vld [vmem:[%s3383 + $0x88] sm:$0xf]
    %v3419 = vld [vmem:[%s3383 + $0x8c] sm:$0xf]
    %v3420 = vld [vmem:[%s3383 + $0x90] sm:$0xf]
    %v3421 = vld [vmem:[%s3383 + $0x94] sm:$0xf]
    %v3422 = vld [vmem:[%s3383 + $0x98] sm:$0xf]
    %v3423 = vld [vmem:[%s3383 + $0x9c] sm:$0xf]
    %v3424 = vld [vmem:[%s3383 + $0xa0] sm:$0xf]
    %v3425 = vld [vmem:[%s3383 + $0xa4] sm:$0xf]
    %v3426 = vld [vmem:[%s3383 + $0xa8] sm:$0xf]
    %v3427 = vld [vmem:[%s3383 + $0xac] sm:$0xf]
    %v3428 = vld [vmem:[%s3383 + $0xb0] sm:$0xf]
    %v3429 = vld [vmem:[%s3383 + $0xb4] sm:$0xf]
    %v3430 = vld [vmem:[%s3383 + $0xb8] sm:$0xf]
    %v3431 = vld [vmem:[%s3383 + $0xbc] sm:$0xf]
    %v3432 = vld [vmem:[%s3383 + $0xc0] sm:$0xf]
    %v3433 = vld [vmem:[%s3383 + $0xc4] sm:$0xf]
    %v3434 = vld [vmem:[%s3383 + $0xc8] sm:$0xf]
    %v3435 = vld [vmem:[%s3383 + $0xcc] sm:$0xf]
    %v3436 = vld [vmem:[%s3383 + $0xd0] sm:$0xf]
    %v3437 = vld [vmem:[%s3383 + $0xd4] sm:$0xf]
    %v3438 = vld [vmem:[%s3383 + $0xd8] sm:$0xf]
    %v3439 = vld [vmem:[%s3383 + $0xdc] sm:$0xf]
    %v3440 = vld [vmem:[%s3383 + $0xe0] sm:$0xf]
    %v3441 = vld [vmem:[%s3383 + $0xe4] sm:$0xf]
    %v3442 = vld [vmem:[%s3383 + $0xe8] sm:$0xf]
    %v3443 = vld [vmem:[%s3383 + $0xec] sm:$0xf]
    %v3444 = vld [vmem:[%s3383 + $0xf0] sm:$0xf]
    %v3445 = vld [vmem:[%s3383 + $0xf4] sm:$0xf]
    %v3446 = vld [vmem:[%s3383 + $0xf8] sm:$0xf]
    %v3447 = vld [vmem:[%s3383 + $0xfc] sm:$0xf]
    %s3448 = scalar_lea.vmem %s13, 1
    %v3449 = vld [vmem:[%s3448] sm:$0x1]
    %v3450 = vpack.c.bf16 %v3379, %v3375
    %v3451 = vpack.c.bf16 %v3380, %v3376
    %v3452 = vpack.c.bf16 %v3381, %v3377
    %v3453 = vpack.c.bf16 %v3382, %v3378
    %v3455 = vlaneseq
    %v3456 = vshrl.u32 %v3455, 7
    %v3457 = vsub.s32 0, %v3456
    %v3458 = vrot.slane %v3449, %v3457
    %v3524 = vunpack.c.l.b16 %v3384
    %v3525 = vunpack.c.l.b16 %v3385
    %v3526 = vunpack.c.l.b16 %v3386
    %v3527 = vunpack.c.l.b16 %v3387
    %v3528 = vunpack.c.l.b16 %v3388
    %v3529 = vunpack.c.l.b16 %v3389
    %v3530 = vunpack.c.l.b16 %v3390
    %v3531 = vunpack.c.l.b16 %v3391
    %v3532 = vunpack.c.l.b16 %v3392
    %v3533 = vunpack.c.l.b16 %v3393
    %v3534 = vunpack.c.l.b16 %v3394
    %v3535 = vunpack.c.l.b16 %v3395
    %v3536 = vunpack.c.l.b16 %v3396
    %v3537 = vunpack.c.l.b16 %v3397
    %v3538 = vunpack.c.l.b16 %v3398
    %v3539 = vunpack.c.l.b16 %v3399
    %v3540 = vunpack.c.l.b16 %v3400
    %v3541 = vunpack.c.l.b16 %v3401
    %v3542 = vunpack.c.l.b16 %v3402
    %v3543 = vunpack.c.l.b16 %v3403
    %v3544 = vunpack.c.l.b16 %v3404
    %v3545 = vunpack.c.l.b16 %v3405
    %v3546 = vunpack.c.l.b16 %v3406
    %v3547 = vunpack.c.l.b16 %v3407
    %v3548 = vunpack.c.l.b16 %v3408
    %v3549 = vunpack.c.l.b16 %v3409
    %v3550 = vunpack.c.l.b16 %v3410
    %v3551 = vunpack.c.l.b16 %v3411
    %v3552 = vunpack.c.l.b16 %v3412
    %v3553 = vunpack.c.l.b16 %v3413
    %v3554 = vunpack.c.l.b16 %v3414
    %v3555 = vunpack.c.l.b16 %v3415
    %v3556 = vunpack.c.l.b16 %v3416
    %v3557 = vunpack.c.l.b16 %v3417
    %v3558 = vunpack.c.l.b16 %v3418
    %v3559 = vunpack.c.l.b16 %v3419
    %v3560 = vunpack.c.l.b16 %v3420
    %v3561 = vunpack.c.l.b16 %v3421
    %v3562 = vunpack.c.l.b16 %v3422
    %v3563 = vunpack.c.l.b16 %v3423
    %v3564 = vunpack.c.l.b16 %v3424
    %v3565 = vunpack.c.l.b16 %v3425
    %v3566 = vunpack.c.l.b16 %v3426
    %v3567 = vunpack.c.l.b16 %v3427
    %v3568 = vunpack.c.l.b16 %v3428
    %v3569 = vunpack.c.l.b16 %v3429
    %v3570 = vunpack.c.l.b16 %v3430
    %v3571 = vunpack.c.l.b16 %v3431
    %v3572 = vunpack.c.l.b16 %v3432
    %v3573 = vunpack.c.l.b16 %v3433
    %v3574 = vunpack.c.l.b16 %v3434
    %v3575 = vunpack.c.l.b16 %v3435
    %v3576 = vunpack.c.l.b16 %v3436
    %v3577 = vunpack.c.l.b16 %v3437
    %v3578 = vunpack.c.l.b16 %v3438
    %v3579 = vunpack.c.l.b16 %v3439
    %v3580 = vunpack.c.l.b16 %v3440
    %v3581 = vunpack.c.l.b16 %v3441
    %v3582 = vunpack.c.l.b16 %v3442
    %v3583 = vunpack.c.l.b16 %v3443
    %v3584 = vunpack.c.l.b16 %v3444
    %v3585 = vunpack.c.l.b16 %v3445
    %v3586 = vunpack.c.l.b16 %v3446
    %v3587 = vunpack.c.l.b16 %v3447
    %v3588 = vpack.c.b16 %v3525, %v3524
    %v3589 = vpack.c.b16 %v3527, %v3526
    %v3590 = vpack.c.b16 %v3529, %v3528
    %v3591 = vpack.c.b16 %v3531, %v3530
    %v3592 = vpack.c.b16 %v3533, %v3532
    %v3593 = vpack.c.b16 %v3535, %v3534
    %v3594 = vpack.c.b16 %v3537, %v3536
    %v3595 = vpack.c.b16 %v3539, %v3538
    %v3596 = vpack.c.b16 %v3541, %v3540
    %v3597 = vpack.c.b16 %v3543, %v3542
    %v3598 = vpack.c.b16 %v3545, %v3544
    %v3599 = vpack.c.b16 %v3547, %v3546
    %v3600 = vpack.c.b16 %v3549, %v3548
    %v3601 = vpack.c.b16 %v3551, %v3550
    %v3602 = vpack.c.b16 %v3553, %v3552
    %v3603 = vpack.c.b16 %v3555, %v3554
    %v3604 = vpack.c.b16 %v3557, %v3556
    %v3605 = vpack.c.b16 %v3559, %v3558
    %v3606 = vpack.c.b16 %v3561, %v3560
    %v3607 = vpack.c.b16 %v3563, %v3562
    %v3608 = vpack.c.b16 %v3565, %v3564
    %v3609 = vpack.c.b16 %v3567, %v3566
    %v3610 = vpack.c.b16 %v3569, %v3568
    %v3611 = vpack.c.b16 %v3571, %v3570
    %v3612 = vpack.c.b16 %v3573, %v3572
    %v3613 = vpack.c.b16 %v3575, %v3574
    %v3614 = vpack.c.b16 %v3577, %v3576
    %v3615 = vpack.c.b16 %v3579, %v3578
    %v3616 = vpack.c.b16 %v3581, %v3580
    %v3617 = vpack.c.b16 %v3583, %v3582
    %v3618 = vpack.c.b16 %v3585, %v3584
    %v3619 = vpack.c.b16 %v3587, %v3586
    %3652 = vmatprep.subr.bf16.mxu0 0
    %3653 = vmatpush1.bf16.msra.mxu0 %v3588
    %3654 = vmatprep.subr.bf16.mxu0 0
    %3655 = vmatpush1.bf16.msra.mxu0 %v3589
    %3656 = vmatprep.subr.bf16.mxu0 0
    %3657 = vmatpush1.bf16.msra.mxu0 %v3590
    %3658 = vmatprep.subr.bf16.mxu0 0
    %3659 = vmatpush1.bf16.msra.mxu0 %v3591
    %3660 = vmatprep.subr.bf16.mxu0 0
    %3661 = vmatpush1.bf16.msra.mxu0 %v3592
    %3662 = vmatprep.subr.bf16.mxu0 0
    %3663 = vmatpush1.bf16.msra.mxu0 %v3593
    %3664 = vmatprep.subr.bf16.mxu0 0
    %3665 = vmatpush1.bf16.msra.mxu0 %v3594
    %3666 = vmatprep.subr.bf16.mxu0 0
    %3667 = vmatpush1.bf16.msra.mxu0 %v3595
    %3668 = vmatprep.subr.bf16.mxu0 0
    %3669 = vmatpush1.bf16.msra.mxu0 %v3596
    %3670 = vmatprep.subr.bf16.mxu0 0
    %3671 = vmatpush1.bf16.msra.mxu0 %v3597
    %3672 = vmatprep.subr.bf16.mxu0 0
    %3673 = vmatpush1.bf16.msra.mxu0 %v3598
    %3674 = vmatprep.subr.bf16.mxu0 0
    %3675 = vmatpush1.bf16.msra.mxu0 %v3599
    %3676 = vmatprep.subr.bf16.mxu0 0
    %3677 = vmatpush1.bf16.msra.mxu0 %v3600
    %3678 = vmatprep.subr.bf16.mxu0 0
    %3679 = vmatpush1.bf16.msra.mxu0 %v3601
    %3680 = vmatprep.subr.bf16.mxu0 0
    %3681 = vmatpush1.bf16.msra.mxu0 %v3602
    %3682 = vmatprep.subr.bf16.mxu0 0
    %3683 = vmatpush1.bf16.msra.mxu0 %v3603
    %3684 = vmatprep.mubr.bf16.mxu0 %v3451
    %3685 = vmatmul.mubr.bf16.gmra.mrb[0].mxu0 %v3450
    %v3686 = vpop.f32.mrb[0].mxu0
    %v3687 = vadd.f32 %v3458, %v3686
    %v3688 = vpop.f32.mrb[0].mxu0
    %v3689 = vpop.f32.mrb[0].mxu0
    %v3690 = vadd.f32 %v3458, %v3689
    %v3691 = vpop.f32.mrb[0].mxu0
    %3692 = vdwg.mxu0
    %3693 = vmatprep.subr.bf16.mxu0 0
    %3694 = vmatpush1.bf16.msra.mxu0 %v3604
    %3695 = vmatprep.subr.bf16.mxu0 0
    %3696 = vmatpush1.bf16.msra.mxu0 %v3605
    %3697 = vmatprep.subr.bf16.mxu0 0
    %3698 = vmatpush1.bf16.msra.mxu0 %v3606
    %3699 = vmatprep.subr.bf16.mxu0 0
    %3700 = vmatpush1.bf16.msra.mxu0 %v3607
    %3701 = vmatprep.subr.bf16.mxu0 0
    %3702 = vmatpush1.bf16.msra.mxu0 %v3608
    %3703 = vmatprep.subr.bf16.mxu0 0
    %3704 = vmatpush1.bf16.msra.mxu0 %v3609
    %3705 = vmatprep.subr.bf16.mxu0 0
    %3706 = vmatpush1.bf16.msra.mxu0 %v3610
    %3707 = vmatprep.subr.bf16.mxu0 0
    %3708 = vmatpush1.bf16.msra.mxu0 %v3611
    %3709 = vmatprep.subr.bf16.mxu0 0
    %3710 = vmatpush1.bf16.msra.mxu0 %v3612
    %3711 = vmatprep.subr.bf16.mxu0 0
    %3712 = vmatpush1.bf16.msra.mxu0 %v3613
    %3713 = vmatprep.subr.bf16.mxu0 0
    %3714 = vmatpush1.bf16.msra.mxu0 %v3614
    %3715 = vmatprep.subr.bf16.mxu0 0
    %3716 = vmatpush1.bf16.msra.mxu0 %v3615
    %3717 = vmatprep.subr.bf16.mxu0 0
    %3718 = vmatpush1.bf16.msra.mxu0 %v3616
    %3719 = vmatprep.subr.bf16.mxu0 0
    %3720 = vmatpush1.bf16.msra.mxu0 %v3617
    %3721 = vmatprep.subr.bf16.mxu0 0
    %3722 = vmatpush1.bf16.msra.mxu0 %v3618
    %3723 = vmatprep.subr.bf16.mxu0 0
    %3724 = vmatpush1.bf16.msra.mxu0 %v3619
    %3725 = vmatprep.mubr.bf16.mxu0 %v3453
    %3726 = vmatmul.mubr.bf16.gmra.mrb[0].mxu0 %v3452
    %v3727 = vpop.f32.mrb[0].mxu0
    %v3728 = vadd.f32 %v3687, %v3727
    %v3729 = vpop.f32.mrb[0].mxu0
    %v3730 = vpop.f32.mrb[0].mxu0
    %v3731 = vadd.f32 %v3690, %v3730
    %v3732 = vpop.f32.mrb[0].mxu0
    %3733 = vdwg.mxu0
    %v3734 = vadd.f32 %v3038, %v3728
    %v3735 = vadd.f32 %v3039, %v3731
    %s3736 = scalar_lea.vmem %s14, 1
    %v3737 = vld [vmem:[%s3736] sm:$0x1]
    %s3738 = scalar_lea.vmem %s15, 1
    %v3739 = vld [vmem:[%s3738] sm:$0x1]
    %3740 = vadd.xlane.f32.xlu0 %v3734
    %v3741 = vpop.xlane.xlu0 %3740
    %3742 = vadd.xlane.f32.xlu0 %v3735
    %v3743 = vpop.xlane.xlu0 %3742
    %v3744 = vmul.f32 %v3741, %v156
    %v3745 = vmul.f32 %v3743, %v156
    %v3746 = vsub.f32 %v3734, %v3744
    %v3747 = vsub.f32 %v3735, %v3745
    %v3748 = vmul.f32 %v3746, %v3746
    %v3749 = vmul.f32 %v3747, %v3747
    %3750 = vadd.xlane.f32.xlu0 %v3748
    %v3751 = vpop.xlane.xlu0 %3750
    %3752 = vadd.xlane.f32.xlu0 %v3749
    %v3753 = vpop.xlane.xlu0 %3752
    %v3754 = vmul.f32 %v3751, %v156
    %v3755 = vmul.f32 %v3753, %v156
    %v3756 = vadd.f32 %v3754, 1e-12
    %v3757 = vadd.f32 %v3755, 1e-12
    %v3758 = vrsqrt.pop %v3756
    %v3759 = vrsqrt.pop %v3757
    %v3760 = vmul.f32 %v3746, %v3758
    %v3761 = vmul.f32 %v3747, %v3759
    %v3763 = vlaneseq
    %v3764 = vshrl.u32 %v3763, 7
    %v3765 = vsub.s32 0, %v3764
    %v3766 = vrot.slane %v3737, %v3765
    %v3768 = vmul.f32 %v3760, %v3766
    %v3769 = vmul.f32 %v3761, %v3766
    %v3771 = vlaneseq
    %v3772 = vshrl.u32 %v3771, 7
    %v3773 = vsub.s32 0, %v3772
    %v3774 = vrot.slane %v3739, %v3773
    %v3776 = vadd.f32 %v3768, %v3774
    %v3777 = vadd.f32 %v3769, %v3774
    %v3778 = vld [vmem:[%s16] sm:$0xf]
    %v3779 = vld [vmem:[%s16 + $0x4] sm:$0xf]
    %v3780 = vld [vmem:[%s16 + $0x8] sm:$0xf]
    %v3781 = vld [vmem:[%s16 + $0xc] sm:$0xf]
    %v3782 = vld [vmem:[%s16 + $0x10] sm:$0xf]
    %v3783 = vld [vmem:[%s16 + $0x14] sm:$0xf]
    %v3784 = vld [vmem:[%s16 + $0x18] sm:$0xf]
    %v3785 = vld [vmem:[%s16 + $0x1c] sm:$0xf]
    %v3786 = vld [vmem:[%s16 + $0x20] sm:$0xf]
    %v3787 = vld [vmem:[%s16 + $0x24] sm:$0xf]
    %v3788 = vld [vmem:[%s16 + $0x28] sm:$0xf]
    %v3789 = vld [vmem:[%s16 + $0x2c] sm:$0xf]
    %v3790 = vld [vmem:[%s16 + $0x30] sm:$0xf]
    %v3791 = vld [vmem:[%s16 + $0x34] sm:$0xf]
    %v3792 = vld [vmem:[%s16 + $0x38] sm:$0xf]
    %v3793 = vld [vmem:[%s16 + $0x3c] sm:$0xf]
    %v3794 = vld [vmem:[%s17] sm:$0x1]
    %v3795 = vpack.c.bf16 %v3777, %v3776
    %v3797 = vlaneseq
    %v3798 = vshrl.u32 %v3797, 7
    %v3799 = vsub.s32 0, %v3798
    %v3800 = vrot.slane %v3794, %v3799
    %v3818 = vunpack.c.l.b16 %v3778
    %v3819 = vunpack.c.l.b16 %v3779
    %v3820 = vunpack.c.l.b16 %v3780
    %v3821 = vunpack.c.l.b16 %v3781
    %v3822 = vunpack.c.l.b16 %v3782
    %v3823 = vunpack.c.l.b16 %v3783
    %v3824 = vunpack.c.l.b16 %v3784
    %v3825 = vunpack.c.l.b16 %v3785
    %v3826 = vunpack.c.l.b16 %v3786
    %v3827 = vunpack.c.l.b16 %v3787
    %v3828 = vunpack.c.l.b16 %v3788
    %v3829 = vunpack.c.l.b16 %v3789
    %v3830 = vunpack.c.l.b16 %v3790
    %v3831 = vunpack.c.l.b16 %v3791
    %v3832 = vunpack.c.l.b16 %v3792
    %v3833 = vunpack.c.l.b16 %v3793
    %v3834 = vpack.c.b16 %v3819, %v3818
    %v3835 = vpack.c.b16 %v3821, %v3820
    %v3836 = vpack.c.b16 %v3823, %v3822
    %v3837 = vpack.c.b16 %v3825, %v3824
    %v3838 = vpack.c.b16 %v3827, %v3826
    %v3839 = vpack.c.b16 %v3829, %v3828
    %v3840 = vpack.c.b16 %v3831, %v3830
    %v3841 = vpack.c.b16 %v3833, %v3832
    %3850 = vmatprep.subr.bf16.mxu0 0
    %3851 = vmatpush1.bf16.msra.mxu0 %v3834
    %3852 = vmatprep.subr.bf16.mxu0 0
    %3853 = vmatpush1.bf16.msra.mxu0 %v3835
    %3854 = vmatprep.subr.bf16.mxu0 0
    %3855 = vmatpush1.bf16.msra.mxu0 %v3836
    %3856 = vmatprep.subr.bf16.mxu0 0
    %3857 = vmatpush1.bf16.msra.mxu0 %v3837
    %3858 = vmatprep.subr.bf16.mxu0 0
    %3859 = vmatpush1.bf16.msra.mxu0 %v3838
    %3860 = vmatprep.subr.bf16.mxu0 0
    %3861 = vmatpush1.bf16.msra.mxu0 %v3839
    %3862 = vmatprep.subr.bf16.mxu0 0
    %3863 = vmatpush1.bf16.msra.mxu0 %v3840
    %3864 = vmatprep.subr.bf16.mxu0 0
    %3865 = vmatpush1.bf16.msra.mxu0 %v3841
    %3866 = vmatprep.subr.bf16.mxu0 0
    %3867 = vmatpush1.bf16.msra.mxu0 0
    %3868 = vmatprep.subr.bf16.mxu0 0
    %3869 = vmatpush1.bf16.msra.mxu0 0
    %3870 = vmatprep.subr.bf16.mxu0 0
    %3871 = vmatpush1.bf16.msra.mxu0 0
    %3872 = vmatprep.subr.bf16.mxu0 0
    %3873 = vmatpush1.bf16.msra.mxu0 0
    %3874 = vmatprep.subr.bf16.mxu0 0
    %3875 = vmatpush1.bf16.msra.mxu0 0
    %3876 = vmatprep.subr.bf16.mxu0 0
    %3877 = vmatpush1.bf16.msra.mxu0 0
    %3878 = vmatprep.subr.bf16.mxu0 0
    %3879 = vmatpush1.bf16.msra.mxu0 0
    %3880 = vmatprep.subr.bf16.mxu0 0
    %3881 = vmatpush1.bf16.msra.mxu0 0
    %3882 = vmatprep.mubr.bf16.mxu0 0
    %3883 = vmatmul.mubr.bf16.gmra.mrb[0].mxu0 %v3795
    %v3884 = vpop.f32.mrb[0].mxu0
    %v3885 = vadd.f32 %v3800, %v3884
    %v3886 = vpop.f32.mrb[0].mxu0
    %v3887 = vpop.f32.mrb[0].mxu0
    %v3888 = vadd.f32 %v3800, %v3887
    %v3889 = vpop.f32.mrb[0].mxu0
    %3890 = vdwg.mxu0
    %v3891 = vtanh.pop %v3885
    %v3892 = vtanh.pop %v3888
    %v3893 = vld [vmem:[%s18] sm:$0xf]
    %v3894 = vld [vmem:[%s18 + $0x4] sm:$0xf]
    %v3895 = vld [vmem:[%s18 + $0x8] sm:$0xf]
    %v3896 = vld [vmem:[%s18 + $0xc] sm:$0xf]
    %v3897 = vld [vmem:[%s18 + $0x10] sm:$0xf]
    %v3898 = vld [vmem:[%s18 + $0x14] sm:$0xf]
    %v3899 = vld [vmem:[%s18 + $0x18] sm:$0xf]
    %v3900 = vld [vmem:[%s18 + $0x1c] sm:$0xf]
    %v3901 = vld [vmem:[%s18 + $0x20] sm:$0xf]
    %v3902 = vld [vmem:[%s18 + $0x24] sm:$0xf]
    %v3903 = vld [vmem:[%s18 + $0x28] sm:$0xf]
    %v3904 = vld [vmem:[%s18 + $0x2c] sm:$0xf]
    %v3905 = vld [vmem:[%s18 + $0x30] sm:$0xf]
    %v3906 = vld [vmem:[%s18 + $0x34] sm:$0xf]
    %v3907 = vld [vmem:[%s18 + $0x38] sm:$0xf]
    %v3908 = vld [vmem:[%s18 + $0x3c] sm:$0xf]
    %v3909 = vld [vmem:[%s19] sm:$0x1]
    %v3910 = vpack.c.bf16 %v3892, %v3891
    %v3912 = vlaneseq
    %v3913 = vshrl.u32 %v3912, 7
    %v3914 = vsub.s32 0, %v3913
    %v3915 = vrot.slane %v3909, %v3914
    %v3933 = vunpack.c.l.b16 %v3893
    %v3934 = vunpack.c.l.b16 %v3894
    %v3935 = vunpack.c.l.b16 %v3895
    %v3936 = vunpack.c.l.b16 %v3896
    %v3937 = vunpack.c.l.b16 %v3897
    %v3938 = vunpack.c.l.b16 %v3898
    %v3939 = vunpack.c.l.b16 %v3899
    %v3940 = vunpack.c.l.b16 %v3900
    %v3941 = vunpack.c.l.b16 %v3901
    %v3942 = vunpack.c.l.b16 %v3902
    %v3943 = vunpack.c.l.b16 %v3903
    %v3944 = vunpack.c.l.b16 %v3904
    %v3945 = vunpack.c.l.b16 %v3905
    %v3946 = vunpack.c.l.b16 %v3906
    %v3947 = vunpack.c.l.b16 %v3907
    %v3948 = vunpack.c.l.b16 %v3908
    %v3949 = vpack.c.b16 %v3934, %v3933
    %v3950 = vpack.c.b16 %v3936, %v3935
    %v3951 = vpack.c.b16 %v3938, %v3937
    %v3952 = vpack.c.b16 %v3940, %v3939
    %v3953 = vpack.c.b16 %v3942, %v3941
    %v3954 = vpack.c.b16 %v3944, %v3943
    %v3955 = vpack.c.b16 %v3946, %v3945
    %v3956 = vpack.c.b16 %v3948, %v3947
    %3965 = vmatprep.subr.bf16.mxu0 0
    %3966 = vmatpush1.bf16.msra.mxu0 %v3949
    %3967 = vmatprep.subr.bf16.mxu0 0
    %3968 = vmatpush1.bf16.msra.mxu0 %v3950
    %3969 = vmatprep.subr.bf16.mxu0 0
    %3970 = vmatpush1.bf16.msra.mxu0 %v3951
    %3971 = vmatprep.subr.bf16.mxu0 0
    %3972 = vmatpush1.bf16.msra.mxu0 %v3952
    %3973 = vmatprep.subr.bf16.mxu0 0
    %3974 = vmatpush1.bf16.msra.mxu0 %v3953
    %3975 = vmatprep.subr.bf16.mxu0 0
    %3976 = vmatpush1.bf16.msra.mxu0 %v3954
    %3977 = vmatprep.subr.bf16.mxu0 0
    %3978 = vmatpush1.bf16.msra.mxu0 %v3955
    %3979 = vmatprep.subr.bf16.mxu0 0
    %3980 = vmatpush1.bf16.msra.mxu0 %v3956
    %3981 = vmatprep.subr.bf16.mxu0 0
    %3982 = vmatpush1.bf16.msra.mxu0 0
    %3983 = vmatprep.subr.bf16.mxu0 0
    %3984 = vmatpush1.bf16.msra.mxu0 0
    %3985 = vmatprep.subr.bf16.mxu0 0
    %3986 = vmatpush1.bf16.msra.mxu0 0
    %3987 = vmatprep.subr.bf16.mxu0 0
    %3988 = vmatpush1.bf16.msra.mxu0 0
    %3989 = vmatprep.subr.bf16.mxu0 0
    %3990 = vmatpush1.bf16.msra.mxu0 0
    %3991 = vmatprep.subr.bf16.mxu0 0
    %3992 = vmatpush1.bf16.msra.mxu0 0
    %3993 = vmatprep.subr.bf16.mxu0 0
    %3994 = vmatpush1.bf16.msra.mxu0 0
    %3995 = vmatprep.subr.bf16.mxu0 0
    %3996 = vmatpush1.bf16.msra.mxu0 0
    %3997 = vmatprep.mubr.bf16.mxu0 0
    %3998 = vmatmul.mubr.bf16.gmra.mrb[0].mxu0 %v3910
    %v3999 = vpop.f32.mrb[0].mxu0
    %v4000 = vadd.f32 %v3915, %v3999
    %v4001 = vpop.f32.mrb[0].mxu0
    %v4002 = vpop.f32.mrb[0].mxu0
    %v4003 = vadd.f32 %v3915, %v4002
    %v4004 = vpop.f32.mrb[0].mxu0
    %4005 = vdwg.mxu0
    %4006 = vst [vmem:[%s20] sm:$0xff] %v4000
    %4007 = vst [vmem:[%s20 + $0x8] sm:$0xff] %v4003
    // Predicated region
    $region94: #{bert_class_forward.1} parent=1 // pred_check
      _
    $region95: #{bert_class_forward.1} parent=1 // pred_check_branch
      %4009 = sbr.rel (0) target = $region97
    $region96: #{bert_class_forward.1} parent=1 // pred_region
      _
    $region97: #{bert_class_forward.1} parent=1 // pred_fallthru
      _
    // Predicated region
    $region98: #{bert_class_forward.1} parent=1 // pred_check
      _
    $region99: #{bert_class_forward.1} parent=1 // pred_check_branch
      %4011 = sbr.rel (0) target = $region101
    $region100: #{bert_class_forward.1} parent=1 // pred_region
      _
    $region101: #{bert_class_forward.1} parent=1 // pred_fallthru
      _
    %4012 = vsyncpa [#allocation3], 1
    %4013 = vsyncpa [#allocation5], 1

</llo_original>
